<compile_context>
chip_gen: v7x
topology: tpu7x:2x2x1
jax: 0.10.0
libtpu: 0.0.40
codegen_flags: <defaults>
</compile_context>

<pallas_src>
import functools
import math

import jax
import jax.numpy as jnp
from jax import lax
from jax.experimental import pallas as pl
from jax.experimental.pallas import tpu as pltpu

# ----------------------------- hyper-parameters -----------------------------
G = 8            # glimpse patch size
K = 2            # number of patches per glimpse
S = 2            # scale factor between patches
CH = 3           # image channels
STD = 0.17       # std of the Gaussian location policy
HIDDEN = 32      # hidden_size == cell_size
NUM_CLASSES = 10
IMG = 54         # snapshot mode -> image_size = 54 -> ContextNetwork stride = 1
CTX_STRIDE = 1
HEAD_W = 2 + 1 + NUM_CLASSES   # merged head: [loc(2) | baseline(1) | classifier(10)]

_ARB = pltpu.CompilerParams(dimension_semantics=("arbitrary",))
_PAR = pltpu.CompilerParams(dimension_semantics=("parallel",))


def _round_up(n, m):
    return ((n + m - 1) // m) * m


def _full_spec(shape):
    """Whole-array block (grid of size 1)."""
    return pl.BlockSpec(shape, lambda i: (0,) * len(shape))


# ================================ Pallas kernels ================================
#
# ---- tiled matmul + bias + ReLU (used for the im2col'd context convolutions) ----

def _matmul_bias_relu_kernel(x_ref, w_ref, b_ref, o_ref):
    o_ref[...] = jnp.maximum(
        jnp.dot(x_ref[...], w_ref[...], preferred_element_type=jnp.float32)
        + b_ref[...], 0.0)


def matmul_bias_relu(x, w, b, tm=512):
    """relu(x @ w + b), tiled over rows with a real grid (pipelined DMA)."""
    M, Kd = x.shape
    N = w.shape[1]
    tm_eff = min(tm, _round_up(M, 8))          # adaptive tile: fewer grid steps / less padding
    Mp = pl.cdiv(M, tm_eff) * tm_eff
    if Mp != M:
        x = jnp.pad(x, ((0, Mp - M), (0, 0)))
    out = pl.pallas_call(
        _matmul_bias_relu_kernel,
        grid=(Mp // tm_eff,),
        out_shape=jax.ShapeDtypeStruct((Mp, N), jnp.float32),
        in_specs=[pl.BlockSpec((tm_eff, Kd), lambda i: (i, 0)),
                  pl.BlockSpec((Kd, N), lambda i: (0, 0)),
                  pl.BlockSpec((1, N), lambda i: (0, 0))],
        out_specs=pl.BlockSpec((tm_eff, N), lambda i: (i, 0)),
        compiler_params=_PAR,          # shards across v7x's 2 TensorCores
    )(x, w, b.reshape(1, N))
    return out[:M]


# ---- merged output heads (shared by both fused step kernels) ----

def _heads(h1, h2, noise, head_w, head_b,
           l_out, b_out, logpi_out, logp_out, *, std):
    """One merged head matmul on concat([h1, h2]).
    Columns: [0:2]=locator mu (pre-tanh, from h2), [2]=baseline (from h2),
    [3:13]=classifier logits (from h1)."""
    hcat = jnp.concatenate([h1, h2], axis=-1)
    head = jnp.dot(hcat, head_w, preferred_element_type=jnp.float32) + head_b
    # LocationNetwork: mu = tanh(fc(h2)); l ~ N(mu, std); log_pi computed before clamp.
    mu = jnp.tanh(head[:, 0:2])
    l = mu + std * noise
    log_pi = (-((l - mu) ** 2) / (2.0 * std * std)
              - math.log(std) - 0.5 * math.log(2.0 * math.pi))
    logpi_out[...] = jnp.sum(log_pi, axis=-1, keepdims=True)
    l_out[...] = jnp.clip(l, -1.0, 1.0)
    # BaselineNetwork
    b_out[...] = head[:, 2:3]
    # ActionNetwork: stable log-softmax
    logits = head[:, 3:3 + NUM_CLASSES]
    m = jnp.max(logits, axis=-1, keepdims=True)
    s = logits - m
    logp_out[...] = s - jnp.log(jnp.sum(jnp.exp(s), axis=-1, keepdims=True))


# ---- fused regular timestep: glimpse net + 2 LSTM cells + all heads ----

def _step_kernel(phil_ref, h_ref, c_ref, noise_ref,
                 g_w_in, g_b_in, g_w_merge, g_bgc,
                 l1_w, l1_b, l2_w, l2_b,
                 head_w, head_b,
                 h_out, c_out, l_out, b_out, logpi_out, logp_out,
                 *, hidden, std):
    # --- GlimpseNetworkDRAM ("what"/"where" pathways), block-diag merged matmul ---
    # phil = [phi | l_prev];  g_w_in = [[W_phi, 0], [0, W_l]]  ->  [h_g | h_l]
    hgl = jnp.maximum(
        jnp.dot(phil_ref[...], g_w_in[...], preferred_element_type=jnp.float32)
        + g_b_in[...], 0.0)
    g_t = jnp.maximum(
        jnp.dot(hgl, g_w_merge[...], preferred_element_type=jnp.float32)
        + g_bgc[...], 0.0)

    # --- CoreNetworkLSTM: two stacked LSTM cells, PyTorch gate order (i, f, g, o).
    #     One merged matmul per cell: concat([x, h_prev]) @ [W_ih; W_hh] + b. ---
    def cell(x, h_prev, c_prev, w, b):
        xh = jnp.concatenate([x, h_prev], axis=-1)
        z = jnp.dot(xh, w[...], preferred_element_type=jnp.float32) + b[...]
        i = jax.nn.sigmoid(z[:, 0 * hidden:1 * hidden])
        f = jax.nn.sigmoid(z[:, 1 * hidden:2 * hidden])
        g = jnp.tanh(z[:, 2 * hidden:3 * hidden])
        o = jax.nn.sigmoid(z[:, 3 * hidden:4 * hidden])
        c_new = f * c_prev + i * g
        return o * jnp.tanh(c_new), c_new

    h1, c1 = cell(g_t, h_ref[0], c_ref[0], l1_w, l1_b)
    h2, c2 = cell(h1, h_ref[1], c_ref[1], l2_w, l2_b)
    h_out[0, :, :] = h1
    h_out[1, :, :] = h2
    c_out[0, :, :] = c1
    c_out[1, :, :] = c2

    _heads(h1, h2, noise_ref[...], head_w[...], head_b[...],
           l_out, b_out, logpi_out, logp_out, std=std)


# ---- fused first timestep: conv3 + global-avg-pool + fc + all heads ----

def _ctx_final_kernel(cols_ref, pool_ref, noise_ref,
                      w3, b3, wfc, bfc, head_w, head_b,
                      h_out, c_out, l_out, b_out, logpi_out, logp_out, *, std):
    # conv3 (as im2col matmul) + ReLU; activation never leaves VMEM.
    y = jnp.maximum(
        jnp.dot(cols_ref[...], w3[...], preferred_element_type=jnp.float32)
        + b3[...], 0.0)                                       # (Mp, 64)
    # Global average pool expressed as a tiny (B, Mp) matmul (no in-kernel reshape).
    pooled = jnp.dot(pool_ref[...], y, preferred_element_type=jnp.float32)   # (B, 64)
    h2 = jnp.dot(pooled, wfc[...], preferred_element_type=jnp.float32) + bfc[...]
    h1 = jnp.zeros_like(h2)                                   # h_t[0] starts at 0
    h_out[0, :, :] = h1
    h_out[1, :, :] = h2
    c_out[...] = jnp.zeros_like(c_out)
    _heads(h1, h2, noise_ref[...], head_w[...], head_b[...],
           l_out, b_out, logpi_out, logp_out, std=std)


# ---- pallas_call wrappers ----

def _step_out_shapes(B):
    return (jax.ShapeDtypeStruct((2, B, HIDDEN), jnp.float32),      # h_t
            jax.ShapeDtypeStruct((2, B, HIDDEN), jnp.float32),      # c_t
            jax.ShapeDtypeStruct((B, 2), jnp.float32),              # l_t
            jax.ShapeDtypeStruct((B, 1), jnp.float32),              # b_t
            jax.ShapeDtypeStruct((B, 1), jnp.float32),              # log_pi
            jax.ShapeDtypeStruct((B, NUM_CLASSES), jnp.float32))    # log_probas


def dram_step(p, phi, l_prev, h_prev, c_prev, noise):
    """One regular DRAM timestep as a single fused Pallas kernel."""
    B = phi.shape[0]
    phil = jnp.concatenate([phi, l_prev], axis=-1)      # (B, P + 2) -- cheap JAX glue
    args = (phil, h_prev, c_prev, noise,
            p["g_w_in"], p["g_b_in"], p["g_w_merge"], p["g_bgc"],
            p["lstm1_w"], p["lstm1_b2"], p["lstm2_w"], p["lstm2_b2"],
            p["head_w"], p["head_b"])
    out_shapes = _step_out_shapes(B)
    return pl.pallas_call(
        functools.partial(_step_kernel, hidden=HIDDEN, std=STD),
        grid=(1,),
        out_shape=out_shapes,
        in_specs=[_full_spec(a.shape) for a in args],
        out_specs=tuple(_full_spec(s.shape) for s in out_shapes),
        compiler_params=_ARB,
    )(*args)


def dram_first_step(p, cols3, pool_mat, noise):
    """First DRAM timestep: fused conv3 + pool + context fc + heads."""
    B = pool_mat.shape[0]
    args = (cols3, pool_mat, noise,
            p["ctx_w3_2d"], p["ctx_b3_2"], p["ctx_wfc"], p["ctx_bfc2"],
            p["head_w"], p["head_b"])
    out_shapes = _step_out_shapes(B)
    return pl.pallas_call(
        functools.partial(_ctx_final_kernel, std=STD),
        grid=(1,),
        out_shape=out_shapes,
        in_specs=[_full_spec(a.shape) for a in args],
        out_specs=tuple(_full_spec(s.shape) for s in out_shapes),
        compiler_params=_ARB,
    )(*args)


# ================================ glue (plain JAX) ================================

def im2col_nhwc(x, kh, kw, stride):
    """x: (B, H, W, C) -> (B*OH*OW, KH*KW*C) with (kh, kw, c) feature ordering."""
    B, H, W, C = x.shape
    OH = (H - kh) // stride + 1
    OW = (W - kw) // stride + 1
    cols = []
    for i in range(kh):
        for j in range(kw):
            cols.append(x[:, i:i + stride * OH:stride, j:j + stride * OW:stride, :])
    patches = jnp.concatenate(cols, axis=-1)            # (B, OH, OW, KH*KW*C)
    return patches.reshape(B * OH * OW, kh * kw * C), OH, OW


def conv2d_relu_nhwc(x, w2d, b, kh, kw, stride):
    """NHWC conv as im2col + tiled Pallas matmul (fused bias + ReLU), stays NHWC."""
    B = x.shape[0]
    cols, OH, OW = im2col_nhwc(x, kh, kw, stride)
    OC = w2d.shape[1]
    y = matmul_bias_relu(cols, w2d, b)                  # (B*OH*OW, OC)  -- Pallas
    return y.reshape(B, OH, OW, OC)


def context_cols3(p, x):
    """ContextNetwork trunk up to conv3's im2col; conv3 itself is fused into the
    first-step head kernel.  Returns (cols3 padded, pooling matrix)."""
    h = jnp.transpose(x, (0, 2, 3, 1))                  # NCHW -> NHWC (once)
    h = conv2d_relu_nhwc(h, p["ctx_w1_2d"], p["ctx_b1"], 5, 5, CTX_STRIDE)
    h = conv2d_relu_nhwc(h, p["ctx_w2_2d"], p["ctx_b2"], 3, 3, 2)
    B = h.shape[0]
    cols3, OH3, OW3 = im2col_nhwc(h, 3, 3, 2)
    M3 = B * OH3 * OW3
    Mp3 = _round_up(M3, 8)
    assert Mp3 <= 4096, "fused conv3+head kernel expects a small spatial extent"
    if Mp3 != M3:
        cols3 = jnp.pad(cols3, ((0, Mp3 - M3), (0, 0)))
    # Pooling matrix: row b averages the OH3*OW3 valid rows belonging to batch b.
    idx = jnp.arange(Mp3)
    seg = idx // (OH3 * OW3)
    valid = idx < M3
    pool_mat = jnp.where(valid[None, :] & (seg[None, :] == jnp.arange(B)[:, None]),
                         1.0 / (OH3 * OW3), 0.0).astype(jnp.float32)
    return cols3, pool_mat


def _extract_patch(x, centers, p):
    """x: (B, C, H, W); centers: (B, 2) int32 (row, col). Returns (B, C, p, p)."""
    B, C, H, W = x.shape
    pad = p // 2
    xp = jnp.pad(x, ((0, 0), (0, 0), (pad, pad), (pad, pad)))

    def one(img, ctr):
        return lax.dynamic_slice(img, (0, ctr[0], ctr[1]), (C, p, p))

    return jax.vmap(one)(xp, centers)


def retina(x, l):
    """Extract K concentric patches at location l, each downsampled to G x G."""
    # TODO(synk): could be moved into a Pallas kernel with scalar-prefetched centers
    # and manual DMA gather; kept as JAX glue (data-dependent dynamic_slice).
    B, C, H, _ = x.shape
    coords = 0.5 * ((l + 1.0) * H)                              # [-1,1] -> pixel coords
    coords = jnp.clip(jnp.round(coords).astype(jnp.int32), 0, H)
    centers = jnp.stack([coords[:, 1], coords[:, 0]], axis=-1)  # (row=y, col=x)
    phis = []
    for i in range(K):
        p = G * (S ** i)
        patch = _extract_patch(x, centers, p)                   # (B, C, p, p)
        f = p // G
        patch = patch.reshape(B, C, G, f, G, f).mean(axis=(3, 5))
        phis.append(patch)
    return jnp.concatenate(phis, axis=1).reshape(B, -1)         # (B, K*C*G*G)


# ================================ DRAM forward ================================

def dram_forward(params, x, noise, l_t_prev=None, out_prev=None,
                 first=False, last=False):
    """One DRAM timestep (core_type='rnn'), matching the PyTorch forward()."""
    if first:
        cols3, pool_mat = context_cols3(params, x)
        h_t, c_t, l_t, b_t, log_pi, log_probas = dram_first_step(
            params, cols3, pool_mat, noise)
    else:
        phi = retina(x, l_t_prev)
        h_prev, c_prev = out_prev
        h_t, c_t, l_t, b_t, log_pi, log_probas = dram_step(
            params, phi, l_t_prev, h_prev, c_prev, noise)
    b_t = b_t[:, 0]
    log_pi = log_pi[:, 0]
    if last:
        return (h_t, c_t), l_t, b_t, log_probas, log_pi
    return (h_t, c_t), l_t, b_t, log_pi


# ================================ parameter init ================================

def init_params(key):
    def uinit(k, shape, fan_in):
        bound = 1.0 / math.sqrt(fan_in)
        return jax.random.uniform(k, shape, jnp.float32, -bound, bound)

    keys = iter(jax.random.split(key, 32))
    P = K * CH * G * G  # flattened glimpse size
    p = {
        # ContextNetwork
        "ctx_w1": uinit(next(keys), (16, CH, 5, 5), CH * 25),
        "ctx_b1": jnp.zeros((16,), jnp.float32),
        "ctx_w2": uinit(next(keys), (32, 16, 3, 3), 16 * 9),
        "ctx_b2": jnp.zeros((32,), jnp.float32),
        "ctx_w3": uinit(next(keys), (64, 32, 3, 3), 32 * 9),
        "ctx_b3": jnp.zeros((64,), jnp.float32),
        "ctx_wfc": uinit(next(keys), (64, HIDDEN), 64),
        "ctx_bfc": jnp.zeros((HIDDEN,), jnp.float32),
        # GlimpseNetworkDRAM
        "g_wphi": uinit(next(keys), (P, HIDDEN), P),
        "g_bphi": jnp.zeros((HIDDEN,), jnp.float32),
        "g_wl": uinit(next(keys), (2, HIDDEN), 2),
        "g_bl": jnp.zeros((HIDDEN,), jnp.float32),
        "g_wg": uinit(next(keys), (HIDDEN, HIDDEN), HIDDEN),
        "g_bg": jnp.zeros((HIDDEN,), jnp.float32),
        "g_wlh": uinit(next(keys), (HIDDEN, HIDDEN), HIDDEN),
        "g_blh": jnp.zeros((HIDDEN,), jnp.float32),
        # CoreNetworkLSTM (2 stacked LSTM cells); NOTE: b = b_ih + b_hh pre-summed.
        "lstm1_wih": uinit(next(keys), (HIDDEN, 4 * HIDDEN), HIDDEN),
        "lstm1_whh": uinit(next(keys), (HIDDEN, 4 * HIDDEN), HIDDEN),
        "lstm1_b": jnp.zeros((4 * HIDDEN,), jnp.float32),
        "lstm2_wih": uinit(next(keys), (HIDDEN, 4 * HIDDEN), HIDDEN),
        "lstm2_whh": uinit(next(keys), (HIDDEN, 4 * HIDDEN), HIDDEN),
        "lstm2_b": jnp.zeros((4 * HIDDEN,), jnp.float32),
        # LocationNetwork / BaselineNetwork / ActionNetwork
        "loc_w": uinit(next(keys), (HIDDEN, 2), HIDDEN),
        "loc_b": jnp.zeros((2,), jnp.float32),
        "base_w": uinit(next(keys), (HIDDEN, 1), HIDDEN),
        "base_b": jnp.zeros((1,), jnp.float32),
        "cls_w": uinit(next(keys), (HIDDEN, NUM_CLASSES), HIDDEN),
        "cls_b": jnp.zeros((NUM_CLASSES,), jnp.float32),
    }
    return p


def prepare_params(p):
    """Pre-fuse / pre-reshape module parameters for the fused kernels."""
    H = HIDDEN
    P = K * CH * G * G

    def conv_w2d(w):  # (OC, IC, KH, KW) -> (KH*KW*IC, OC), matching im2col_nhwc ordering
        OC, IC, KH, KW = w.shape
        return jnp.transpose(w, (2, 3, 1, 0)).reshape(KH * KW * IC, OC)

    # Block-diagonal glimpse input weight: concat([phi, l]) @ [[W_phi,0],[0,W_l]]
    g_w_in = (jnp.zeros((P + 2, 2 * H), jnp.float32)
              .at[:P, :H].set(p["g_wphi"])
              .at[P:, H:].set(p["g_wl"]))
    g_b_in = jnp.concatenate([p["g_bphi"], p["g_bl"]]).reshape(1, 2 * H)

    # Merged head weights on concat([h1, h2]):
    #   cols [0:2]=loc (from h2), [2]=baseline (from h2), [3:13]=classifier (from h1).
    head_w = (jnp.zeros((2 * H, HEAD_W), jnp.float32)
              .at[:H, 3:].set(p["cls_w"])
              .at[H:, 0:2].set(p["loc_w"])
              .at[H:, 2:3].set(p["base_w"]))
    head_b = jnp.concatenate([p["loc_b"], p["base_b"], p["cls_b"]]).reshape(1, HEAD_W)

    q = dict(p)
    q.update(
        ctx_w1_2d=conv_w2d(p["ctx_w1"]),
        ctx_w2_2d=conv_w2d(p["ctx_w2"]),
        ctx_w3_2d=conv_w2d(p["ctx_w3"]),
        ctx_b3_2=p["ctx_b3"].reshape(1, 64),
        ctx_bfc2=p["ctx_bfc"].reshape(1, H),
        g_w_in=g_w_in, g_b_in=g_b_in,
        g_w_merge=jnp.concatenate([p["g_wg"], p["g_wlh"]], axis=0),
        g_bgc=(p["g_bg"] + p["g_blh"]).reshape(1, H),
        lstm1_w=jnp.concatenate([p["lstm1_wih"], p["lstm1_whh"]], axis=0),
        lstm1_b2=p["lstm1_b"].reshape(1, 4 * H),
        lstm2_w=jnp.concatenate([p["lstm2_wih"], p["lstm2_whh"]], axis=0),
        lstm2_b2=p["lstm2_b"].reshape(1, 4 * H),
        head_w=head_w, head_b=head_b,
    )
    return q


# ==================================== main ====================================

if __name__ == "__main__":
    key = jax.random.PRNGKey(0)
    kx, kn1, kn2, kn3, kp = jax.random.split(key, 5)

    B = 2
    x = jax.random.normal(kx, (B, CH, IMG, IMG), jnp.float32)   # layout: NCHW
    params = prepare_params(init_params(kp))

    fwd_first = jax.jit(functools.partial(dram_forward, first=True, last=False))
    fwd_mid = jax.jit(functools.partial(dram_forward, first=False, last=False))
    fwd_last = jax.jit(functools.partial(dram_forward, first=False, last=True))

    # timestep 0: first=True -> ContextNetwork provides h_t[1], first glimpse location
    noise1 = jax.random.normal(kn1, (B, 2), jnp.float32)
    (h_t, c_t), l_t, b_t, log_pi = fwd_first(params, x, noise1)

    # timestep 1: regular glimpse step
    noise2 = jax.random.normal(kn2, (B, 2), jnp.float32)
    (h_t, c_t), l_t, b_t, log_pi = fwd_mid(params, x, noise2, l_t, (h_t, c_t))

    # timestep 2: last=True -> also classify
    noise3 = jax.random.normal(kn3, (B, 2), jnp.float32)
    (h_t, c_t), l_t, b_t, log_probas, log_pi = fwd_last(
        params, x, noise3, l_t, (h_t, c_t))

    jax.block_until_ready((h_t, c_t, l_t, b_t, log_probas, log_pi))

    assert h_t.shape == (2, B, HIDDEN) and c_t.shape == (2, B, HIDDEN)
    assert l_t.shape == (B, 2) and b_t.shape == (B,) and log_pi.shape == (B,)
    assert log_probas.shape == (B, NUM_CLASSES)
    assert bool(jnp.all(jnp.isfinite(log_probas)))
    assert bool(jnp.all(jnp.abs(l_t) <= 1.0))
    # log-softmax rows must (log-)sum to ~1
    assert bool(jnp.allclose(jnp.sum(jnp.exp(log_probas), axis=-1), 1.0, atol=1e-4))

    print("KERNEL_OK")
</pallas_src>

<mosaic_0001>
module attributes {stable_mosaic.version = 11 : i64} {
  func.func @_matmul_bias_relu_kernel(%arg0: i32, %arg1: memref<512x75xf32, #tpu.memory_space<vmem>>, %arg2: memref<75x16xf32, #tpu.memory_space<vmem>>, %arg3: memref<1x16xf32, #tpu.memory_space<vmem>>, %arg4: memref<512x16xf32, #tpu.memory_space<vmem>>) attributes {dimension_semantics = [#tpu.dimension_semantics<parallel>], iteration_bounds = array<i64: 10>, scalar_prefetch = 0 : i64, scratch_operands = 0 : i64, tpu.core_type = #tpu.core_type<tc>, window_params = [{transform_indices = @transform_0, window_bounds = array<i64: 512, 75>}, {pipeline_mode = #tpu.pipeline_mode<synchronous>, transform_indices = @transform_1, window_bounds = array<i64: 75, 16>}, {pipeline_mode = #tpu.pipeline_mode<synchronous>, transform_indices = @transform_2, window_bounds = array<i64: 1, 16>}, {transform_indices = @transform_3, window_bounds = array<i64: 512, 16>}]} {
    %c0 = arith.constant 0 : index
    %c0_0 = arith.constant 0 : index
    %0 = vector.load %arg1[%c0, %c0_0] : memref<512x75xf32, #tpu.memory_space<vmem>>, vector<512x75xf32>
    %c0_1 = arith.constant 0 : index
    %c0_2 = arith.constant 0 : index
    %1 = vector.load %arg2[%c0_1, %c0_2] : memref<75x16xf32, #tpu.memory_space<vmem>>, vector<75x16xf32>
    %cst = arith.constant dense<0.000000e+00> : vector<512x16xf32>
    %2 = tpu.matmul %0, %1, %cst {dimension_numbers = #tpu.dot_dimension_numbers<[1], [0], [0], [1], [0, 0, 1, 1], [], []>} : vector<512x75xf32>, vector<75x16xf32>, vector<512x16xf32> -> vector<512x16xf32>
    %c0_3 = arith.constant 0 : index
    %c0_4 = arith.constant 0 : index
    %3 = vector.load %arg3[%c0_3, %c0_4] : memref<1x16xf32, #tpu.memory_space<vmem>>, vector<1x16xf32>
    %4 = vector.broadcast %3 : vector<1x16xf32> to vector<512x16xf32>
    %5 = arith.addf %2, %4 : vector<512x16xf32>
    %cst_5 = arith.constant 0.000000e+00 : f32
    %6 = vector.broadcast %cst_5 : f32 to vector<512x16xf32>
    %7 = arith.maximumf %5, %6 : vector<512x16xf32>
    %c0_6 = arith.constant 0 : index
    %c0_7 = arith.constant 0 : index
    %8 = vector.load %arg4[%c0_6, %c0_7] : memref<512x16xf32, #tpu.memory_space<vmem>>, vector<512x16xf32>
    tpu.vector_store %arg4[%c0_6, %c0_7], %7 {strides = array<i32>} : memref<512x16xf32, #tpu.memory_space<vmem>>, vector<512x16xf32>,
    return
  }
  func.func @transform_0(%arg0: i32) -> (i32, i32) {
    %c0_i32 = arith.constant 0 : i32
    %c0_i32_0 = arith.constant 0 : i32
    return %arg0, %c0_i32 : i32, i32
  }
  func.func @transform_1(%arg0: i32) -> (i32, i32) {
    %c0_i32 = arith.constant 0 : i32
    %c0_i32_0 = arith.constant 0 : i32
    %c0_i32_1 = arith.constant 0 : i32
    return %c0_i32, %c0_i32_0 : i32, i32
  }
  func.func @transform_2(%arg0: i32) -> (i32, i32) {
    %c0_i32 = arith.constant 0 : i32
    %c0_i32_0 = arith.constant 0 : i32
    %c0_i32_1 = arith.constant 0 : i32
    return %c0_i32, %c0_i32_0 : i32, i32
  }
  func.func @transform_3(%arg0: i32) -> (i32, i32) {
    %c0_i32 = arith.constant 0 : i32
    %c0_i32_0 = arith.constant 0 : i32
    return %arg0, %c0_i32 : i32, i32
  }
}

module attributes {stable_mosaic.version = 11 : i64} {
  func.func @_matmul_bias_relu_kernel(%arg0: i32, %arg1: memref<512x144xf32, #tpu.memory_space<vmem>>, %arg2: memref<144x32xf32, #tpu.memory_space<vmem>>, %arg3: memref<1x32xf32, #tpu.memory_space<vmem>>, %arg4: memref<512x32xf32, #tpu.memory_space<vmem>>) attributes {dimension_semantics = [#tpu.dimension_semantics<parallel>], iteration_bounds = array<i64: 3>, scalar_prefetch = 0 : i64, scratch_operands = 0 : i64, tpu.core_type = #tpu.core_type<tc>, window_params = [{transform_indices = @transform_0, window_bounds = array<i64: 512, 144>}, {pipeline_mode = #tpu.pipeline_mode<synchronous>, transform_indices = @transform_1, window_bounds = array<i64: 144, 32>}, {pipeline_mode = #tpu.pipeline_mode<synchronous>, transform_indices = @transform_2, window_bounds = array<i64: 1, 32>}, {transform_indices = @transform_3, window_bounds = array<i64: 512, 32>}]} {
    %c0 = arith.constant 0 : index
    %c0_0 = arith.constant 0 : index
    %0 = vector.load %arg1[%c0, %c0_0] : memref<512x144xf32, #tpu.memory_space<vmem>>, vector<512x144xf32>
    %c0_1 = arith.constant 0 : index
    %c0_2 = arith.constant 0 : index
    %1 = vector.load %arg2[%c0_1, %c0_2] : memref<144x32xf32, #tpu.memory_space<vmem>>, vector<144x32xf32>
    %cst = arith.constant dense<0.000000e+00> : vector<512x32xf32>
    %2 = tpu.matmul %0, %1, %cst {dimension_numbers = #tpu.dot_dimension_numbers<[1], [0], [0], [1], [0, 0, 1, 1], [], []>} : vector<512x144xf32>, vector<144x32xf32>, vector<512x32xf32> -> vector<512x32xf32>
    %c0_3 = arith.constant 0 : index
    %c0_4 = arith.constant 0 : index
    %3 = vector.load %arg3[%c0_3, %c0_4] : memref<1x32xf32, #tpu.memory_space<vmem>>, vector<1x32xf32>
    %4 = vector.broadcast %3 : vector<1x32xf32> to vector<512x32xf32>
    %5 = arith.addf %2, %4 : vector<512x32xf32>
    %cst_5 = arith.constant 0.000000e+00 : f32
    %6 = vector.broadcast %cst_5 : f32 to vector<512x32xf32>
    %7 = arith.maximumf %5, %6 : vector<512x32xf32>
    %c0_6 = arith.constant 0 : index
    %c0_7 = arith.constant 0 : index
    %8 = vector.load %arg4[%c0_6, %c0_7] : memref<512x32xf32, #tpu.memory_space<vmem>>, vector<512x32xf32>
    tpu.vector_store %arg4[%c0_6, %c0_7], %7 {strides = array<i32>} : memref<512x32xf32, #tpu.memory_space<vmem>>, vector<512x32xf32>,
    return
  }
  func.func @transform_0(%arg0: i32) -> (i32, i32) {
    %c0_i32 = arith.constant 0 : i32
    %c0_i32_0 = arith.constant 0 : i32
    return %arg0, %c0_i32 : i32, i32
  }
  func.func @transform_1(%arg0: i32) -> (i32, i32) {
    %c0_i32 = arith.constant 0 : i32
    %c0_i32_0 = arith.constant 0 : i32
    %c0_i32_1 = arith.constant 0 : i32
    return %c0_i32, %c0_i32_0 : i32, i32
  }
  func.func @transform_2(%arg0: i32) -> (i32, i32) {
    %c0_i32 = arith.constant 0 : i32
    %c0_i32_0 = arith.constant 0 : i32
    %c0_i32_1 = arith.constant 0 : i32
    return %c0_i32, %c0_i32_0 : i32, i32
  }
  func.func @transform_3(%arg0: i32) -> (i32, i32) {
    %c0_i32 = arith.constant 0 : i32
    %c0_i32_0 = arith.constant 0 : i32
    return %arg0, %c0_i32 : i32, i32
  }
}

module attributes {stable_mosaic.version = 11 : i64} {
  func.func @_ctx_final_kernel(%arg0: i32, %arg1: memref<248x288xf32, #tpu.memory_space<vmem>>, %arg2: memref<2x248xf32, #tpu.memory_space<vmem>>, %arg3: memref<2x2xf32, #tpu.memory_space<vmem>>, %arg4: memref<288x64xf32, #tpu.memory_space<vmem>>, %arg5: memref<1x64xf32, #tpu.memory_space<vmem>>, %arg6: memref<64x32xf32, #tpu.memory_space<vmem>>, %arg7: memref<1x32xf32, #tpu.memory_space<vmem>>, %arg8: memref<64x13xf32, #tpu.memory_space<vmem>>, %arg9: memref<1x13xf32, #tpu.memory_space<vmem>>, %arg10: memref<2x2x32xf32, #tpu.memory_space<vmem>>, %arg11: memref<2x2x32xf32, #tpu.memory_space<vmem>>, %arg12: memref<2x2xf32, #tpu.memory_space<vmem>>, %arg13: memref<2x1xf32, #tpu.memory_space<vmem>>, %arg14: memref<2x1xf32, #tpu.memory_space<vmem>>, %arg15: memref<2x10xf32, #tpu.memory_space<vmem>>) attributes {dimension_semantics = [#tpu.dimension_semantics<arbitrary>], iteration_bounds = array<i64: 1>, scalar_prefetch = 0 : i64, scratch_operands = 0 : i64, tpu.core_type = #tpu.core_type<tc>, window_params = [{pipeline_mode = #tpu.pipeline_mode<synchronous>, transform_indices = @transform_0, window_bounds = array<i64: 248, 288>}, {pipeline_mode = #tpu.pipeline_mode<synchronous>, transform_indices = @transform_1, window_bounds = array<i64: 2, 248>}, {pipeline_mode = #tpu.pipeline_mode<synchronous>, transform_indices = @transform_2, window_bounds = array<i64: 2, 2>}, {pipeline_mode = #tpu.pipeline_mode<synchronous>, transform_indices = @transform_3, window_bounds = array<i64: 288, 64>}, {pipeline_mode = #tpu.pipeline_mode<synchronous>, transform_indices = @transform_4, window_bounds = array<i64: 1, 64>}, {pipeline_mode = #tpu.pipeline_mode<synchronous>, transform_indices = @transform_5, window_bounds = array<i64: 64, 32>}, {pipeline_mode = #tpu.pipeline_mode<synchronous>, transform_indices = @transform_6, window_bounds = array<i64: 1, 32>}, {pipeline_mode = #tpu.pipeline_mode<synchronous>, transform_indices = @transform_7, window_bounds = array<i64: 64, 13>}, {pipeline_mode = #tpu.pipeline_mode<synchronous>, transform_indices = @transform_8, window_bounds = array<i64: 1, 13>}, {pipeline_mode = #tpu.pipeline_mode<synchronous>, transform_indices = @transform_9, window_bounds = array<i64: 2, 2, 32>}, {pipeline_mode = #tpu.pipeline_mode<synchronous>, transform_indices = @transform_10, window_bounds = array<i64: 2, 2, 32>}, {pipeline_mode = #tpu.pipeline_mode<synchronous>, transform_indices = @transform_11, window_bounds = array<i64: 2, 2>}, {pipeline_mode = #tpu.pipeline_mode<synchronous>, transform_indices = @transform_12, window_bounds = array<i64: 2, 1>}, {pipeline_mode = #tpu.pipeline_mode<synchronous>, transform_indices = @transform_13, window_bounds = array<i64: 2, 1>}, {pipeline_mode = #tpu.pipeline_mode<synchronous>, transform_indices = @transform_14, window_bounds = array<i64: 2, 10>}]} {
    %c0 = arith.constant 0 : index
    %c0_0 = arith.constant 0 : index
    %0 = vector.load %arg1[%c0, %c0_0] : memref<248x288xf32, #tpu.memory_space<vmem>>, vector<248x288xf32>
    %c0_1 = arith.constant 0 : index
    %c0_2 = arith.constant 0 : index
    %1 = vector.load %arg4[%c0_1, %c0_2] : memref<288x64xf32, #tpu.memory_space<vmem>>, vector<288x64xf32>
    %cst = arith.constant dense<0.000000e+00> : vector<248x64xf32>
    %2 = tpu.matmul %0, %1, %cst {dimension_numbers = #tpu.dot_dimension_numbers<[1], [0], [0], [1], [0, 0, 1, 1], [], []>} : vector<248x288xf32>, vector<288x64xf32>, vector<248x64xf32> -> vector<248x64xf32>
    %c0_3 = arith.constant 0 : index
    %c0_4 = arith.constant 0 : index
    %3 = vector.load %arg5[%c0_3, %c0_4] : memref<1x64xf32, #tpu.memory_space<vmem>>, vector<1x64xf32>
    %4 = vector.broadcast %3 : vector<1x64xf32> to vector<248x64xf32>
    %5 = arith.addf %2, %4 : vector<248x64xf32>
    %cst_5 = arith.constant 0.000000e+00 : f32
    %6 = vector.broadcast %cst_5 : f32 to vector<248x64xf32>
    %7 = arith.maximumf %5, %6 : vector<248x64xf32>
    %c0_6 = arith.constant 0 : index
    %c0_7 = arith.constant 0 : index
    %8 = vector.load %arg2[%c0_6, %c0_7] : memref<2x248xf32, #tpu.memory_space<vmem>>, vector<2x248xf32>
    %cst_8 = arith.constant dense<0.000000e+00> : vector<2x64xf32>
    %9 = tpu.matmul %8, %7, %cst_8 {dimension_numbers = #tpu.dot_dimension_numbers<[1], [0], [0], [1], [0, 0, 1, 1], [], []>} : vector<2x248xf32>, vector<248x64xf32>, vector<2x64xf32> -> vector<2x64xf32>
    %c0_9 = arith.constant 0 : index
    %c0_10 = arith.constant 0 : index
    %10 = vector.load %arg6[%c0_9, %c0_10] : memref<64x32xf32, #tpu.memory_space<vmem>>, vector<64x32xf32>
    %cst_11 = arith.constant dense<0.000000e+00> : vector<2x32xf32>
    %11 = tpu.matmul %9, %10, %cst_11 {dimension_numbers = #tpu.dot_dimension_numbers<[1], [0], [0], [1], [0, 0, 1, 1], [], []>} : vector<2x64xf32>, vector<64x32xf32>, vector<2x32xf32> -> vector<2x32xf32>
    %c0_12 = arith.constant 0 : index
    %c0_13 = arith.constant 0 : index
    %12 = vector.load %arg7[%c0_12, %c0_13] : memref<1x32xf32, #tpu.memory_space<vmem>>, vector<1x32xf32>
    %13 = vector.broadcast %12 : vector<1x32xf32> to vector<2x32xf32>
    %14 = arith.addf %11, %13 : vector<2x32xf32>
    %cst_14 = arith.constant 0.000000e+00 : f32
    %15 = vector.broadcast %cst_14 : f32 to vector<2x32xf32>
    %c0_15 = arith.constant 0 : index
    %c0_16 = arith.constant 0 : index
    %c0_17 = arith.constant 0 : index
    %16 = vector.load %arg10[%c0_15, %c0_16, %c0_17] : memref<2x2x32xf32, #tpu.memory_space<vmem>>, vector<1x2x32xf32>
    %17 = vector.shape_cast %16 : vector<1x2x32xf32> to vector<2x32xf32>
    %18 = vector.shape_cast %15 : vector<2x32xf32> to vector<1x2x32xf32>
    tpu.vector_store %arg10[%c0_15, %c0_16, %c0_17], %18 {strides = array<i32>} : memref<2x2x32xf32, #tpu.memory_space<vmem>>, vector<1x2x32xf32>,
    %c1 = arith.constant 1 : index
    %c0_18 = arith.constant 0 : index
    %c0_19 = arith.constant 0 : index
    %19 = vector.load %arg10[%c1, %c0_18, %c0_19] : memref<2x2x32xf32, #tpu.memory_space<vmem>>, vector<1x2x32xf32>
    %20 = vector.shape_cast %19 : vector<1x2x32xf32> to vector<2x32xf32>
    %21 = vector.shape_cast %14 : vector<2x32xf32> to vector<1x2x32xf32>
    tpu.vector_store %arg10[%c1, %c0_18, %c0_19], %21 {strides = array<i32>} : memref<2x2x32xf32, #tpu.memory_space<vmem>>, vector<1x2x32xf32>,
    %cst_20 = arith.constant 0.000000e+00 : f32
    %22 = vector.broadcast %cst_20 : f32 to vector<2x2x32xf32>
    %c0_21 = arith.constant 0 : index
    %c0_22 = arith.constant 0 : index
    %c0_23 = arith.constant 0 : index
    %23 = vector.load %arg11[%c0_21, %c0_22, %c0_23] : memref<2x2x32xf32, #tpu.memory_space<vmem>>, vector<2x2x32xf32>
    tpu.vector_store %arg11[%c0_21, %c0_22, %c0_23], %22 {strides = array<i32>} : memref<2x2x32xf32, #tpu.memory_space<vmem>>, vector<2x2x32xf32>,
    %c0_24 = arith.constant 0 : index
    %c0_25 = arith.constant 0 : index
    %24 = vector.load %arg3[%c0_24, %c0_25] : memref<2x2xf32, #tpu.memory_space<vmem>>, vector<2x2xf32>
    %c0_26 = arith.constant 0 : index
    %c0_27 = arith.constant 0 : index
    %25 = vector.load %arg8[%c0_26, %c0_27] : memref<64x13xf32, #tpu.memory_space<vmem>>, vector<64x13xf32>
    %c0_28 = arith.constant 0 : index
    %c0_29 = arith.constant 0 : index
    %26 = vector.load %arg9[%c0_28, %c0_29] : memref<1x13xf32, #tpu.memory_space<vmem>>, vector<1x13xf32>
    %27 = tpu.concatenate %15, %14 in 1 : vector<2x32xf32>, vector<2x32xf32> -> vector<2x64xf32>
    %cst_30 = arith.constant dense<0.000000e+00> : vector<2x13xf32>
    %28 = tpu.matmul %27, %25, %cst_30 {dimension_numbers = #tpu.dot_dimension_numbers<[1], [0], [0], [1], [0, 0, 1, 1], [], []>} : vector<2x64xf32>, vector<64x13xf32>, vector<2x13xf32> -> vector<2x13xf32>
    %29 = vector.broadcast %26 : vector<1x13xf32> to vector<2x13xf32>
    %30 = arith.addf %28, %29 : vector<2x13xf32>
    %31 = vector.extract_strided_slice %30 {offsets = [0, 0], sizes = [2, 2], strides = [1, 1]} : vector<2x13xf32> to vector<2x2xf32>
    %32 = math.tanh %31 : vector<2x2xf32>
    %cst_31 = arith.constant 1.700000e-01 : f32
    %33 = vector.broadcast %cst_31 : f32 to vector<2x2xf32>
    %34 = arith.mulf %33, %24 : vector<2x2xf32>
    %35 = arith.addf %32, %34 : vector<2x2xf32>
    %36 = arith.subf %35, %32 : vector<2x2xf32>
    %37 = arith.mulf %36, %36 : vector<2x2xf32>
    %cst_32 = arith.constant 0.000000e+00 : f32
    %38 = vector.broadcast %cst_32 : f32 to vector<2x2xf32>
    %39 = arith.subf %38, %37 : vector<2x2xf32>
    %cst_33 = arith.constant 5.780000e-02 : f32
    %40 = vector.broadcast %cst_33 : f32 to vector<2x2xf32>
    %41 = arith.divf %39, %40 : vector<2x2xf32>
    %cst_34 = arith.constant -1.7719568 : f32
    %42 = vector.broadcast %cst_34 : f32 to vector<2x2xf32>
    %43 = arith.subf %41, %42 : vector<2x2xf32>
    %cst_35 = arith.constant 0.918938517 : f32
    %44 = vector.broadcast %cst_35 : f32 to vector<2x2xf32>
    %45 = arith.subf %43, %44 : vector<2x2xf32>
    %cst_36 = arith.constant dense<0.000000e+00> : vector<2xf32>
    %46 = vector.multi_reduction <add>, %45, %cst_36 [1] : vector<2x2xf32> to vector<2xf32>
    %47 = vector.shape_cast %46 : vector<2xf32> to vector<2x1xf32>
    %c0_37 = arith.constant 0 : index
    %c0_38 = arith.constant 0 : index
    %48 = vector.load %arg14[%c0_37, %c0_38] : memref<2x1xf32, #tpu.memory_space<vmem>>, vector<2x1xf32>
    tpu.vector_store %arg14[%c0_37, %c0_38], %47 {strides = array<i32>} : memref<2x1xf32, #tpu.memory_space<vmem>>, vector<2x1xf32>,
    %cst_39 = arith.constant -1.000000e+00 : f32
    %cst_40 = arith.constant 1.000000e+00 : f32
    %49 = vector.broadcast %cst_39 : f32 to vector<2x2xf32>
    %50 = arith.maximumf %49, %35 : vector<2x2xf32>
    %51 = vector.broadcast %cst_40 : f32 to vector<2x2xf32>
    %52 = arith.minimumf %51, %50 : vector<2x2xf32>
    %c0_41 = arith.constant 0 : index
    %c0_42 = arith.constant 0 : index
    %53 = vector.load %arg12[%c0_41, %c0_42] : memref<2x2xf32, #tpu.memory_space<vmem>>, vector<2x2xf32>
    tpu.vector_store %arg12[%c0_41, %c0_42], %52 {strides = array<i32>} : memref<2x2xf32, #tpu.memory_space<vmem>>, vector<2x2xf32>,
    %54 = vector.extract_strided_slice %30 {offsets = [0, 2], sizes = [2, 1], strides = [1, 1]} : vector<2x13xf32> to vector<2x1xf32>
    %c0_43 = arith.constant 0 : index
    %c0_44 = arith.constant 0 : index
    %55 = vector.load %arg13[%c0_43, %c0_44] : memref<2x1xf32, #tpu.memory_space<vmem>>, vector<2x1xf32>
    tpu.vector_store %arg13[%c0_43, %c0_44], %54 {strides = array<i32>} : memref<2x1xf32, #tpu.memory_space<vmem>>, vector<2x1xf32>,
    %56 = vector.extract_strided_slice %30 {offsets = [0, 3], sizes = [2, 10], strides = [1, 1]} : vector<2x13xf32> to vector<2x10xf32>
    %cst_45 = arith.constant dense<0xFF800000> : vector<2xf32>
    %57 = vector.multi_reduction <maximumf>, %56, %cst_45 [1] : vector<2x10xf32> to vector<2xf32>
    %58 = vector.shape_cast %57 : vector<2xf32> to vector<2x1xf32>
    %59 = vector.broadcast %58 : vector<2x1xf32> to vector<2x10xf32>
    %60 = arith.subf %56, %59 : vector<2x10xf32>
    %61 = math.exp %60 : vector<2x10xf32>
    %cst_46 = arith.constant dense<0.000000e+00> : vector<2xf32>
    %62 = vector.multi_reduction <add>, %61, %cst_46 [1] : vector<2x10xf32> to vector<2xf32>
    %63 = vector.shape_cast %62 : vector<2xf32> to vector<2x1xf32>
    %64 = math.log %63 : vector<2x1xf32>
    %65 = vector.broadcast %64 : vector<2x1xf32> to vector<2x10xf32>
    %66 = arith.subf %60, %65 : vector<2x10xf32>
    %c0_47 = arith.constant 0 : index
    %c0_48 = arith.constant 0 : index
    %67 = vector.load %arg15[%c0_47, %c0_48] : memref<2x10xf32, #tpu.memory_space<vmem>>, vector<2x10xf32>
    tpu.vector_store %arg15[%c0_47, %c0_48], %66 {strides = array<i32>} : memref<2x10xf32, #tpu.memory_space<vmem>>, vector<2x10xf32>,
    return
  }
  func.func @transform_0(%arg0: i32) -> (i32, i32) {
    %c0_i32 = arith.constant 0 : i32
    %c0_i32_0 = arith.constant 0 : i32
    %c0_i32_1 = arith.constant 0 : i32
    return %c0_i32, %c0_i32_0 : i32, i32
  }
  func.func @transform_1(%arg0: i32) -> (i32, i32) {
    %c0_i32 = arith.constant 0 : i32
    %c0_i32_0 = arith.constant 0 : i32
    %c0_i32_1 = arith.constant 0 : i32
    return %c0_i32, %c0_i32_0 : i32, i32
  }
  func.func @transform_2(%arg0: i32) -> (i32, i32) {
    %c0_i32 = arith.constant 0 : i32
    %c0_i32_0 = arith.constant 0 : i32
    %c0_i32_1 = arith.constant 0 : i32
    return %c0_i32, %c0_i32_0 : i32, i32
  }
  func.func @transform_3(%arg0: i32) -> (i32, i32) {
    %c0_i32 = arith.constant 0 : i32
    %c0_i32_0 = arith.constant 0 : i32
    %c0_i32_1 = arith.constant 0 : i32
    return %c0_i32, %c0_i32_0 : i32, i32
  }
  func.func @transform_4(%arg0: i32) -> (i32, i32) {
    %c0_i32 = arith.constant 0 : i32
    %c0_i32_0 = arith.constant 0 : i32
    %c0_i32_1 = arith.constant 0 : i32
    return %c0_i32, %c0_i32_0 : i32, i32
  }
  func.func @transform_5(%arg0: i32) -> (i32, i32) {
    %c0_i32 = arith.constant 0 : i32
    %c0_i32_0 = arith.constant 0 : i32
    %c0_i32_1 = arith.constant 0 : i32
    return %c0_i32, %c0_i32_0 : i32, i32
  }
  func.func @transform_6(%arg0: i32) -> (i32, i32) {
    %c0_i32 = arith.constant 0 : i32
    %c0_i32_0 = arith.constant 0 : i32
    %c0_i32_1 = arith.constant 0 : i32
    return %c0_i32, %c0_i32_0 : i32, i32
  }
  func.func @transform_7(%arg0: i32) -> (i32, i32) {
    %c0_i32 = arith.constant 0 : i32
    %c0_i32_0 = arith.constant 0 : i32
    %c0_i32_1 = arith.constant 0 : i32
    return %c0_i32, %c0_i32_0 : i32, i32
  }
  func.func @transform_8(%arg0: i32) -> (i32, i32) {
    %c0_i32 = arith.constant 0 : i32
    %c0_i32_0 = arith.constant 0 : i32
    %c0_i32_1 = arith.constant 0 : i32
    return %c0_i32, %c0_i32_0 : i32, i32
  }
  func.func @transform_9(%arg0: i32) -> (i32, i32, i32) {
    %c0_i32 = arith.constant 0 : i32
    %c0_i32_0 = arith.constant 0 : i32
    %c0_i32_1 = arith.constant 0 : i32
    %c0_i32_2 = arith.constant 0 : i32
    return %c0_i32, %c0_i32_0, %c0_i32_1 : i32, i32, i32
  }
  func.func @transform_10(%arg0: i32) -> (i32, i32, i32) {
    %c0_i32 = arith.constant 0 : i32
    %c0_i32_0 = arith.constant 0 : i32
    %c0_i32_1 = arith.constant 0 : i32
    %c0_i32_2 = arith.constant 0 : i32
    return %c0_i32, %c0_i32_0, %c0_i32_1 : i32, i32, i32
  }
  func.func @transform_11(%arg0: i32) -> (i32, i32) {
    %c0_i32 = arith.constant 0 : i32
    %c0_i32_0 = arith.constant 0 : i32
    %c0_i32_1 = arith.constant 0 : i32
    return %c0_i32, %c0_i32_0 : i32, i32
  }
  func.func @transform_12(%arg0: i32) -> (i32, i32) {
    %c0_i32 = arith.constant 0 : i32
    %c0_i32_0 = arith.constant 0 : i32
    %c0_i32_1 = arith.constant 0 : i32
    return %c0_i32, %c0_i32_0 : i32, i32
  }
  func.func @transform_13(%arg0: i32) -> (i32, i32) {
    %c0_i32 = arith.constant 0 : i32
    %c0_i32_0 = arith.constant 0 : i32
    %c0_i32_1 = arith.constant 0 : i32
    return %c0_i32, %c0_i32_0 : i32, i32
  }
  func.func @transform_14(%arg0: i32) -> (i32, i32) {
    %c0_i32 = arith.constant 0 : i32
    %c0_i32_0 = arith.constant 0 : i32
    %c0_i32_1 = arith.constant 0 : i32
    return %c0_i32, %c0_i32_0 : i32, i32
  }
}

</mosaic_0001>

<llo_original>
// kernel: dram_forward.3
$region0: #{dram_forward.3}
  #allocation0 [shape = 'u32[]', space=smem, size = 0x4, offset = 0x4, fixed_abs, tag = 'smem constant byte address 0x4 - core index']
  #allocation1 [shape = 'u32[144,128]{1,0:T(1,128)}', space=vmem, size = 0x12000, scoped, tag = 'internal scratch']
  %s0 = inlined_call_operand.vmem [shape: f32[5120,75], index: 0, kind: input, shape index: {}]
  %s1 = inlined_call_operand.vmem [shape: f32[75,16], index: 1, kind: input, shape index: {}]
  %s2 = inlined_call_operand.vmem [shape: f32[1,16], index: 2, kind: input, shape index: {}]
  %s3 = inlined_call_operand.vmem [shape: f32[5120,16], index: 3, kind: output, shape index: {}]
  %s4 = sld [smem:[#allocation0]]
  $region45: #{dram_forward.3} parent=0
    _
  %s6 = ssub.s32 1, %s4
  %s7 = scalar_select 0, %s6, %s4
  loop: start=0, step=1, limit=12
  $region2: #{dram_forward.3} parent=0 // loop_pre_header
    _
  $region3: #{dram_forward.3} parent=0 // loop_header
    %s9 = sphi 0, %s13
    %p10 = scmp.ge.s32.totalorder %s9, 12
    %s19 = sphi 0, %s21
    %s22 = sphi 0, %s19
    %s23 = sphi 0, %s22
    %s39 = sphi 0, %s23
    %s43 = sphi 0, %s43
    %s45 = sphi 0, %s43
    %s46 = sphi 0, %s45
    %s60 = sphi 0, %s46
    %s64 = sphi 0, %s64
    %s66 = sphi 0, %s64
    %s67 = sphi 0, %s66
    %s81 = sphi 0, %s67
    %s87 = sphi 0, %s89
    %s90 = sphi 0, %s87
    %s91 = sphi 0, %s90
    %s107 = sphi 0, %s91
  $region4: #{dram_forward.3} parent=0 // loop_header_branch
    %12 = sbr.rel (%p10) target = $region8
  $region5: #{dram_forward.3} parent=0 // loop_body
    %s14 = ssub.s32 %s9, 1
    %s15 = ssub.s32 %s9, 2
    %s16 = sadd.s32 %s9, 1
    %s17 = ssub.s32 %s9, %s16
    %p18 = scmp.eq.s32.totalorder %s17, 0
    %s20 = sadd.s32 %s19, 1
    %s21 = scalar_select %p18, %s19, %s20
    %p24 = pneg %p18
    %p25 = scmp.eq.s32.totalorder %s9, 9
    %p26 = por %p24, %p25
    %p27 = scmp.ne.s32.totalorder %s19, %s22
    %p28 = scmp.eq.s32.totalorder %s9, 0
    %p29 = por %p27, %p28
    %p30 = scmp.ne.s32.totalorder %s19, %s22
    %p31 = scmp.eq.s32.totalorder %s14, 9
    %p32 = por %p30, %p31
    %p33 = scmp.ne.s32.totalorder %s22, %s23
    %p34 = scmp.eq.s32.totalorder %s14, 0
    %p35 = por %p33, %p34
    %p36 = scmp.ne.s32.totalorder %s22, %s23
    %p37 = scmp.eq.s32.totalorder %s15, 9
    %p38 = por %p36, %p37
    %p40 = scmp.ne.s32.totalorder %s23, %s39
    %p41 = scmp.eq.s32.totalorder %s15, 0
    %p42 = por %p40, %p41
    %s44 = sadd.s32 %s43, 1
    %p47 = scmp.eq.s32.totalorder %s9, 9
    %p48 = scmp.ne.s32.totalorder %s43, %s45
    %p49 = scmp.eq.s32.totalorder %s9, 0
    %p50 = por %p48, %p49
    %p51 = scmp.ne.s32.totalorder %s43, %s45
    %p52 = scmp.eq.s32.totalorder %s14, 9
    %p53 = por %p51, %p52
    %p54 = scmp.ne.s32.totalorder %s45, %s46
    %p55 = scmp.eq.s32.totalorder %s14, 0
    %p56 = por %p54, %p55
    %p57 = scmp.ne.s32.totalorder %s45, %s46
    %p58 = scmp.eq.s32.totalorder %s15, 9
    %p59 = por %p57, %p58
    %p61 = scmp.ne.s32.totalorder %s46, %s60
    %p62 = scmp.eq.s32.totalorder %s15, 0
    %p63 = por %p61, %p62
    %s65 = sadd.s32 %s64, 1
    %p68 = scmp.eq.s32.totalorder %s9, 9
    %p69 = scmp.ne.s32.totalorder %s64, %s66
    %p70 = scmp.eq.s32.totalorder %s9, 0
    %p71 = por %p69, %p70
    %p72 = scmp.ne.s32.totalorder %s64, %s66
    %p73 = scmp.eq.s32.totalorder %s14, 9
    %p74 = por %p72, %p73
    %p75 = scmp.ne.s32.totalorder %s66, %s67
    %p76 = scmp.eq.s32.totalorder %s14, 0
    %p77 = por %p75, %p76
    %p78 = scmp.ne.s32.totalorder %s66, %s67
    %p79 = scmp.eq.s32.totalorder %s15, 9
    %p80 = por %p78, %p79
    %p82 = scmp.ne.s32.totalorder %s67, %s81
    %p83 = scmp.eq.s32.totalorder %s15, 0
    %p84 = por %p82, %p83
    %s85 = ssub.s32 %s9, %s16
    %p86 = scmp.eq.s32.totalorder %s85, 0
    %s88 = sadd.s32 %s87, 1
    %s89 = scalar_select %p86, %s87, %s88
    %p92 = pneg %p86
    %p93 = scmp.eq.s32.totalorder %s9, 9
    %p94 = por %p92, %p93
    %p95 = scmp.ne.s32.totalorder %s87, %s90
    %p96 = scmp.eq.s32.totalorder %s9, 0
    %p97 = por %p95, %p96
    %p98 = scmp.ne.s32.totalorder %s87, %s90
    %p99 = scmp.eq.s32.totalorder %s14, 9
    %p100 = por %p98, %p99
    %p101 = scmp.ne.s32.totalorder %s90, %s91
    %p102 = scmp.eq.s32.totalorder %s14, 0
    %p103 = por %p101, %p102
    %p104 = scmp.ne.s32.totalorder %s90, %s91
    %p105 = scmp.eq.s32.totalorder %s15, 9
    %p106 = por %p104, %p105
    %p108 = scmp.ne.s32.totalorder %s91, %s107
    %p109 = scmp.eq.s32.totalorder %s15, 0
    %p110 = por %p108, %p109
    %p111 = scmp.le.s32.totalorder 1, %s9
    %p112 = scmp.lt.s32.totalorder %s9, 11
    %p113 = pnand %p111, %p112
    %p114 = pneg %p113
    // Predicated region
    $region9: #{dram_forward.3} parent=5 // pred_check
      _
    $region10: #{dram_forward.3} parent=5 // pred_check_branch
      %116 = sbr.rel (%p113) target = $region12
    $region11: #{dram_forward.3} parent=5 // pred_region
      %s117 = ssub.s32 %s9, 1
      // Predicated region
      $region13: #{dram_forward.3} parent=11 // pred_check
        %p118 = pneg %p56
      $region14: #{dram_forward.3} parent=11 // pred_check_branch
        %120 = sbr.rel (%p118) target = $region16
      $region15: #{dram_forward.3} parent=11 // pred_region
        _
      $region16: #{dram_forward.3} parent=11 // pred_fallthru
        _
      // Predicated region
      $region17: #{dram_forward.3} parent=11 // pred_check
        %p121 = pneg %p77
      $region18: #{dram_forward.3} parent=11 // pred_check_branch
        %123 = sbr.rel (%p121) target = $region20
      $region19: #{dram_forward.3} parent=11 // pred_region
        _
      $region20: #{dram_forward.3} parent=11 // pred_fallthru
        _
    $region12: #{dram_forward.3} parent=5 // pred_fallthru
      _
    %p124 = scmp.lt.s32.totalorder %s9, 10
    // Predicated region
    $region21: #{dram_forward.3} parent=5 // pred_check
      %p125 = pneg %p124
    $region22: #{dram_forward.3} parent=5 // pred_check_branch
      %127 = sbr.rel (%p125) target = $region24
    $region23: #{dram_forward.3} parent=5 // pred_region
      // Predicated region
      $region25: #{dram_forward.3} parent=23 // pred_check
        %p128 = pneg %p29
      $region26: #{dram_forward.3} parent=23 // pred_check_branch
        %130 = sbr.rel (%p128) target = $region28
      $region27: #{dram_forward.3} parent=23 // pred_region
        %s131 = smul.u32 64, %s9
        %p132 = scmp.lt.s32.totalorder %s131, 639
        %s133 = scalar_select %p132, %s131, 639
        %s134 = smul.addr %s133, 8
        %s135 = scalar_lea.vmem %s0, %s134
        %s136 = smul.u32 64, %s9
      $region28: #{dram_forward.3} parent=23 // pred_fallthru
        _
    $region24: #{dram_forward.3} parent=5 // pred_fallthru
      _
    %p137 = scmp.le.s32.totalorder 1, %s9
    %p138 = scmp.lt.s32.totalorder %s9, 11
    %p139 = pnand %p137, %p138
    %p140 = pneg %p139
    // Predicated region
    $region29: #{dram_forward.3} parent=5 // pred_check
      _
    $region30: #{dram_forward.3} parent=5 // pred_check_branch
      %142 = sbr.rel (%p139) target = $region32
    $region31: #{dram_forward.3} parent=5 // pred_region
      %s143 = ssub.s32 %s9, 1
      %s144 = smul.u32 64, %s14
      %p145 = scmp.lt.s32.totalorder %s144, 639
      %s146 = scalar_select %p145, %s144, 639
      %s147 = smul.addr %s146, 8
      %s148 = scalar_lea.vmem %s0, %s147
      %p149 = pneg %p35
      %p150 = pneg %p32
      %p151 = pneg %p56
      %p152 = pneg %p53
      %p153 = pneg %p77
      %p154 = pneg %p74
      %p155 = pneg %p103
      %p156 = pneg %p100
      %s157 = smul.u32 64, %s14
      %p158 = scmp.lt.s32.totalorder %s157, 639
      %s159 = scalar_select %p158, %s157, 639
      %s160 = smul.addr %s159, 8
      %s161 = scalar_lea.vmem %s3, %s160
      %s162 = smul.u32 64, %s14
      %p163 = scmp.lt.s32.totalorder %s162, 639
      %s164 = scalar_select %p163, %s162, 639
      %s165 = smul.addr %s164, 8
      %s166 = scalar_lea.vmem %s0, %s165
      %s167 = smul.u32 64, %s14
      %s168 = smul.u32 64, %s14
      %p169 = scmp.lt.s32.totalorder %s168, 639
      %s170 = scalar_select %p169, %s168, 639
      %s171 = smul.addr %s170, 8
      %s172 = scalar_lea.vmem %s3, %s171
      %s173 = smul.u32 64, %s14
      %v174 = vld [vmem:[%s166] sm:$0xff]
      %v175 = vld [vmem:[%s166 + $0x8] sm:$0xff]
      %v176 = vld [vmem:[%s166 + $0x10] sm:$0xff]
      %v177 = vld [vmem:[%s166 + $0x18] sm:$0xff]
      %v178 = vld [vmem:[%s166 + $0x20] sm:$0xff]
      %v179 = vld [vmem:[%s166 + $0x28] sm:$0xff]
      %v180 = vld [vmem:[%s166 + $0x30] sm:$0xff]
      %v181 = vld [vmem:[%s166 + $0x38] sm:$0xff]
      %v182 = vld [vmem:[%s166 + $0x40] sm:$0xff]
      %v183 = vld [vmem:[%s166 + $0x48] sm:$0xff]
      %v184 = vld [vmem:[%s166 + $0x50] sm:$0xff]
      %v185 = vld [vmem:[%s166 + $0x58] sm:$0xff]
      %v186 = vld [vmem:[%s166 + $0x60] sm:$0xff]
      %v187 = vld [vmem:[%s166 + $0x68] sm:$0xff]
      %v188 = vld [vmem:[%s166 + $0x70] sm:$0xff]
      %v189 = vld [vmem:[%s166 + $0x78] sm:$0xff]
      %v190 = vld [vmem:[%s166 + $0x80] sm:$0xff]
      %v191 = vld [vmem:[%s166 + $0x88] sm:$0xff]
      %v192 = vld [vmem:[%s166 + $0x90] sm:$0xff]
      %v193 = vld [vmem:[%s166 + $0x98] sm:$0xff]
      %v194 = vld [vmem:[%s166 + $0xa0] sm:$0xff]
      %v195 = vld [vmem:[%s166 + $0xa8] sm:$0xff]
      %v196 = vld [vmem:[%s166 + $0xb0] sm:$0xff]
      %v197 = vld [vmem:[%s166 + $0xb8] sm:$0xff]
      %v198 = vld [vmem:[%s166 + $0xc0] sm:$0xff]
      %v199 = vld [vmem:[%s166 + $0xc8] sm:$0xff]
      %v200 = vld [vmem:[%s166 + $0xd0] sm:$0xff]
      %v201 = vld [vmem:[%s166 + $0xd8] sm:$0xff]
      %v202 = vld [vmem:[%s166 + $0xe0] sm:$0xff]
      %v203 = vld [vmem:[%s166 + $0xe8] sm:$0xff]
      %v204 = vld [vmem:[%s166 + $0xf0] sm:$0xff]
      %v205 = vld [vmem:[%s166 + $0xf8] sm:$0xff]
      %v206 = vld [vmem:[%s166 + $0x100] sm:$0xff]
      %v207 = vld [vmem:[%s166 + $0x108] sm:$0xff]
      %v208 = vld [vmem:[%s166 + $0x110] sm:$0xff]
      %v209 = vld [vmem:[%s166 + $0x118] sm:$0xff]
      %v210 = vld [vmem:[%s166 + $0x120] sm:$0xff]
      %v211 = vld [vmem:[%s166 + $0x128] sm:$0xff]
      %v212 = vld [vmem:[%s166 + $0x130] sm:$0xff]
      %v213 = vld [vmem:[%s166 + $0x138] sm:$0xff]
      %v214 = vld [vmem:[%s166 + $0x140] sm:$0xff]
      %v215 = vld [vmem:[%s166 + $0x148] sm:$0xff]
      %v216 = vld [vmem:[%s166 + $0x150] sm:$0xff]
      %v217 = vld [vmem:[%s166 + $0x158] sm:$0xff]
      %v218 = vld [vmem:[%s166 + $0x160] sm:$0xff]
      %v219 = vld [vmem:[%s166 + $0x168] sm:$0xff]
      %v220 = vld [vmem:[%s166 + $0x170] sm:$0xff]
      %v221 = vld [vmem:[%s166 + $0x178] sm:$0xff]
      %v222 = vld [vmem:[%s166 + $0x180] sm:$0xff]
      %v223 = vld [vmem:[%s166 + $0x188] sm:$0xff]
      %v224 = vld [vmem:[%s166 + $0x190] sm:$0xff]
      %v225 = vld [vmem:[%s166 + $0x198] sm:$0xff]
      %v226 = vld [vmem:[%s166 + $0x1a0] sm:$0xff]
      %v227 = vld [vmem:[%s166 + $0x1a8] sm:$0xff]
      %v228 = vld [vmem:[%s166 + $0x1b0] sm:$0xff]
      %v229 = vld [vmem:[%s166 + $0x1b8] sm:$0xff]
      %v230 = vld [vmem:[%s166 + $0x1c0] sm:$0xff]
      %v231 = vld [vmem:[%s166 + $0x1c8] sm:$0xff]
      %v232 = vld [vmem:[%s166 + $0x1d0] sm:$0xff]
      %v233 = vld [vmem:[%s166 + $0x1d8] sm:$0xff]
      %v234 = vld [vmem:[%s166 + $0x1e0] sm:$0xff]
      %v235 = vld [vmem:[%s166 + $0x1e8] sm:$0xff]
      %v236 = vld [vmem:[%s166 + $0x1f0] sm:$0xff]
      %v237 = vld [vmem:[%s166 + $0x1f8] sm:$0xff]
      %v238 = vld [vmem:[%s1] sm:$0xff]
      %v239 = vld [vmem:[%s1 + $0x8] sm:$0xff]
      %v240 = vld [vmem:[%s1 + $0x10] sm:$0xff]
      %v241 = vld [vmem:[%s1 + $0x18] sm:$0xff]
      %v242 = vld [vmem:[%s1 + $0x20] sm:$0xff]
      %v243 = vld [vmem:[%s1 + $0x28] sm:$0xff]
      %v244 = vld [vmem:[%s1 + $0x30] sm:$0xff]
      %v245 = vld [vmem:[%s1 + $0x38] sm:$0xff]
      %v246 = vld [vmem:[%s1 + $0x40] sm:$0xff]
      %v247 = vld [vmem:[%s1 + $0x48] sm:$0x7]
      %v248 = vld [vmem:[%s2] sm:$0x1]
      %v250 = vlaneseq
      %v251 = vshrl.u32 %v250, 7
      %v252 = vsub.s32 0, %v251
      %v253 = vrot.slane %v248, %v252
      %vm255 = vcmask 613376
      %v257 = vsel %vm255, %v174, 0
      %v260 = vsel %vm255, %v175, 0
      %v263 = vsel %vm255, %v176, 0
      %v266 = vsel %vm255, %v177, 0
      %v269 = vsel %vm255, %v178, 0
      %v272 = vsel %vm255, %v179, 0
      %v275 = vsel %vm255, %v180, 0
      %v278 = vsel %vm255, %v181, 0
      %v281 = vsel %vm255, %v182, 0
      %v284 = vsel %vm255, %v183, 0
      %v287 = vsel %vm255, %v184, 0
      %v290 = vsel %vm255, %v185, 0
      %v293 = vsel %vm255, %v186, 0
      %v296 = vsel %vm255, %v187, 0
      %v299 = vsel %vm255, %v188, 0
      %v302 = vsel %vm255, %v189, 0
      %v305 = vsel %vm255, %v190, 0
      %v308 = vsel %vm255, %v191, 0
      %v311 = vsel %vm255, %v192, 0
      %v314 = vsel %vm255, %v193, 0
      %v317 = vsel %vm255, %v194, 0
      %v320 = vsel %vm255, %v195, 0
      %v323 = vsel %vm255, %v196, 0
      %v326 = vsel %vm255, %v197, 0
      %v329 = vsel %vm255, %v198, 0
      %v332 = vsel %vm255, %v199, 0
      %v335 = vsel %vm255, %v200, 0
      %v338 = vsel %vm255, %v201, 0
      %v341 = vsel %vm255, %v202, 0
      %v344 = vsel %vm255, %v203, 0
      %v347 = vsel %vm255, %v204, 0
      %v350 = vsel %vm255, %v205, 0
      %v353 = vsel %vm255, %v206, 0
      %v356 = vsel %vm255, %v207, 0
      %v359 = vsel %vm255, %v208, 0
      %v362 = vsel %vm255, %v209, 0
      %v365 = vsel %vm255, %v210, 0
      %v368 = vsel %vm255, %v211, 0
      %v371 = vsel %vm255, %v212, 0
      %v374 = vsel %vm255, %v213, 0
      %v377 = vsel %vm255, %v214, 0
      %v380 = vsel %vm255, %v215, 0
      %v383 = vsel %vm255, %v216, 0
      %v386 = vsel %vm255, %v217, 0
      %v389 = vsel %vm255, %v218, 0
      %v392 = vsel %vm255, %v219, 0
      %v395 = vsel %vm255, %v220, 0
      %v398 = vsel %vm255, %v221, 0
      %v401 = vsel %vm255, %v222, 0
      %v404 = vsel %vm255, %v223, 0
      %v407 = vsel %vm255, %v224, 0
      %v410 = vsel %vm255, %v225, 0
      %v413 = vsel %vm255, %v226, 0
      %v416 = vsel %vm255, %v227, 0
      %v419 = vsel %vm255, %v228, 0
      %v422 = vsel %vm255, %v229, 0
      %v425 = vsel %vm255, %v230, 0
      %v428 = vsel %vm255, %v231, 0
      %v431 = vsel %vm255, %v232, 0
      %v434 = vsel %vm255, %v233, 0
      %v437 = vsel %vm255, %v234, 0
      %v440 = vsel %vm255, %v235, 0
      %v443 = vsel %vm255, %v236, 0
      %v446 = vsel %vm255, %v237, 0
      %vm448 = vcmask 1042432
      %v450 = vsel %vm448, %v247, 0
      %452 = vmatprep.subr.mxu0 0.0
      %453 = vmatpush1.msra.mxu0 %v238
      %454 = vmatprep.subr.mxu0 0.0
      %455 = vmatpush1.msra.mxu0 %v239
      %456 = vmatprep.subr.mxu0 0.0
      %457 = vmatpush1.msra.mxu0 %v240
      %458 = vmatprep.subr.mxu0 0.0
      %459 = vmatpush1.msra.mxu0 %v241
      %460 = vmatprep.subr.mxu0 0.0
      %461 = vmatpush1.msra.mxu0 %v242
      %462 = vmatprep.subr.mxu0 0.0
      %463 = vmatpush1.msra.mxu0 %v243
      %464 = vmatprep.subr.mxu0 0.0
      %465 = vmatpush1.msra.mxu0 %v244
      %466 = vmatprep.subr.mxu0 0.0
      %467 = vmatpush1.msra.mxu0 %v245
      %468 = vmatprep.subr.mxu0 0.0
      %469 = vmatpush1.msra.mxu0 %v246
      %470 = vmatprep.subr.mxu0 0.0
      %471 = vmatpush1.msra.mxu0 %v450
      %472 = vmatprep.subr.mxu0 0.0
      %473 = vmatpush1.msra.mxu0 0.0
      %474 = vmatprep.subr.mxu0 0.0
      %475 = vmatpush1.msra.mxu0 0.0
      %476 = vmatprep.subr.mxu0 0.0
      %477 = vmatpush1.msra.mxu0 0.0
      %478 = vmatprep.subr.mxu0 0.0
      %479 = vmatpush1.msra.mxu0 0.0
      %480 = vmatprep.subr.mxu0 0.0
      %481 = vmatpush1.msra.mxu0 0.0
      %482 = vmatprep.subr.mxu0 0.0
      %483 = vmatpush1.msra.mxu0 0.0
      %484 = vmatprep.subr.mxu0 0.0
      %485 = vmatpush1.msra.mxu0 0.0
      %486 = vmatprep.subr.mxu0 0.0
      %487 = vmatpush1.msra.mxu0 0.0
      %488 = vmatprep.subr.mxu0 0.0
      %489 = vmatpush1.msra.mxu0 0.0
      %490 = vmatprep.subr.mxu0 0.0
      %491 = vmatpush1.msra.mxu0 0.0
      %492 = vmatprep.subr.mxu0 0.0
      %493 = vmatpush1.msra.mxu0 0.0
      %494 = vmatprep.subr.mxu0 0.0
      %495 = vmatpush1.msra.mxu0 0.0
      %496 = vmatprep.subr.mxu0 0.0
      %497 = vmatpush1.msra.mxu0 0.0
      %498 = vmatprep.subr.mxu0 0.0
      %499 = vmatpush1.msra.mxu0 0.0
      %500 = vmatprep.subr.mxu0 0.0
      %501 = vmatpush1.msra.mxu0 0.0
      %502 = vmatprep.subr.mxu0 0.0
      %503 = vmatpush1.msra.mxu0 0.0
      %504 = vmatprep.subr.mxu0 0.0
      %505 = vmatpush1.msra.mxu0 0.0
      %506 = vmatprep.subr.mxu0 0.0
      %507 = vmatpush1.msra.mxu0 0.0
      %508 = vmatprep.subr.mxu0 0.0
      %509 = vmatpush1.msra.mxu0 0.0
      %510 = vmatprep.subr.mxu0 0.0
      %511 = vmatpush1.msra.mxu0 0.0
      %512 = vmatprep.subr.mxu0 0.0
      %513 = vmatpush1.msra.mxu0 0.0
      %514 = vmatprep.subr.mxu0 0.0
      %515 = vmatpush1.msra.mxu0 0.0
      %516 = vmatprep.mubr.f32.mxu0 0.0
      %517 = vmatmul.mubr.f32.gmra.mrb[0].mxu0 %v257
      %v518 = vpop.f32.mrb[0].mxu0
      %v519 = vadd.f32 %v253, %v518
      %v520 = vpop.f32.mrb[0].mxu0
      %521 = vmatprep.mubr.f32.mxu0 0.0
      %522 = vmatmul.mubr.f32.gmra.mrb[0].mxu0 %v260
      %v523 = vpop.f32.mrb[0].mxu0
      %v524 = vadd.f32 %v253, %v523
      %v525 = vpop.f32.mrb[0].mxu0
      %526 = vmatprep.mubr.f32.mxu0 0.0
      %527 = vmatmul.mubr.f32.gmra.mrb[0].mxu0 %v263
      %v528 = vpop.f32.mrb[0].mxu0
      %v529 = vadd.f32 %v253, %v528
      %v530 = vpop.f32.mrb[0].mxu0
      %531 = vmatprep.mubr.f32.mxu0 0.0
      %532 = vmatmul.mubr.f32.gmra.mrb[0].mxu0 %v266
      %v533 = vpop.f32.mrb[0].mxu0
      %v534 = vadd.f32 %v253, %v533
      %v535 = vpop.f32.mrb[0].mxu0
      %536 = vmatprep.mubr.f32.mxu0 0.0
      %537 = vmatmul.mubr.f32.gmra.mrb[0].mxu0 %v269
      %v538 = vpop.f32.mrb[0].mxu0
      %v539 = vadd.f32 %v253, %v538
      %v540 = vpop.f32.mrb[0].mxu0
      %541 = vmatprep.mubr.f32.mxu0 0.0
      %542 = vmatmul.mubr.f32.gmra.mrb[0].mxu0 %v272
      %v543 = vpop.f32.mrb[0].mxu0
      %v544 = vadd.f32 %v253, %v543
      %v545 = vpop.f32.mrb[0].mxu0
      %546 = vmatprep.mubr.f32.mxu0 0.0
      %547 = vmatmul.mubr.f32.gmra.mrb[0].mxu0 %v275
      %v548 = vpop.f32.mrb[0].mxu0
      %v549 = vadd.f32 %v253, %v548
      %v550 = vpop.f32.mrb[0].mxu0
      %551 = vmatprep.mubr.f32.mxu0 0.0
      %552 = vmatmul.mubr.f32.gmra.mrb[0].mxu0 %v278
      %v553 = vpop.f32.mrb[0].mxu0
      %v554 = vadd.f32 %v253, %v553
      %v555 = vpop.f32.mrb[0].mxu0
      %556 = vmatprep.mubr.f32.mxu0 0.0
      %557 = vmatmul.mubr.f32.gmra.mrb[0].mxu0 %v281
      %v558 = vpop.f32.mrb[0].mxu0
      %v559 = vadd.f32 %v253, %v558
      %v560 = vpop.f32.mrb[0].mxu0
      %561 = vmatprep.mubr.f32.mxu0 0.0
      %562 = vmatmul.mubr.f32.gmra.mrb[0].mxu0 %v284
      %v563 = vpop.f32.mrb[0].mxu0
      %v564 = vadd.f32 %v253, %v563
      %v565 = vpop.f32.mrb[0].mxu0
      %566 = vmatprep.mubr.f32.mxu0 0.0
      %567 = vmatmul.mubr.f32.gmra.mrb[0].mxu0 %v287
      %v568 = vpop.f32.mrb[0].mxu0
      %v569 = vadd.f32 %v253, %v568
      %v570 = vpop.f32.mrb[0].mxu0
      %571 = vmatprep.mubr.f32.mxu0 0.0
      %572 = vmatmul.mubr.f32.gmra.mrb[0].mxu0 %v290
      %v573 = vpop.f32.mrb[0].mxu0
      %v574 = vadd.f32 %v253, %v573
      %v575 = vpop.f32.mrb[0].mxu0
      %576 = vmatprep.mubr.f32.mxu0 0.0
      %577 = vmatmul.mubr.f32.gmra.mrb[0].mxu0 %v293
      %v578 = vpop.f32.mrb[0].mxu0
      %v579 = vadd.f32 %v253, %v578
      %v580 = vpop.f32.mrb[0].mxu0
      %581 = vmatprep.mubr.f32.mxu0 0.0
      %582 = vmatmul.mubr.f32.gmra.mrb[0].mxu0 %v296
      %v583 = vpop.f32.mrb[0].mxu0
      %v584 = vadd.f32 %v253, %v583
      %v585 = vpop.f32.mrb[0].mxu0
      %586 = vmatprep.mubr.f32.mxu0 0.0
      %587 = vmatmul.mubr.f32.gmra.mrb[0].mxu0 %v299
      %v588 = vpop.f32.mrb[0].mxu0
      %v589 = vadd.f32 %v253, %v588
      %v590 = vpop.f32.mrb[0].mxu0
      %591 = vmatprep.mubr.f32.mxu0 0.0
      %592 = vmatmul.mubr.f32.gmra.mrb[0].mxu0 %v302
      %v593 = vpop.f32.mrb[0].mxu0
      %v594 = vadd.f32 %v253, %v593
      %v595 = vpop.f32.mrb[0].mxu0
      %596 = vmatprep.mubr.f32.mxu0 0.0
      %597 = vmatmul.mubr.f32.gmra.mrb[0].mxu0 %v305
      %v598 = vpop.f32.mrb[0].mxu0
      %v599 = vadd.f32 %v253, %v598
      %v600 = vpop.f32.mrb[0].mxu0
      %601 = vmatprep.mubr.f32.mxu0 0.0
      %602 = vmatmul.mubr.f32.gmra.mrb[0].mxu0 %v308
      %v603 = vpop.f32.mrb[0].mxu0
      %v604 = vadd.f32 %v253, %v603
      %v605 = vpop.f32.mrb[0].mxu0
      %606 = vmatprep.mubr.f32.mxu0 0.0
      %607 = vmatmul.mubr.f32.gmra.mrb[0].mxu0 %v311
      %v608 = vpop.f32.mrb[0].mxu0
      %v609 = vadd.f32 %v253, %v608
      %v610 = vpop.f32.mrb[0].mxu0
      %611 = vmatprep.mubr.f32.mxu0 0.0
      %612 = vmatmul.mubr.f32.gmra.mrb[0].mxu0 %v314
      %v613 = vpop.f32.mrb[0].mxu0
      %v614 = vadd.f32 %v253, %v613
      %v615 = vpop.f32.mrb[0].mxu0
      %616 = vmatprep.mubr.f32.mxu0 0.0
      %617 = vmatmul.mubr.f32.gmra.mrb[0].mxu0 %v317
      %v618 = vpop.f32.mrb[0].mxu0
      %v619 = vadd.f32 %v253, %v618
      %v620 = vpop.f32.mrb[0].mxu0
      %621 = vmatprep.mubr.f32.mxu0 0.0
      %622 = vmatmul.mubr.f32.gmra.mrb[0].mxu0 %v320
      %v623 = vpop.f32.mrb[0].mxu0
      %v624 = vadd.f32 %v253, %v623
      %v625 = vpop.f32.mrb[0].mxu0
      %626 = vmatprep.mubr.f32.mxu0 0.0
      %627 = vmatmul.mubr.f32.gmra.mrb[0].mxu0 %v323
      %v628 = vpop.f32.mrb[0].mxu0
      %v629 = vadd.f32 %v253, %v628
      %v630 = vpop.f32.mrb[0].mxu0
      %631 = vmatprep.mubr.f32.mxu0 0.0
      %632 = vmatmul.mubr.f32.gmra.mrb[0].mxu0 %v326
      %v633 = vpop.f32.mrb[0].mxu0
      %v634 = vadd.f32 %v253, %v633
      %v635 = vpop.f32.mrb[0].mxu0
      %636 = vmatprep.mubr.f32.mxu0 0.0
      %637 = vmatmul.mubr.f32.gmra.mrb[0].mxu0 %v329
      %v638 = vpop.f32.mrb[0].mxu0
      %v639 = vadd.f32 %v253, %v638
      %v640 = vpop.f32.mrb[0].mxu0
      %641 = vmatprep.mubr.f32.mxu0 0.0
      %642 = vmatmul.mubr.f32.gmra.mrb[0].mxu0 %v332
      %v643 = vpop.f32.mrb[0].mxu0
      %v644 = vadd.f32 %v253, %v643
      %v645 = vpop.f32.mrb[0].mxu0
      %646 = vmatprep.mubr.f32.mxu0 0.0
      %647 = vmatmul.mubr.f32.gmra.mrb[0].mxu0 %v335
      %v648 = vpop.f32.mrb[0].mxu0
      %v649 = vadd.f32 %v253, %v648
      %v650 = vpop.f32.mrb[0].mxu0
      %651 = vmatprep.mubr.f32.mxu0 0.0
      %652 = vmatmul.mubr.f32.gmra.mrb[0].mxu0 %v338
      %v653 = vpop.f32.mrb[0].mxu0
      %v654 = vadd.f32 %v253, %v653
      %v655 = vpop.f32.mrb[0].mxu0
      %656 = vmatprep.mubr.f32.mxu0 0.0
      %657 = vmatmul.mubr.f32.gmra.mrb[0].mxu0 %v341
      %v658 = vpop.f32.mrb[0].mxu0
      %v659 = vadd.f32 %v253, %v658
      %v660 = vpop.f32.mrb[0].mxu0
      %661 = vmatprep.mubr.f32.mxu0 0.0
      %662 = vmatmul.mubr.f32.gmra.mrb[0].mxu0 %v344
      %v663 = vpop.f32.mrb[0].mxu0
      %v664 = vadd.f32 %v253, %v663
      %v665 = vpop.f32.mrb[0].mxu0
      %666 = vmatprep.mubr.f32.mxu0 0.0
      %667 = vmatmul.mubr.f32.gmra.mrb[0].mxu0 %v347
      %v668 = vpop.f32.mrb[0].mxu0
      %v669 = vadd.f32 %v253, %v668
      %v670 = vpop.f32.mrb[0].mxu0
      %671 = vmatprep.mubr.f32.mxu0 0.0
      %672 = vmatmul.mubr.f32.gmra.mrb[0].mxu0 %v350
      %v673 = vpop.f32.mrb[0].mxu0
      %v674 = vadd.f32 %v253, %v673
      %v675 = vpop.f32.mrb[0].mxu0
      %676 = vmatprep.mubr.f32.mxu0 0.0
      %677 = vmatmul.mubr.f32.gmra.mrb[0].mxu0 %v353
      %v678 = vpop.f32.mrb[0].mxu0
      %v679 = vadd.f32 %v253, %v678
      %v680 = vpop.f32.mrb[0].mxu0
      %681 = vmatprep.mubr.f32.mxu0 0.0
      %682 = vmatmul.mubr.f32.gmra.mrb[0].mxu0 %v356
      %v683 = vpop.f32.mrb[0].mxu0
      %v684 = vadd.f32 %v253, %v683
      %v685 = vpop.f32.mrb[0].mxu0
      %686 = vmatprep.mubr.f32.mxu0 0.0
      %687 = vmatmul.mubr.f32.gmra.mrb[0].mxu0 %v359
      %v688 = vpop.f32.mrb[0].mxu0
      %v689 = vadd.f32 %v253, %v688
      %v690 = vpop.f32.mrb[0].mxu0
      %691 = vmatprep.mubr.f32.mxu0 0.0
      %692 = vmatmul.mubr.f32.gmra.mrb[0].mxu0 %v362
      %v693 = vpop.f32.mrb[0].mxu0
      %v694 = vadd.f32 %v253, %v693
      %v695 = vpop.f32.mrb[0].mxu0
      %696 = vmatprep.mubr.f32.mxu0 0.0
      %697 = vmatmul.mubr.f32.gmra.mrb[0].mxu0 %v365
      %v698 = vpop.f32.mrb[0].mxu0
      %v699 = vadd.f32 %v253, %v698
      %v700 = vpop.f32.mrb[0].mxu0
      %701 = vmatprep.mubr.f32.mxu0 0.0
      %702 = vmatmul.mubr.f32.gmra.mrb[0].mxu0 %v368
      %v703 = vpop.f32.mrb[0].mxu0
      %v704 = vadd.f32 %v253, %v703
      %v705 = vpop.f32.mrb[0].mxu0
      %706 = vmatprep.mubr.f32.mxu0 0.0
      %707 = vmatmul.mubr.f32.gmra.mrb[0].mxu0 %v371
      %v708 = vpop.f32.mrb[0].mxu0
      %v709 = vadd.f32 %v253, %v708
      %v710 = vpop.f32.mrb[0].mxu0
      %711 = vmatprep.mubr.f32.mxu0 0.0
      %712 = vmatmul.mubr.f32.gmra.mrb[0].mxu0 %v374
      %v713 = vpop.f32.mrb[0].mxu0
      %v714 = vadd.f32 %v253, %v713
      %v715 = vpop.f32.mrb[0].mxu0
      %716 = vmatprep.mubr.f32.mxu0 0.0
      %717 = vmatmul.mubr.f32.gmra.mrb[0].mxu0 %v377
      %v718 = vpop.f32.mrb[0].mxu0
      %v719 = vadd.f32 %v253, %v718
      %v720 = vpop.f32.mrb[0].mxu0
      %721 = vmatprep.mubr.f32.mxu0 0.0
      %722 = vmatmul.mubr.f32.gmra.mrb[0].mxu0 %v380
      %v723 = vpop.f32.mrb[0].mxu0
      %v724 = vadd.f32 %v253, %v723
      %v725 = vpop.f32.mrb[0].mxu0
      %726 = vmatprep.mubr.f32.mxu0 0.0
      %727 = vmatmul.mubr.f32.gmra.mrb[0].mxu0 %v383
      %v728 = vpop.f32.mrb[0].mxu0
      %v729 = vadd.f32 %v253, %v728
      %v730 = vpop.f32.mrb[0].mxu0
      %731 = vmatprep.mubr.f32.mxu0 0.0
      %732 = vmatmul.mubr.f32.gmra.mrb[0].mxu0 %v386
      %v733 = vpop.f32.mrb[0].mxu0
      %v734 = vadd.f32 %v253, %v733
      %v735 = vpop.f32.mrb[0].mxu0
      %736 = vmatprep.mubr.f32.mxu0 0.0
      %737 = vmatmul.mubr.f32.gmra.mrb[0].mxu0 %v389
      %v738 = vpop.f32.mrb[0].mxu0
      %v739 = vadd.f32 %v253, %v738
      %v740 = vpop.f32.mrb[0].mxu0
      %741 = vmatprep.mubr.f32.mxu0 0.0
      %742 = vmatmul.mubr.f32.gmra.mrb[0].mxu0 %v392
      %v743 = vpop.f32.mrb[0].mxu0
      %v744 = vadd.f32 %v253, %v743
      %v745 = vpop.f32.mrb[0].mxu0
      %746 = vmatprep.mubr.f32.mxu0 0.0
      %747 = vmatmul.mubr.f32.gmra.mrb[0].mxu0 %v395
      %v748 = vpop.f32.mrb[0].mxu0
      %v749 = vadd.f32 %v253, %v748
      %v750 = vpop.f32.mrb[0].mxu0
      %751 = vmatprep.mubr.f32.mxu0 0.0
      %752 = vmatmul.mubr.f32.gmra.mrb[0].mxu0 %v398
      %v753 = vpop.f32.mrb[0].mxu0
      %v754 = vadd.f32 %v253, %v753
      %v755 = vpop.f32.mrb[0].mxu0
      %756 = vmatprep.mubr.f32.mxu0 0.0
      %757 = vmatmul.mubr.f32.gmra.mrb[0].mxu0 %v401
      %v758 = vpop.f32.mrb[0].mxu0
      %v759 = vadd.f32 %v253, %v758
      %v760 = vpop.f32.mrb[0].mxu0
      %761 = vmatprep.mubr.f32.mxu0 0.0
      %762 = vmatmul.mubr.f32.gmra.mrb[0].mxu0 %v404
      %v763 = vpop.f32.mrb[0].mxu0
      %v764 = vadd.f32 %v253, %v763
      %v765 = vpop.f32.mrb[0].mxu0
      %766 = vmatprep.mubr.f32.mxu0 0.0
      %767 = vmatmul.mubr.f32.gmra.mrb[0].mxu0 %v407
      %v768 = vpop.f32.mrb[0].mxu0
      %v769 = vadd.f32 %v253, %v768
      %v770 = vpop.f32.mrb[0].mxu0
      %771 = vmatprep.mubr.f32.mxu0 0.0
      %772 = vmatmul.mubr.f32.gmra.mrb[0].mxu0 %v410
      %v773 = vpop.f32.mrb[0].mxu0
      %v774 = vadd.f32 %v253, %v773
      %v775 = vpop.f32.mrb[0].mxu0
      %776 = vmatprep.mubr.f32.mxu0 0.0
      %777 = vmatmul.mubr.f32.gmra.mrb[0].mxu0 %v413
      %v778 = vpop.f32.mrb[0].mxu0
      %v779 = vadd.f32 %v253, %v778
      %v780 = vpop.f32.mrb[0].mxu0
      %781 = vmatprep.mubr.f32.mxu0 0.0
      %782 = vmatmul.mubr.f32.gmra.mrb[0].mxu0 %v416
      %v783 = vpop.f32.mrb[0].mxu0
      %v784 = vadd.f32 %v253, %v783
      %v785 = vpop.f32.mrb[0].mxu0
      %786 = vmatprep.mubr.f32.mxu0 0.0
      %787 = vmatmul.mubr.f32.gmra.mrb[0].mxu0 %v419
      %v788 = vpop.f32.mrb[0].mxu0
      %v789 = vadd.f32 %v253, %v788
      %v790 = vpop.f32.mrb[0].mxu0
      %791 = vmatprep.mubr.f32.mxu0 0.0
      %792 = vmatmul.mubr.f32.gmra.mrb[0].mxu0 %v422
      %v793 = vpop.f32.mrb[0].mxu0
      %v794 = vadd.f32 %v253, %v793
      %v795 = vpop.f32.mrb[0].mxu0
      %796 = vmatprep.mubr.f32.mxu0 0.0
      %797 = vmatmul.mubr.f32.gmra.mrb[0].mxu0 %v425
      %v798 = vpop.f32.mrb[0].mxu0
      %v799 = vadd.f32 %v253, %v798
      %v800 = vpop.f32.mrb[0].mxu0
      %801 = vmatprep.mubr.f32.mxu0 0.0
      %802 = vmatmul.mubr.f32.gmra.mrb[0].mxu0 %v428
      %v803 = vpop.f32.mrb[0].mxu0
      %v804 = vadd.f32 %v253, %v803
      %v805 = vpop.f32.mrb[0].mxu0
      %806 = vmatprep.mubr.f32.mxu0 0.0
      %807 = vmatmul.mubr.f32.gmra.mrb[0].mxu0 %v431
      %v808 = vpop.f32.mrb[0].mxu0
      %v809 = vadd.f32 %v253, %v808
      %v810 = vpop.f32.mrb[0].mxu0
      %811 = vmatprep.mubr.f32.mxu0 0.0
      %812 = vmatmul.mubr.f32.gmra.mrb[0].mxu0 %v434
      %v813 = vpop.f32.mrb[0].mxu0
      %v814 = vadd.f32 %v253, %v813
      %v815 = vpop.f32.mrb[0].mxu0
      %816 = vmatprep.mubr.f32.mxu0 0.0
      %817 = vmatmul.mubr.f32.gmra.mrb[0].mxu0 %v437
      %v818 = vpop.f32.mrb[0].mxu0
      %v819 = vadd.f32 %v253, %v818
      %v820 = vpop.f32.mrb[0].mxu0
      %821 = vmatprep.mubr.f32.mxu0 0.0
      %822 = vmatmul.mubr.f32.gmra.mrb[0].mxu0 %v440
      %v823 = vpop.f32.mrb[0].mxu0
      %v824 = vadd.f32 %v253, %v823
      %v825 = vpop.f32.mrb[0].mxu0
      %826 = vmatprep.mubr.f32.mxu0 0.0
      %827 = vmatmul.mubr.f32.gmra.mrb[0].mxu0 %v443
      %v828 = vpop.f32.mrb[0].mxu0
      %v829 = vadd.f32 %v253, %v828
      %v830 = vpop.f32.mrb[0].mxu0
      %831 = vmatprep.mubr.f32.mxu0 0.0
      %832 = vmatmul.mubr.f32.gmra.mrb[0].mxu0 %v446
      %v833 = vpop.f32.mrb[0].mxu0
      %v834 = vadd.f32 %v253, %v833
      %v835 = vpop.f32.mrb[0].mxu0
      %836 = vdwg.mxu0
      %v837 = vmax.f32 %v519, 0.0
      %v838 = vmax.f32 %v524, 0.0
      %v839 = vmax.f32 %v529, 0.0
      %v840 = vmax.f32 %v534, 0.0
      %v841 = vmax.f32 %v539, 0.0
      %v842 = vmax.f32 %v544, 0.0
      %v843 = vmax.f32 %v549, 0.0
      %v844 = vmax.f32 %v554, 0.0
      %v845 = vmax.f32 %v559, 0.0
      %v846 = vmax.f32 %v564, 0.0
      %v847 = vmax.f32 %v569, 0.0
      %v848 = vmax.f32 %v574, 0.0
      %v849 = vmax.f32 %v579, 0.0
      %v850 = vmax.f32 %v584, 0.0
      %v851 = vmax.f32 %v589, 0.0
      %v852 = vmax.f32 %v594, 0.0
      %v853 = vmax.f32 %v599, 0.0
      %v854 = vmax.f32 %v604, 0.0
      %v855 = vmax.f32 %v609, 0.0
      %v856 = vmax.f32 %v614, 0.0
      %v857 = vmax.f32 %v619, 0.0
      %v858 = vmax.f32 %v624, 0.0
      %v859 = vmax.f32 %v629, 0.0
      %v860 = vmax.f32 %v634, 0.0
      %v861 = vmax.f32 %v639, 0.0
      %v862 = vmax.f32 %v644, 0.0
      %v863 = vmax.f32 %v649, 0.0
      %v864 = vmax.f32 %v654, 0.0
      %v865 = vmax.f32 %v659, 0.0
      %v866 = vmax.f32 %v664, 0.0
      %v867 = vmax.f32 %v669, 0.0
      %v868 = vmax.f32 %v674, 0.0
      %v869 = vmax.f32 %v679, 0.0
      %v870 = vmax.f32 %v684, 0.0
      %v871 = vmax.f32 %v689, 0.0
      %v872 = vmax.f32 %v694, 0.0
      %v873 = vmax.f32 %v699, 0.0
      %v874 = vmax.f32 %v704, 0.0
      %v875 = vmax.f32 %v709, 0.0
      %v876 = vmax.f32 %v714, 0.0
      %v877 = vmax.f32 %v719, 0.0
      %v878 = vmax.f32 %v724, 0.0
      %v879 = vmax.f32 %v729, 0.0
      %v880 = vmax.f32 %v734, 0.0
      %v881 = vmax.f32 %v739, 0.0
      %v882 = vmax.f32 %v744, 0.0
      %v883 = vmax.f32 %v749, 0.0
      %v884 = vmax.f32 %v754, 0.0
      %v885 = vmax.f32 %v759, 0.0
      %v886 = vmax.f32 %v764, 0.0
      %v887 = vmax.f32 %v769, 0.0
      %v888 = vmax.f32 %v774, 0.0
      %v889 = vmax.f32 %v779, 0.0
      %v890 = vmax.f32 %v784, 0.0
      %v891 = vmax.f32 %v789, 0.0
      %v892 = vmax.f32 %v794, 0.0
      %v893 = vmax.f32 %v799, 0.0
      %v894 = vmax.f32 %v804, 0.0
      %v895 = vmax.f32 %v809, 0.0
      %v896 = vmax.f32 %v814, 0.0
      %v897 = vmax.f32 %v819, 0.0
      %v898 = vmax.f32 %v824, 0.0
      %v899 = vmax.f32 %v829, 0.0
      %v900 = vmax.f32 %v834, 0.0
      %vm901 = vcmask 130048
      %902 = vst.msk [vmem:[%s172] sm:$0xff] %vm901, %v837
      %903 = vst.msk [vmem:[%s172 + $0x8] sm:$0xff] %vm901, %v838
      %904 = vst.msk [vmem:[%s172 + $0x10] sm:$0xff] %vm901, %v839
      %905 = vst.msk [vmem:[%s172 + $0x18] sm:$0xff] %vm901, %v840
      %906 = vst.msk [vmem:[%s172 + $0x20] sm:$0xff] %vm901, %v841
      %907 = vst.msk [vmem:[%s172 + $0x28] sm:$0xff] %vm901, %v842
      %908 = vst.msk [vmem:[%s172 + $0x30] sm:$0xff] %vm901, %v843
      %909 = vst.msk [vmem:[%s172 + $0x38] sm:$0xff] %vm901, %v844
      %910 = vst.msk [vmem:[%s172 + $0x40] sm:$0xff] %vm901, %v845
      %911 = vst.msk [vmem:[%s172 + $0x48] sm:$0xff] %vm901, %v846
      %912 = vst.msk [vmem:[%s172 + $0x50] sm:$0xff] %vm901, %v847
      %913 = vst.msk [vmem:[%s172 + $0x58] sm:$0xff] %vm901, %v848
      %914 = vst.msk [vmem:[%s172 + $0x60] sm:$0xff] %vm901, %v849
      %915 = vst.msk [vmem:[%s172 + $0x68] sm:$0xff] %vm901, %v850
      %916 = vst.msk [vmem:[%s172 + $0x70] sm:$0xff] %vm901, %v851
      %917 = vst.msk [vmem:[%s172 + $0x78] sm:$0xff] %vm901, %v852
      %918 = vst.msk [vmem:[%s172 + $0x80] sm:$0xff] %vm901, %v853
      %919 = vst.msk [vmem:[%s172 + $0x88] sm:$0xff] %vm901, %v854
      %920 = vst.msk [vmem:[%s172 + $0x90] sm:$0xff] %vm901, %v855
      %921 = vst.msk [vmem:[%s172 + $0x98] sm:$0xff] %vm901, %v856
      %922 = vst.msk [vmem:[%s172 + $0xa0] sm:$0xff] %vm901, %v857
      %923 = vst.msk [vmem:[%s172 + $0xa8] sm:$0xff] %vm901, %v858
      %924 = vst.msk [vmem:[%s172 + $0xb0] sm:$0xff] %vm901, %v859
      %925 = vst.msk [vmem:[%s172 + $0xb8] sm:$0xff] %vm901, %v860
      %926 = vst.msk [vmem:[%s172 + $0xc0] sm:$0xff] %vm901, %v861
      %927 = vst.msk [vmem:[%s172 + $0xc8] sm:$0xff] %vm901, %v862
      %928 = vst.msk [vmem:[%s172 + $0xd0] sm:$0xff] %vm901, %v863
      %929 = vst.msk [vmem:[%s172 + $0xd8] sm:$0xff] %vm901, %v864
      %930 = vst.msk [vmem:[%s172 + $0xe0] sm:$0xff] %vm901, %v865
      %931 = vst.msk [vmem:[%s172 + $0xe8] sm:$0xff] %vm901, %v866
      %932 = vst.msk [vmem:[%s172 + $0xf0] sm:$0xff] %vm901, %v867
      %933 = vst.msk [vmem:[%s172 + $0xf8] sm:$0xff] %vm901, %v868
      %934 = vst.msk [vmem:[%s172 + $0x100] sm:$0xff] %vm901, %v869
      %935 = vst.msk [vmem:[%s172 + $0x108] sm:$0xff] %vm901, %v870
      %936 = vst.msk [vmem:[%s172 + $0x110] sm:$0xff] %vm901, %v871
      %937 = vst.msk [vmem:[%s172 + $0x118] sm:$0xff] %vm901, %v872
      %938 = vst.msk [vmem:[%s172 + $0x120] sm:$0xff] %vm901, %v873
      %939 = vst.msk [vmem:[%s172 + $0x128] sm:$0xff] %vm901, %v874
      %940 = vst.msk [vmem:[%s172 + $0x130] sm:$0xff] %vm901, %v875
      %941 = vst.msk [vmem:[%s172 + $0x138] sm:$0xff] %vm901, %v876
      %942 = vst.msk [vmem:[%s172 + $0x140] sm:$0xff] %vm901, %v877
      %943 = vst.msk [vmem:[%s172 + $0x148] sm:$0xff] %vm901, %v878
      %944 = vst.msk [vmem:[%s172 + $0x150] sm:$0xff] %vm901, %v879
      %945 = vst.msk [vmem:[%s172 + $0x158] sm:$0xff] %vm901, %v880
      %946 = vst.msk [vmem:[%s172 + $0x160] sm:$0xff] %vm901, %v881
      %947 = vst.msk [vmem:[%s172 + $0x168] sm:$0xff] %vm901, %v882
      %948 = vst.msk [vmem:[%s172 + $0x170] sm:$0xff] %vm901, %v883
      %949 = vst.msk [vmem:[%s172 + $0x178] sm:$0xff] %vm901, %v884
      %950 = vst.msk [vmem:[%s172 + $0x180] sm:$0xff] %vm901, %v885
      %951 = vst.msk [vmem:[%s172 + $0x188] sm:$0xff] %vm901, %v886
      %952 = vst.msk [vmem:[%s172 + $0x190] sm:$0xff] %vm901, %v887
      %953 = vst.msk [vmem:[%s172 + $0x198] sm:$0xff] %vm901, %v888
      %954 = vst.msk [vmem:[%s172 + $0x1a0] sm:$0xff] %vm901, %v889
      %955 = vst.msk [vmem:[%s172 + $0x1a8] sm:$0xff] %vm901, %v890
      %956 = vst.msk [vmem:[%s172 + $0x1b0] sm:$0xff] %vm901, %v891
      %957 = vst.msk [vmem:[%s172 + $0x1b8] sm:$0xff] %vm901, %v892
      %958 = vst.msk [vmem:[%s172 + $0x1c0] sm:$0xff] %vm901, %v893
      %959 = vst.msk [vmem:[%s172 + $0x1c8] sm:$0xff] %vm901, %v894
      %960 = vst.msk [vmem:[%s172 + $0x1d0] sm:$0xff] %vm901, %v895
      %961 = vst.msk [vmem:[%s172 + $0x1d8] sm:$0xff] %vm901, %v896
      %962 = vst.msk [vmem:[%s172 + $0x1e0] sm:$0xff] %vm901, %v897
      %963 = vst.msk [vmem:[%s172 + $0x1e8] sm:$0xff] %vm901, %v898
      %964 = vst.msk [vmem:[%s172 + $0x1f0] sm:$0xff] %vm901, %v899
      %965 = vst.msk [vmem:[%s172 + $0x1f8] sm:$0xff] %vm901, %v900
      %s966 = smul.u32 64, %s14
      %p967 = scmp.lt.s32.totalorder %s966, 639
      %s968 = scalar_select %p967, %s966, 639
      %s969 = smul.addr %s968, 8
      %s970 = scalar_lea.vmem %s3, %s969
      // Predicated region
      $region33: #{dram_forward.3} parent=31 // pred_check
        %p971 = pneg %p100
      $region34: #{dram_forward.3} parent=31 // pred_check_branch
        %973 = sbr.rel (%p971) target = $region36
      $region35: #{dram_forward.3} parent=31 // pred_region
        %s974 = smul.u32 64, %s14
      $region36: #{dram_forward.3} parent=31 // pred_fallthru
        _
    $region32: #{dram_forward.3} parent=5 // pred_fallthru
      _
    %p975 = scmp.le.s32.totalorder 2, %s9
    // Predicated region
    $region37: #{dram_forward.3} parent=5 // pred_check
      %p976 = pneg %p975
    $region38: #{dram_forward.3} parent=5 // pred_check_branch
      %978 = sbr.rel (%p976) target = $region40
    $region39: #{dram_forward.3} parent=5 // pred_region
      %s979 = ssub.s32 %s9, 2
      // Predicated region
      $region41: #{dram_forward.3} parent=39 // pred_check
        %p980 = pneg %p106
      $region42: #{dram_forward.3} parent=39 // pred_check_branch
        %982 = sbr.rel (%p980) target = $region44
      $region43: #{dram_forward.3} parent=39 // pred_region
        %s983 = smul.u32 64, %s15
        %p984 = scmp.lt.s32.totalorder %s983, 639
        %s985 = scalar_select %p984, %s983, 639
        %s986 = smul.addr %s985, 8
        %s987 = scalar_lea.vmem %s3, %s986
      $region44: #{dram_forward.3} parent=39 // pred_fallthru
        _
    $region40: #{dram_forward.3} parent=5 // pred_fallthru
      _
  $region6: #{dram_forward.3} parent=0 // loop_footer
    %s13 = sadd.s32 1, %s9
  $region7: #{dram_forward.3} parent=0 // loop_footer_branch
    %8 = sbr.rel target = $region3
  $region8: #{dram_forward.3} parent=0 // loop_exit
    _

// kernel: dram_forward.4
$region0: #{dram_forward.4}
  #allocation0 [shape = 'u32[]', space=smem, size = 0x4, offset = 0x4, fixed_abs, tag = 'smem constant byte address 0x4 - core index']
  #allocation1 [shape = 'u32[144,128]{1,0:T(1,128)}', space=vmem, size = 0x12000, scoped, tag = 'internal scratch']
  %s0 = inlined_call_operand.vmem [shape: f32[1536,144], index: 0, kind: input, shape index: {}]
  %s1 = inlined_call_operand.vmem [shape: f32[144,32], index: 1, kind: input, shape index: {}]
  %s2 = inlined_call_operand.vmem [shape: f32[1,32], index: 2, kind: input, shape index: {}]
  %s3 = inlined_call_operand.vmem [shape: f32[1536,32], index: 3, kind: output, shape index: {}]
  %s4 = sld [smem:[#allocation0]]
  $region45: #{dram_forward.4} parent=0
    _
  %s6 = ssub.s32 1, %s4
  %s7 = scalar_select 0, %s6, %s4
  loop: start=0, step=1, limit=5
  $region2: #{dram_forward.4} parent=0 // loop_pre_header
    _
  $region3: #{dram_forward.4} parent=0 // loop_header
    %s9 = sphi 0, %s13
    %p10 = scmp.ge.s32.totalorder %s9, 5
    %s19 = sphi 0, %s21
    %s22 = sphi 0, %s19
    %s23 = sphi 0, %s22
    %s39 = sphi 0, %s23
    %s43 = sphi 0, %s43
    %s45 = sphi 0, %s43
    %s46 = sphi 0, %s45
    %s60 = sphi 0, %s46
    %s64 = sphi 0, %s64
    %s66 = sphi 0, %s64
    %s67 = sphi 0, %s66
    %s81 = sphi 0, %s67
    %s87 = sphi 0, %s89
    %s90 = sphi 0, %s87
    %s91 = sphi 0, %s90
    %s107 = sphi 0, %s91
  $region4: #{dram_forward.4} parent=0 // loop_header_branch
    %12 = sbr.rel (%p10) target = $region8
  $region5: #{dram_forward.4} parent=0 // loop_body
    %s14 = ssub.s32 %s9, 1
    %s15 = ssub.s32 %s9, 2
    %s16 = sadd.s32 %s9, 1
    %s17 = ssub.s32 %s9, %s16
    %p18 = scmp.eq.s32.totalorder %s17, 0
    %s20 = sadd.s32 %s19, 1
    %s21 = scalar_select %p18, %s19, %s20
    %p24 = pneg %p18
    %p25 = scmp.eq.s32.totalorder %s9, 2
    %p26 = por %p24, %p25
    %p27 = scmp.ne.s32.totalorder %s19, %s22
    %p28 = scmp.eq.s32.totalorder %s9, 0
    %p29 = por %p27, %p28
    %p30 = scmp.ne.s32.totalorder %s19, %s22
    %p31 = scmp.eq.s32.totalorder %s14, 2
    %p32 = por %p30, %p31
    %p33 = scmp.ne.s32.totalorder %s22, %s23
    %p34 = scmp.eq.s32.totalorder %s14, 0
    %p35 = por %p33, %p34
    %p36 = scmp.ne.s32.totalorder %s22, %s23
    %p37 = scmp.eq.s32.totalorder %s15, 2
    %p38 = por %p36, %p37
    %p40 = scmp.ne.s32.totalorder %s23, %s39
    %p41 = scmp.eq.s32.totalorder %s15, 0
    %p42 = por %p40, %p41
    %s44 = sadd.s32 %s43, 1
    %p47 = scmp.eq.s32.totalorder %s9, 2
    %p48 = scmp.ne.s32.totalorder %s43, %s45
    %p49 = scmp.eq.s32.totalorder %s9, 0
    %p50 = por %p48, %p49
    %p51 = scmp.ne.s32.totalorder %s43, %s45
    %p52 = scmp.eq.s32.totalorder %s14, 2
    %p53 = por %p51, %p52
    %p54 = scmp.ne.s32.totalorder %s45, %s46
    %p55 = scmp.eq.s32.totalorder %s14, 0
    %p56 = por %p54, %p55
    %p57 = scmp.ne.s32.totalorder %s45, %s46
    %p58 = scmp.eq.s32.totalorder %s15, 2
    %p59 = por %p57, %p58
    %p61 = scmp.ne.s32.totalorder %s46, %s60
    %p62 = scmp.eq.s32.totalorder %s15, 0
    %p63 = por %p61, %p62
    %s65 = sadd.s32 %s64, 1
    %p68 = scmp.eq.s32.totalorder %s9, 2
    %p69 = scmp.ne.s32.totalorder %s64, %s66
    %p70 = scmp.eq.s32.totalorder %s9, 0
    %p71 = por %p69, %p70
    %p72 = scmp.ne.s32.totalorder %s64, %s66
    %p73 = scmp.eq.s32.totalorder %s14, 2
    %p74 = por %p72, %p73
    %p75 = scmp.ne.s32.totalorder %s66, %s67
    %p76 = scmp.eq.s32.totalorder %s14, 0
    %p77 = por %p75, %p76
    %p78 = scmp.ne.s32.totalorder %s66, %s67
    %p79 = scmp.eq.s32.totalorder %s15, 2
    %p80 = por %p78, %p79
    %p82 = scmp.ne.s32.totalorder %s67, %s81
    %p83 = scmp.eq.s32.totalorder %s15, 0
    %p84 = por %p82, %p83
    %s85 = ssub.s32 %s9, %s16
    %p86 = scmp.eq.s32.totalorder %s85, 0
    %s88 = sadd.s32 %s87, 1
    %s89 = scalar_select %p86, %s87, %s88
    %p92 = pneg %p86
    %p93 = scmp.eq.s32.totalorder %s9, 2
    %p94 = por %p92, %p93
    %p95 = scmp.ne.s32.totalorder %s87, %s90
    %p96 = scmp.eq.s32.totalorder %s9, 0
    %p97 = por %p95, %p96
    %p98 = scmp.ne.s32.totalorder %s87, %s90
    %p99 = scmp.eq.s32.totalorder %s14, 2
    %p100 = por %p98, %p99
    %p101 = scmp.ne.s32.totalorder %s90, %s91
    %p102 = scmp.eq.s32.totalorder %s14, 0
    %p103 = por %p101, %p102
    %p104 = scmp.ne.s32.totalorder %s90, %s91
    %p105 = scmp.eq.s32.totalorder %s15, 2
    %p106 = por %p104, %p105
    %p108 = scmp.ne.s32.totalorder %s91, %s107
    %p109 = scmp.eq.s32.totalorder %s15, 0
    %p110 = por %p108, %p109
    %p111 = scmp.le.s32.totalorder 1, %s9
    %p112 = scmp.lt.s32.totalorder %s9, 4
    %p113 = pnand %p111, %p112
    %p114 = pneg %p113
    // Predicated region
    $region9: #{dram_forward.4} parent=5 // pred_check
      _
    $region10: #{dram_forward.4} parent=5 // pred_check_branch
      %116 = sbr.rel (%p113) target = $region12
    $region11: #{dram_forward.4} parent=5 // pred_region
      %s117 = ssub.s32 %s9, 1
      // Predicated region
      $region13: #{dram_forward.4} parent=11 // pred_check
        %p118 = pneg %p56
      $region14: #{dram_forward.4} parent=11 // pred_check_branch
        %120 = sbr.rel (%p118) target = $region16
      $region15: #{dram_forward.4} parent=11 // pred_region
        _
      $region16: #{dram_forward.4} parent=11 // pred_fallthru
        _
      // Predicated region
      $region17: #{dram_forward.4} parent=11 // pred_check
        %p121 = pneg %p77
      $region18: #{dram_forward.4} parent=11 // pred_check_branch
        %123 = sbr.rel (%p121) target = $region20
      $region19: #{dram_forward.4} parent=11 // pred_region
        _
      $region20: #{dram_forward.4} parent=11 // pred_fallthru
        _
    $region12: #{dram_forward.4} parent=5 // pred_fallthru
      _
    %p124 = scmp.lt.s32.totalorder %s9, 3
    // Predicated region
    $region21: #{dram_forward.4} parent=5 // pred_check
      %p125 = pneg %p124
    $region22: #{dram_forward.4} parent=5 // pred_check_branch
      %127 = sbr.rel (%p125) target = $region24
    $region23: #{dram_forward.4} parent=5 // pred_region
      // Predicated region
      $region25: #{dram_forward.4} parent=23 // pred_check
        %p128 = pneg %p29
      $region26: #{dram_forward.4} parent=23 // pred_check_branch
        %130 = sbr.rel (%p128) target = $region28
      $region27: #{dram_forward.4} parent=23 // pred_region
        %s131 = smul.u32 64, %s9
        %p132 = scmp.lt.s32.totalorder %s131, 191
        %s133 = scalar_select %p132, %s131, 191
        %s134 = smul.addr %s133, 2
        %s135 = smul.addr %s134, 8
        %s136 = scalar_lea.vmem %s0, %s135
        %s137 = smul.u32 64, %s9
      $region28: #{dram_forward.4} parent=23 // pred_fallthru
        _
    $region24: #{dram_forward.4} parent=5 // pred_fallthru
      _
    %p138 = scmp.le.s32.totalorder 1, %s9
    %p139 = scmp.lt.s32.totalorder %s9, 4
    %p140 = pnand %p138, %p139
    %p141 = pneg %p140
    // Predicated region
    $region29: #{dram_forward.4} parent=5 // pred_check
      _
    $region30: #{dram_forward.4} parent=5 // pred_check_branch
      %143 = sbr.rel (%p140) target = $region32
    $region31: #{dram_forward.4} parent=5 // pred_region
      %s144 = ssub.s32 %s9, 1
      %s145 = smul.u32 64, %s14
      %p146 = scmp.lt.s32.totalorder %s145, 191
      %s147 = scalar_select %p146, %s145, 191
      %s148 = smul.addr %s147, 2
      %s149 = smul.addr %s148, 8
      %s150 = scalar_lea.vmem %s0, %s149
      %p151 = pneg %p35
      %p152 = pneg %p32
      %p153 = pneg %p56
      %p154 = pneg %p53
      %p155 = pneg %p77
      %p156 = pneg %p74
      %p157 = pneg %p103
      %p158 = pneg %p100
      %s159 = smul.u32 64, %s14
      %p160 = scmp.lt.s32.totalorder %s159, 191
      %s161 = scalar_select %p160, %s159, 191
      %s162 = smul.addr %s161, 8
      %s163 = scalar_lea.vmem %s3, %s162
      %s164 = smul.u32 64, %s14
      %p165 = scmp.lt.s32.totalorder %s164, 191
      %s166 = scalar_select %p165, %s164, 191
      %s167 = smul.addr %s166, 2
      %s168 = smul.addr %s167, 8
      %s169 = scalar_lea.vmem %s0, %s168
      %s170 = smul.u32 64, %s14
      %s171 = smul.u32 64, %s14
      %p172 = scmp.lt.s32.totalorder %s171, 191
      %s173 = scalar_select %p172, %s171, 191
      %s174 = smul.addr %s173, 8
      %s175 = scalar_lea.vmem %s3, %s174
      %s176 = smul.u32 64, %s14
      %v177 = vld [vmem:[%s169] sm:$0xff]
      %v178 = vld [vmem:[%s169 + $0x8] sm:$0xff]
      %v179 = vld [vmem:[%s169 + $0x10] sm:$0xff]
      %v180 = vld [vmem:[%s169 + $0x18] sm:$0xff]
      %v181 = vld [vmem:[%s169 + $0x20] sm:$0xff]
      %v182 = vld [vmem:[%s169 + $0x28] sm:$0xff]
      %v183 = vld [vmem:[%s169 + $0x30] sm:$0xff]
      %v184 = vld [vmem:[%s169 + $0x38] sm:$0xff]
      %v185 = vld [vmem:[%s169 + $0x40] sm:$0xff]
      %v186 = vld [vmem:[%s169 + $0x48] sm:$0xff]
      %v187 = vld [vmem:[%s169 + $0x50] sm:$0xff]
      %v188 = vld [vmem:[%s169 + $0x58] sm:$0xff]
      %v189 = vld [vmem:[%s169 + $0x60] sm:$0xff]
      %v190 = vld [vmem:[%s169 + $0x68] sm:$0xff]
      %v191 = vld [vmem:[%s169 + $0x70] sm:$0xff]
      %v192 = vld [vmem:[%s169 + $0x78] sm:$0xff]
      %v193 = vld [vmem:[%s169 + $0x80] sm:$0xff]
      %v194 = vld [vmem:[%s169 + $0x88] sm:$0xff]
      %v195 = vld [vmem:[%s169 + $0x90] sm:$0xff]
      %v196 = vld [vmem:[%s169 + $0x98] sm:$0xff]
      %v197 = vld [vmem:[%s169 + $0xa0] sm:$0xff]
      %v198 = vld [vmem:[%s169 + $0xa8] sm:$0xff]
      %v199 = vld [vmem:[%s169 + $0xb0] sm:$0xff]
      %v200 = vld [vmem:[%s169 + $0xb8] sm:$0xff]
      %v201 = vld [vmem:[%s169 + $0xc0] sm:$0xff]
      %v202 = vld [vmem:[%s169 + $0xc8] sm:$0xff]
      %v203 = vld [vmem:[%s169 + $0xd0] sm:$0xff]
      %v204 = vld [vmem:[%s169 + $0xd8] sm:$0xff]
      %v205 = vld [vmem:[%s169 + $0xe0] sm:$0xff]
      %v206 = vld [vmem:[%s169 + $0xe8] sm:$0xff]
      %v207 = vld [vmem:[%s169 + $0xf0] sm:$0xff]
      %v208 = vld [vmem:[%s169 + $0xf8] sm:$0xff]
      %v209 = vld [vmem:[%s169 + $0x100] sm:$0xff]
      %v210 = vld [vmem:[%s169 + $0x108] sm:$0xff]
      %v211 = vld [vmem:[%s169 + $0x110] sm:$0xff]
      %v212 = vld [vmem:[%s169 + $0x118] sm:$0xff]
      %v213 = vld [vmem:[%s169 + $0x120] sm:$0xff]
      %v214 = vld [vmem:[%s169 + $0x128] sm:$0xff]
      %v215 = vld [vmem:[%s169 + $0x130] sm:$0xff]
      %v216 = vld [vmem:[%s169 + $0x138] sm:$0xff]
      %v217 = vld [vmem:[%s169 + $0x140] sm:$0xff]
      %v218 = vld [vmem:[%s169 + $0x148] sm:$0xff]
      %v219 = vld [vmem:[%s169 + $0x150] sm:$0xff]
      %v220 = vld [vmem:[%s169 + $0x158] sm:$0xff]
      %v221 = vld [vmem:[%s169 + $0x160] sm:$0xff]
      %v222 = vld [vmem:[%s169 + $0x168] sm:$0xff]
      %v223 = vld [vmem:[%s169 + $0x170] sm:$0xff]
      %v224 = vld [vmem:[%s169 + $0x178] sm:$0xff]
      %v225 = vld [vmem:[%s169 + $0x180] sm:$0xff]
      %v226 = vld [vmem:[%s169 + $0x188] sm:$0xff]
      %v227 = vld [vmem:[%s169 + $0x190] sm:$0xff]
      %v228 = vld [vmem:[%s169 + $0x198] sm:$0xff]
      %v229 = vld [vmem:[%s169 + $0x1a0] sm:$0xff]
      %v230 = vld [vmem:[%s169 + $0x1a8] sm:$0xff]
      %v231 = vld [vmem:[%s169 + $0x1b0] sm:$0xff]
      %v232 = vld [vmem:[%s169 + $0x1b8] sm:$0xff]
      %v233 = vld [vmem:[%s169 + $0x1c0] sm:$0xff]
      %v234 = vld [vmem:[%s169 + $0x1c8] sm:$0xff]
      %v235 = vld [vmem:[%s169 + $0x1d0] sm:$0xff]
      %v236 = vld [vmem:[%s169 + $0x1d8] sm:$0xff]
      %v237 = vld [vmem:[%s169 + $0x1e0] sm:$0xff]
      %v238 = vld [vmem:[%s169 + $0x1e8] sm:$0xff]
      %v239 = vld [vmem:[%s169 + $0x1f0] sm:$0xff]
      %v240 = vld [vmem:[%s169 + $0x1f8] sm:$0xff]
      %v241 = vld [vmem:[%s169 + $0x200] sm:$0xff]
      %v242 = vld [vmem:[%s169 + $0x208] sm:$0xff]
      %v243 = vld [vmem:[%s169 + $0x210] sm:$0xff]
      %v244 = vld [vmem:[%s169 + $0x218] sm:$0xff]
      %v245 = vld [vmem:[%s169 + $0x220] sm:$0xff]
      %v246 = vld [vmem:[%s169 + $0x228] sm:$0xff]
      %v247 = vld [vmem:[%s169 + $0x230] sm:$0xff]
      %v248 = vld [vmem:[%s169 + $0x238] sm:$0xff]
      %v249 = vld [vmem:[%s169 + $0x240] sm:$0xff]
      %v250 = vld [vmem:[%s169 + $0x248] sm:$0xff]
      %v251 = vld [vmem:[%s169 + $0x250] sm:$0xff]
      %v252 = vld [vmem:[%s169 + $0x258] sm:$0xff]
      %v253 = vld [vmem:[%s169 + $0x260] sm:$0xff]
      %v254 = vld [vmem:[%s169 + $0x268] sm:$0xff]
      %v255 = vld [vmem:[%s169 + $0x270] sm:$0xff]
      %v256 = vld [vmem:[%s169 + $0x278] sm:$0xff]
      %v257 = vld [vmem:[%s169 + $0x280] sm:$0xff]
      %v258 = vld [vmem:[%s169 + $0x288] sm:$0xff]
      %v259 = vld [vmem:[%s169 + $0x290] sm:$0xff]
      %v260 = vld [vmem:[%s169 + $0x298] sm:$0xff]
      %v261 = vld [vmem:[%s169 + $0x2a0] sm:$0xff]
      %v262 = vld [vmem:[%s169 + $0x2a8] sm:$0xff]
      %v263 = vld [vmem:[%s169 + $0x2b0] sm:$0xff]
      %v264 = vld [vmem:[%s169 + $0x2b8] sm:$0xff]
      %v265 = vld [vmem:[%s169 + $0x2c0] sm:$0xff]
      %v266 = vld [vmem:[%s169 + $0x2c8] sm:$0xff]
      %v267 = vld [vmem:[%s169 + $0x2d0] sm:$0xff]
      %v268 = vld [vmem:[%s169 + $0x2d8] sm:$0xff]
      %v269 = vld [vmem:[%s169 + $0x2e0] sm:$0xff]
      %v270 = vld [vmem:[%s169 + $0x2e8] sm:$0xff]
      %v271 = vld [vmem:[%s169 + $0x2f0] sm:$0xff]
      %v272 = vld [vmem:[%s169 + $0x2f8] sm:$0xff]
      %v273 = vld [vmem:[%s169 + $0x300] sm:$0xff]
      %v274 = vld [vmem:[%s169 + $0x308] sm:$0xff]
      %v275 = vld [vmem:[%s169 + $0x310] sm:$0xff]
      %v276 = vld [vmem:[%s169 + $0x318] sm:$0xff]
      %v277 = vld [vmem:[%s169 + $0x320] sm:$0xff]
      %v278 = vld [vmem:[%s169 + $0x328] sm:$0xff]
      %v279 = vld [vmem:[%s169 + $0x330] sm:$0xff]
      %v280 = vld [vmem:[%s169 + $0x338] sm:$0xff]
      %v281 = vld [vmem:[%s169 + $0x340] sm:$0xff]
      %v282 = vld [vmem:[%s169 + $0x348] sm:$0xff]
      %v283 = vld [vmem:[%s169 + $0x350] sm:$0xff]
      %v284 = vld [vmem:[%s169 + $0x358] sm:$0xff]
      %v285 = vld [vmem:[%s169 + $0x360] sm:$0xff]
      %v286 = vld [vmem:[%s169 + $0x368] sm:$0xff]
      %v287 = vld [vmem:[%s169 + $0x370] sm:$0xff]
      %v288 = vld [vmem:[%s169 + $0x378] sm:$0xff]
      %v289 = vld [vmem:[%s169 + $0x380] sm:$0xff]
      %v290 = vld [vmem:[%s169 + $0x388] sm:$0xff]
      %v291 = vld [vmem:[%s169 + $0x390] sm:$0xff]
      %v292 = vld [vmem:[%s169 + $0x398] sm:$0xff]
      %v293 = vld [vmem:[%s169 + $0x3a0] sm:$0xff]
      %v294 = vld [vmem:[%s169 + $0x3a8] sm:$0xff]
      %v295 = vld [vmem:[%s169 + $0x3b0] sm:$0xff]
      %v296 = vld [vmem:[%s169 + $0x3b8] sm:$0xff]
      %v297 = vld [vmem:[%s169 + $0x3c0] sm:$0xff]
      %v298 = vld [vmem:[%s169 + $0x3c8] sm:$0xff]
      %v299 = vld [vmem:[%s169 + $0x3d0] sm:$0xff]
      %v300 = vld [vmem:[%s169 + $0x3d8] sm:$0xff]
      %v301 = vld [vmem:[%s169 + $0x3e0] sm:$0xff]
      %v302 = vld [vmem:[%s169 + $0x3e8] sm:$0xff]
      %v303 = vld [vmem:[%s169 + $0x3f0] sm:$0xff]
      %v304 = vld [vmem:[%s169 + $0x3f8] sm:$0xff]
      %v305 = vld [vmem:[%s1] sm:$0xff]
      %v306 = vld [vmem:[%s1 + $0x8] sm:$0xff]
      %v307 = vld [vmem:[%s1 + $0x10] sm:$0xff]
      %v308 = vld [vmem:[%s1 + $0x18] sm:$0xff]
      %v309 = vld [vmem:[%s1 + $0x20] sm:$0xff]
      %v310 = vld [vmem:[%s1 + $0x28] sm:$0xff]
      %v311 = vld [vmem:[%s1 + $0x30] sm:$0xff]
      %v312 = vld [vmem:[%s1 + $0x38] sm:$0xff]
      %v313 = vld [vmem:[%s1 + $0x40] sm:$0xff]
      %v314 = vld [vmem:[%s1 + $0x48] sm:$0xff]
      %v315 = vld [vmem:[%s1 + $0x50] sm:$0xff]
      %v316 = vld [vmem:[%s1 + $0x58] sm:$0xff]
      %v317 = vld [vmem:[%s1 + $0x60] sm:$0xff]
      %v318 = vld [vmem:[%s1 + $0x68] sm:$0xff]
      %v319 = vld [vmem:[%s1 + $0x70] sm:$0xff]
      %v320 = vld [vmem:[%s1 + $0x78] sm:$0xff]
      %v321 = vld [vmem:[%s1 + $0x80] sm:$0xff]
      %v322 = vld [vmem:[%s1 + $0x88] sm:$0xff]
      %v323 = vld [vmem:[%s2] sm:$0x1]
      %v325 = vlaneseq
      %v326 = vshrl.u32 %v325, 7
      %v327 = vsub.s32 0, %v326
      %v328 = vrot.slane %v323, %v327
      %vm330 = vcmask 130048
      %v332 = vsel %vm330, %v178, 0
      %v335 = vsel %vm330, %v180, 0
      %v338 = vsel %vm330, %v182, 0
      %v341 = vsel %vm330, %v184, 0
      %v344 = vsel %vm330, %v186, 0
      %v347 = vsel %vm330, %v188, 0
      %v350 = vsel %vm330, %v190, 0
      %v353 = vsel %vm330, %v192, 0
      %v356 = vsel %vm330, %v194, 0
      %v359 = vsel %vm330, %v196, 0
      %v362 = vsel %vm330, %v198, 0
      %v365 = vsel %vm330, %v200, 0
      %v368 = vsel %vm330, %v202, 0
      %v371 = vsel %vm330, %v204, 0
      %v374 = vsel %vm330, %v206, 0
      %v377 = vsel %vm330, %v208, 0
      %v380 = vsel %vm330, %v210, 0
      %v383 = vsel %vm330, %v212, 0
      %v386 = vsel %vm330, %v214, 0
      %v389 = vsel %vm330, %v216, 0
      %v392 = vsel %vm330, %v218, 0
      %v395 = vsel %vm330, %v220, 0
      %v398 = vsel %vm330, %v222, 0
      %v401 = vsel %vm330, %v224, 0
      %v404 = vsel %vm330, %v226, 0
      %v407 = vsel %vm330, %v228, 0
      %v410 = vsel %vm330, %v230, 0
      %v413 = vsel %vm330, %v232, 0
      %v416 = vsel %vm330, %v234, 0
      %v419 = vsel %vm330, %v236, 0
      %v422 = vsel %vm330, %v238, 0
      %v425 = vsel %vm330, %v240, 0
      %v428 = vsel %vm330, %v242, 0
      %v431 = vsel %vm330, %v244, 0
      %v434 = vsel %vm330, %v246, 0
      %v437 = vsel %vm330, %v248, 0
      %v440 = vsel %vm330, %v250, 0
      %v443 = vsel %vm330, %v252, 0
      %v446 = vsel %vm330, %v254, 0
      %v449 = vsel %vm330, %v256, 0
      %v452 = vsel %vm330, %v258, 0
      %v455 = vsel %vm330, %v260, 0
      %v458 = vsel %vm330, %v262, 0
      %v461 = vsel %vm330, %v264, 0
      %v464 = vsel %vm330, %v266, 0
      %v467 = vsel %vm330, %v268, 0
      %v470 = vsel %vm330, %v270, 0
      %v473 = vsel %vm330, %v272, 0
      %v476 = vsel %vm330, %v274, 0
      %v479 = vsel %vm330, %v276, 0
      %v482 = vsel %vm330, %v278, 0
      %v485 = vsel %vm330, %v280, 0
      %v488 = vsel %vm330, %v282, 0
      %v491 = vsel %vm330, %v284, 0
      %v494 = vsel %vm330, %v286, 0
      %v497 = vsel %vm330, %v288, 0
      %v500 = vsel %vm330, %v290, 0
      %v503 = vsel %vm330, %v292, 0
      %v506 = vsel %vm330, %v294, 0
      %v509 = vsel %vm330, %v296, 0
      %v512 = vsel %vm330, %v298, 0
      %v515 = vsel %vm330, %v300, 0
      %v518 = vsel %vm330, %v302, 0
      %v521 = vsel %vm330, %v304, 0
      %523 = vmatprep.subr.mxu0 0.0
      %524 = vmatpush1.msra.mxu0 %v305
      %525 = vmatprep.subr.mxu0 0.0
      %526 = vmatpush1.msra.mxu0 %v306
      %527 = vmatprep.subr.mxu0 0.0
      %528 = vmatpush1.msra.mxu0 %v307
      %529 = vmatprep.subr.mxu0 0.0
      %530 = vmatpush1.msra.mxu0 %v308
      %531 = vmatprep.subr.mxu0 0.0
      %532 = vmatpush1.msra.mxu0 %v309
      %533 = vmatprep.subr.mxu0 0.0
      %534 = vmatpush1.msra.mxu0 %v310
      %535 = vmatprep.subr.mxu0 0.0
      %536 = vmatpush1.msra.mxu0 %v311
      %537 = vmatprep.subr.mxu0 0.0
      %538 = vmatpush1.msra.mxu0 %v312
      %539 = vmatprep.subr.mxu0 0.0
      %540 = vmatpush1.msra.mxu0 %v313
      %541 = vmatprep.subr.mxu0 0.0
      %542 = vmatpush1.msra.mxu0 %v314
      %543 = vmatprep.subr.mxu0 0.0
      %544 = vmatpush1.msra.mxu0 %v315
      %545 = vmatprep.subr.mxu0 0.0
      %546 = vmatpush1.msra.mxu0 %v316
      %547 = vmatprep.subr.mxu0 0.0
      %548 = vmatpush1.msra.mxu0 %v317
      %549 = vmatprep.subr.mxu0 0.0
      %550 = vmatpush1.msra.mxu0 %v318
      %551 = vmatprep.subr.mxu0 0.0
      %552 = vmatpush1.msra.mxu0 %v319
      %553 = vmatprep.subr.mxu0 0.0
      %554 = vmatpush1.msra.mxu0 %v320
      %555 = vmatprep.subr.mxu0 0.0
      %556 = vmatpush1.msra.mxu0 %v321
      %557 = vmatprep.subr.mxu0 0.0
      %558 = vmatpush1.msra.mxu0 %v322
      %559 = vmatprep.subr.mxu0 0.0
      %560 = vmatpush1.msra.mxu0 0.0
      %561 = vmatprep.subr.mxu0 0.0
      %562 = vmatpush1.msra.mxu0 0.0
      %563 = vmatprep.subr.mxu0 0.0
      %564 = vmatpush1.msra.mxu0 0.0
      %565 = vmatprep.subr.mxu0 0.0
      %566 = vmatpush1.msra.mxu0 0.0
      %567 = vmatprep.subr.mxu0 0.0
      %568 = vmatpush1.msra.mxu0 0.0
      %569 = vmatprep.subr.mxu0 0.0
      %570 = vmatpush1.msra.mxu0 0.0
      %571 = vmatprep.subr.mxu0 0.0
      %572 = vmatpush1.msra.mxu0 0.0
      %573 = vmatprep.subr.mxu0 0.0
      %574 = vmatpush1.msra.mxu0 0.0
      %575 = vmatprep.subr.mxu0 0.0
      %576 = vmatpush1.msra.mxu0 0.0
      %577 = vmatprep.subr.mxu0 0.0
      %578 = vmatpush1.msra.mxu0 0.0
      %579 = vmatprep.subr.mxu0 0.0
      %580 = vmatpush1.msra.mxu0 0.0
      %581 = vmatprep.subr.mxu0 0.0
      %582 = vmatpush1.msra.mxu0 0.0
      %583 = vmatprep.subr.mxu0 0.0
      %584 = vmatpush1.msra.mxu0 0.0
      %585 = vmatprep.subr.mxu0 0.0
      %586 = vmatpush1.msra.mxu0 0.0
      %587 = vmatprep.mubr.f32.mxu0 %v332
      %588 = vmatmul.mubr.f32.gmra.mrb[0].mxu0 %v177
      %v589 = vpop.f32.mrb[0].mxu0
      %v590 = vadd.f32 %v328, %v589
      %v591 = vpop.f32.mrb[0].mxu0
      %592 = vmatprep.mubr.f32.mxu0 %v335
      %593 = vmatmul.mubr.f32.gmra.mrb[0].mxu0 %v179
      %v594 = vpop.f32.mrb[0].mxu0
      %v595 = vadd.f32 %v328, %v594
      %v596 = vpop.f32.mrb[0].mxu0
      %597 = vmatprep.mubr.f32.mxu0 %v338
      %598 = vmatmul.mubr.f32.gmra.mrb[0].mxu0 %v181
      %v599 = vpop.f32.mrb[0].mxu0
      %v600 = vadd.f32 %v328, %v599
      %v601 = vpop.f32.mrb[0].mxu0
      %602 = vmatprep.mubr.f32.mxu0 %v341
      %603 = vmatmul.mubr.f32.gmra.mrb[0].mxu0 %v183
      %v604 = vpop.f32.mrb[0].mxu0
      %v605 = vadd.f32 %v328, %v604
      %v606 = vpop.f32.mrb[0].mxu0
      %607 = vmatprep.mubr.f32.mxu0 %v344
      %608 = vmatmul.mubr.f32.gmra.mrb[0].mxu0 %v185
      %v609 = vpop.f32.mrb[0].mxu0
      %v610 = vadd.f32 %v328, %v609
      %v611 = vpop.f32.mrb[0].mxu0
      %612 = vmatprep.mubr.f32.mxu0 %v347
      %613 = vmatmul.mubr.f32.gmra.mrb[0].mxu0 %v187
      %v614 = vpop.f32.mrb[0].mxu0
      %v615 = vadd.f32 %v328, %v614
      %v616 = vpop.f32.mrb[0].mxu0
      %617 = vmatprep.mubr.f32.mxu0 %v350
      %618 = vmatmul.mubr.f32.gmra.mrb[0].mxu0 %v189
      %v619 = vpop.f32.mrb[0].mxu0
      %v620 = vadd.f32 %v328, %v619
      %v621 = vpop.f32.mrb[0].mxu0
      %622 = vmatprep.mubr.f32.mxu0 %v353
      %623 = vmatmul.mubr.f32.gmra.mrb[0].mxu0 %v191
      %v624 = vpop.f32.mrb[0].mxu0
      %v625 = vadd.f32 %v328, %v624
      %v626 = vpop.f32.mrb[0].mxu0
      %627 = vmatprep.mubr.f32.mxu0 %v356
      %628 = vmatmul.mubr.f32.gmra.mrb[0].mxu0 %v193
      %v629 = vpop.f32.mrb[0].mxu0
      %v630 = vadd.f32 %v328, %v629
      %v631 = vpop.f32.mrb[0].mxu0
      %632 = vmatprep.mubr.f32.mxu0 %v359
      %633 = vmatmul.mubr.f32.gmra.mrb[0].mxu0 %v195
      %v634 = vpop.f32.mrb[0].mxu0
      %v635 = vadd.f32 %v328, %v634
      %v636 = vpop.f32.mrb[0].mxu0
      %637 = vmatprep.mubr.f32.mxu0 %v362
      %638 = vmatmul.mubr.f32.gmra.mrb[0].mxu0 %v197
      %v639 = vpop.f32.mrb[0].mxu0
      %v640 = vadd.f32 %v328, %v639
      %v641 = vpop.f32.mrb[0].mxu0
      %642 = vmatprep.mubr.f32.mxu0 %v365
      %643 = vmatmul.mubr.f32.gmra.mrb[0].mxu0 %v199
      %v644 = vpop.f32.mrb[0].mxu0
      %v645 = vadd.f32 %v328, %v644
      %v646 = vpop.f32.mrb[0].mxu0
      %647 = vmatprep.mubr.f32.mxu0 %v368
      %648 = vmatmul.mubr.f32.gmra.mrb[0].mxu0 %v201
      %v649 = vpop.f32.mrb[0].mxu0
      %v650 = vadd.f32 %v328, %v649
      %v651 = vpop.f32.mrb[0].mxu0
      %652 = vmatprep.mubr.f32.mxu0 %v371
      %653 = vmatmul.mubr.f32.gmra.mrb[0].mxu0 %v203
      %v654 = vpop.f32.mrb[0].mxu0
      %v655 = vadd.f32 %v328, %v654
      %v656 = vpop.f32.mrb[0].mxu0
      %657 = vmatprep.mubr.f32.mxu0 %v374
      %658 = vmatmul.mubr.f32.gmra.mrb[0].mxu0 %v205
      %v659 = vpop.f32.mrb[0].mxu0
      %v660 = vadd.f32 %v328, %v659
      %v661 = vpop.f32.mrb[0].mxu0
      %662 = vmatprep.mubr.f32.mxu0 %v377
      %663 = vmatmul.mubr.f32.gmra.mrb[0].mxu0 %v207
      %v664 = vpop.f32.mrb[0].mxu0
      %v665 = vadd.f32 %v328, %v664
      %v666 = vpop.f32.mrb[0].mxu0
      %667 = vmatprep.mubr.f32.mxu0 %v380
      %668 = vmatmul.mubr.f32.gmra.mrb[0].mxu0 %v209
      %v669 = vpop.f32.mrb[0].mxu0
      %v670 = vadd.f32 %v328, %v669
      %v671 = vpop.f32.mrb[0].mxu0
      %672 = vmatprep.mubr.f32.mxu0 %v383
      %673 = vmatmul.mubr.f32.gmra.mrb[0].mxu0 %v211
      %v674 = vpop.f32.mrb[0].mxu0
      %v675 = vadd.f32 %v328, %v674
      %v676 = vpop.f32.mrb[0].mxu0
      %677 = vmatprep.mubr.f32.mxu0 %v386
      %678 = vmatmul.mubr.f32.gmra.mrb[0].mxu0 %v213
      %v679 = vpop.f32.mrb[0].mxu0
      %v680 = vadd.f32 %v328, %v679
      %v681 = vpop.f32.mrb[0].mxu0
      %682 = vmatprep.mubr.f32.mxu0 %v389
      %683 = vmatmul.mubr.f32.gmra.mrb[0].mxu0 %v215
      %v684 = vpop.f32.mrb[0].mxu0
      %v685 = vadd.f32 %v328, %v684
      %v686 = vpop.f32.mrb[0].mxu0
      %687 = vmatprep.mubr.f32.mxu0 %v392
      %688 = vmatmul.mubr.f32.gmra.mrb[0].mxu0 %v217
      %v689 = vpop.f32.mrb[0].mxu0
      %v690 = vadd.f32 %v328, %v689
      %v691 = vpop.f32.mrb[0].mxu0
      %692 = vmatprep.mubr.f32.mxu0 %v395
      %693 = vmatmul.mubr.f32.gmra.mrb[0].mxu0 %v219
      %v694 = vpop.f32.mrb[0].mxu0
      %v695 = vadd.f32 %v328, %v694
      %v696 = vpop.f32.mrb[0].mxu0
      %697 = vmatprep.mubr.f32.mxu0 %v398
      %698 = vmatmul.mubr.f32.gmra.mrb[0].mxu0 %v221
      %v699 = vpop.f32.mrb[0].mxu0
      %v700 = vadd.f32 %v328, %v699
      %v701 = vpop.f32.mrb[0].mxu0
      %702 = vmatprep.mubr.f32.mxu0 %v401
      %703 = vmatmul.mubr.f32.gmra.mrb[0].mxu0 %v223
      %v704 = vpop.f32.mrb[0].mxu0
      %v705 = vadd.f32 %v328, %v704
      %v706 = vpop.f32.mrb[0].mxu0
      %707 = vmatprep.mubr.f32.mxu0 %v404
      %708 = vmatmul.mubr.f32.gmra.mrb[0].mxu0 %v225
      %v709 = vpop.f32.mrb[0].mxu0
      %v710 = vadd.f32 %v328, %v709
      %v711 = vpop.f32.mrb[0].mxu0
      %712 = vmatprep.mubr.f32.mxu0 %v407
      %713 = vmatmul.mubr.f32.gmra.mrb[0].mxu0 %v227
      %v714 = vpop.f32.mrb[0].mxu0
      %v715 = vadd.f32 %v328, %v714
      %v716 = vpop.f32.mrb[0].mxu0
      %717 = vmatprep.mubr.f32.mxu0 %v410
      %718 = vmatmul.mubr.f32.gmra.mrb[0].mxu0 %v229
      %v719 = vpop.f32.mrb[0].mxu0
      %v720 = vadd.f32 %v328, %v719
      %v721 = vpop.f32.mrb[0].mxu0
      %722 = vmatprep.mubr.f32.mxu0 %v413
      %723 = vmatmul.mubr.f32.gmra.mrb[0].mxu0 %v231
      %v724 = vpop.f32.mrb[0].mxu0
      %v725 = vadd.f32 %v328, %v724
      %v726 = vpop.f32.mrb[0].mxu0
      %727 = vmatprep.mubr.f32.mxu0 %v416
      %728 = vmatmul.mubr.f32.gmra.mrb[0].mxu0 %v233
      %v729 = vpop.f32.mrb[0].mxu0
      %v730 = vadd.f32 %v328, %v729
      %v731 = vpop.f32.mrb[0].mxu0
      %732 = vmatprep.mubr.f32.mxu0 %v419
      %733 = vmatmul.mubr.f32.gmra.mrb[0].mxu0 %v235
      %v734 = vpop.f32.mrb[0].mxu0
      %v735 = vadd.f32 %v328, %v734
      %v736 = vpop.f32.mrb[0].mxu0
      %737 = vmatprep.mubr.f32.mxu0 %v422
      %738 = vmatmul.mubr.f32.gmra.mrb[0].mxu0 %v237
      %v739 = vpop.f32.mrb[0].mxu0
      %v740 = vadd.f32 %v328, %v739
      %v741 = vpop.f32.mrb[0].mxu0
      %742 = vmatprep.mubr.f32.mxu0 %v425
      %743 = vmatmul.mubr.f32.gmra.mrb[0].mxu0 %v239
      %v744 = vpop.f32.mrb[0].mxu0
      %v745 = vadd.f32 %v328, %v744
      %v746 = vpop.f32.mrb[0].mxu0
      %747 = vmatprep.mubr.f32.mxu0 %v428
      %748 = vmatmul.mubr.f32.gmra.mrb[0].mxu0 %v241
      %v749 = vpop.f32.mrb[0].mxu0
      %v750 = vadd.f32 %v328, %v749
      %v751 = vpop.f32.mrb[0].mxu0
      %752 = vmatprep.mubr.f32.mxu0 %v431
      %753 = vmatmul.mubr.f32.gmra.mrb[0].mxu0 %v243
      %v754 = vpop.f32.mrb[0].mxu0
      %v755 = vadd.f32 %v328, %v754
      %v756 = vpop.f32.mrb[0].mxu0
      %757 = vmatprep.mubr.f32.mxu0 %v434
      %758 = vmatmul.mubr.f32.gmra.mrb[0].mxu0 %v245
      %v759 = vpop.f32.mrb[0].mxu0
      %v760 = vadd.f32 %v328, %v759
      %v761 = vpop.f32.mrb[0].mxu0
      %762 = vmatprep.mubr.f32.mxu0 %v437
      %763 = vmatmul.mubr.f32.gmra.mrb[0].mxu0 %v247
      %v764 = vpop.f32.mrb[0].mxu0
      %v765 = vadd.f32 %v328, %v764
      %v766 = vpop.f32.mrb[0].mxu0
      %767 = vmatprep.mubr.f32.mxu0 %v440
      %768 = vmatmul.mubr.f32.gmra.mrb[0].mxu0 %v249
      %v769 = vpop.f32.mrb[0].mxu0
      %v770 = vadd.f32 %v328, %v769
      %v771 = vpop.f32.mrb[0].mxu0
      %772 = vmatprep.mubr.f32.mxu0 %v443
      %773 = vmatmul.mubr.f32.gmra.mrb[0].mxu0 %v251
      %v774 = vpop.f32.mrb[0].mxu0
      %v775 = vadd.f32 %v328, %v774
      %v776 = vpop.f32.mrb[0].mxu0
      %777 = vmatprep.mubr.f32.mxu0 %v446
      %778 = vmatmul.mubr.f32.gmra.mrb[0].mxu0 %v253
      %v779 = vpop.f32.mrb[0].mxu0
      %v780 = vadd.f32 %v328, %v779
      %v781 = vpop.f32.mrb[0].mxu0
      %782 = vmatprep.mubr.f32.mxu0 %v449
      %783 = vmatmul.mubr.f32.gmra.mrb[0].mxu0 %v255
      %v784 = vpop.f32.mrb[0].mxu0
      %v785 = vadd.f32 %v328, %v784
      %v786 = vpop.f32.mrb[0].mxu0
      %787 = vmatprep.mubr.f32.mxu0 %v452
      %788 = vmatmul.mubr.f32.gmra.mrb[0].mxu0 %v257
      %v789 = vpop.f32.mrb[0].mxu0
      %v790 = vadd.f32 %v328, %v789
      %v791 = vpop.f32.mrb[0].mxu0
      %792 = vmatprep.mubr.f32.mxu0 %v455
      %793 = vmatmul.mubr.f32.gmra.mrb[0].mxu0 %v259
      %v794 = vpop.f32.mrb[0].mxu0
      %v795 = vadd.f32 %v328, %v794
      %v796 = vpop.f32.mrb[0].mxu0
      %797 = vmatprep.mubr.f32.mxu0 %v458
      %798 = vmatmul.mubr.f32.gmra.mrb[0].mxu0 %v261
      %v799 = vpop.f32.mrb[0].mxu0
      %v800 = vadd.f32 %v328, %v799
      %v801 = vpop.f32.mrb[0].mxu0
      %802 = vmatprep.mubr.f32.mxu0 %v461
      %803 = vmatmul.mubr.f32.gmra.mrb[0].mxu0 %v263
      %v804 = vpop.f32.mrb[0].mxu0
      %v805 = vadd.f32 %v328, %v804
      %v806 = vpop.f32.mrb[0].mxu0
      %807 = vmatprep.mubr.f32.mxu0 %v464
      %808 = vmatmul.mubr.f32.gmra.mrb[0].mxu0 %v265
      %v809 = vpop.f32.mrb[0].mxu0
      %v810 = vadd.f32 %v328, %v809
      %v811 = vpop.f32.mrb[0].mxu0
      %812 = vmatprep.mubr.f32.mxu0 %v467
      %813 = vmatmul.mubr.f32.gmra.mrb[0].mxu0 %v267
      %v814 = vpop.f32.mrb[0].mxu0
      %v815 = vadd.f32 %v328, %v814
      %v816 = vpop.f32.mrb[0].mxu0
      %817 = vmatprep.mubr.f32.mxu0 %v470
      %818 = vmatmul.mubr.f32.gmra.mrb[0].mxu0 %v269
      %v819 = vpop.f32.mrb[0].mxu0
      %v820 = vadd.f32 %v328, %v819
      %v821 = vpop.f32.mrb[0].mxu0
      %822 = vmatprep.mubr.f32.mxu0 %v473
      %823 = vmatmul.mubr.f32.gmra.mrb[0].mxu0 %v271
      %v824 = vpop.f32.mrb[0].mxu0
      %v825 = vadd.f32 %v328, %v824
      %v826 = vpop.f32.mrb[0].mxu0
      %827 = vmatprep.mubr.f32.mxu0 %v476
      %828 = vmatmul.mubr.f32.gmra.mrb[0].mxu0 %v273
      %v829 = vpop.f32.mrb[0].mxu0
      %v830 = vadd.f32 %v328, %v829
      %v831 = vpop.f32.mrb[0].mxu0
      %832 = vmatprep.mubr.f32.mxu0 %v479
      %833 = vmatmul.mubr.f32.gmra.mrb[0].mxu0 %v275
      %v834 = vpop.f32.mrb[0].mxu0
      %v835 = vadd.f32 %v328, %v834
      %v836 = vpop.f32.mrb[0].mxu0
      %837 = vmatprep.mubr.f32.mxu0 %v482
      %838 = vmatmul.mubr.f32.gmra.mrb[0].mxu0 %v277
      %v839 = vpop.f32.mrb[0].mxu0
      %v840 = vadd.f32 %v328, %v839
      %v841 = vpop.f32.mrb[0].mxu0
      %842 = vmatprep.mubr.f32.mxu0 %v485
      %843 = vmatmul.mubr.f32.gmra.mrb[0].mxu0 %v279
      %v844 = vpop.f32.mrb[0].mxu0
      %v845 = vadd.f32 %v328, %v844
      %v846 = vpop.f32.mrb[0].mxu0
      %847 = vmatprep.mubr.f32.mxu0 %v488
      %848 = vmatmul.mubr.f32.gmra.mrb[0].mxu0 %v281
      %v849 = vpop.f32.mrb[0].mxu0
      %v850 = vadd.f32 %v328, %v849
      %v851 = vpop.f32.mrb[0].mxu0
      %852 = vmatprep.mubr.f32.mxu0 %v491
      %853 = vmatmul.mubr.f32.gmra.mrb[0].mxu0 %v283
      %v854 = vpop.f32.mrb[0].mxu0
      %v855 = vadd.f32 %v328, %v854
      %v856 = vpop.f32.mrb[0].mxu0
      %857 = vmatprep.mubr.f32.mxu0 %v494
      %858 = vmatmul.mubr.f32.gmra.mrb[0].mxu0 %v285
      %v859 = vpop.f32.mrb[0].mxu0
      %v860 = vadd.f32 %v328, %v859
      %v861 = vpop.f32.mrb[0].mxu0
      %862 = vmatprep.mubr.f32.mxu0 %v497
      %863 = vmatmul.mubr.f32.gmra.mrb[0].mxu0 %v287
      %v864 = vpop.f32.mrb[0].mxu0
      %v865 = vadd.f32 %v328, %v864
      %v866 = vpop.f32.mrb[0].mxu0
      %867 = vmatprep.mubr.f32.mxu0 %v500
      %868 = vmatmul.mubr.f32.gmra.mrb[0].mxu0 %v289
      %v869 = vpop.f32.mrb[0].mxu0
      %v870 = vadd.f32 %v328, %v869
      %v871 = vpop.f32.mrb[0].mxu0
      %872 = vmatprep.mubr.f32.mxu0 %v503
      %873 = vmatmul.mubr.f32.gmra.mrb[0].mxu0 %v291
      %v874 = vpop.f32.mrb[0].mxu0
      %v875 = vadd.f32 %v328, %v874
      %v876 = vpop.f32.mrb[0].mxu0
      %877 = vmatprep.mubr.f32.mxu0 %v506
      %878 = vmatmul.mubr.f32.gmra.mrb[0].mxu0 %v293
      %v879 = vpop.f32.mrb[0].mxu0
      %v880 = vadd.f32 %v328, %v879
      %v881 = vpop.f32.mrb[0].mxu0
      %882 = vmatprep.mubr.f32.mxu0 %v509
      %883 = vmatmul.mubr.f32.gmra.mrb[0].mxu0 %v295
      %v884 = vpop.f32.mrb[0].mxu0
      %v885 = vadd.f32 %v328, %v884
      %v886 = vpop.f32.mrb[0].mxu0
      %887 = vmatprep.mubr.f32.mxu0 %v512
      %888 = vmatmul.mubr.f32.gmra.mrb[0].mxu0 %v297
      %v889 = vpop.f32.mrb[0].mxu0
      %v890 = vadd.f32 %v328, %v889
      %v891 = vpop.f32.mrb[0].mxu0
      %892 = vmatprep.mubr.f32.mxu0 %v515
      %893 = vmatmul.mubr.f32.gmra.mrb[0].mxu0 %v299
      %v894 = vpop.f32.mrb[0].mxu0
      %v895 = vadd.f32 %v328, %v894
      %v896 = vpop.f32.mrb[0].mxu0
      %897 = vmatprep.mubr.f32.mxu0 %v518
      %898 = vmatmul.mubr.f32.gmra.mrb[0].mxu0 %v301
      %v899 = vpop.f32.mrb[0].mxu0
      %v900 = vadd.f32 %v328, %v899
      %v901 = vpop.f32.mrb[0].mxu0
      %902 = vmatprep.mubr.f32.mxu0 %v521
      %903 = vmatmul.mubr.f32.gmra.mrb[0].mxu0 %v303
      %v904 = vpop.f32.mrb[0].mxu0
      %v905 = vadd.f32 %v328, %v904
      %v906 = vpop.f32.mrb[0].mxu0
      %907 = vdwg.mxu0
      %v908 = vmax.f32 %v590, 0.0
      %v909 = vmax.f32 %v595, 0.0
      %v910 = vmax.f32 %v600, 0.0
      %v911 = vmax.f32 %v605, 0.0
      %v912 = vmax.f32 %v610, 0.0
      %v913 = vmax.f32 %v615, 0.0
      %v914 = vmax.f32 %v620, 0.0
      %v915 = vmax.f32 %v625, 0.0
      %v916 = vmax.f32 %v630, 0.0
      %v917 = vmax.f32 %v635, 0.0
      %v918 = vmax.f32 %v640, 0.0
      %v919 = vmax.f32 %v645, 0.0
      %v920 = vmax.f32 %v650, 0.0
      %v921 = vmax.f32 %v655, 0.0
      %v922 = vmax.f32 %v660, 0.0
      %v923 = vmax.f32 %v665, 0.0
      %v924 = vmax.f32 %v670, 0.0
      %v925 = vmax.f32 %v675, 0.0
      %v926 = vmax.f32 %v680, 0.0
      %v927 = vmax.f32 %v685, 0.0
      %v928 = vmax.f32 %v690, 0.0
      %v929 = vmax.f32 %v695, 0.0
      %v930 = vmax.f32 %v700, 0.0
      %v931 = vmax.f32 %v705, 0.0
      %v932 = vmax.f32 %v710, 0.0
      %v933 = vmax.f32 %v715, 0.0
      %v934 = vmax.f32 %v720, 0.0
      %v935 = vmax.f32 %v725, 0.0
      %v936 = vmax.f32 %v730, 0.0
      %v937 = vmax.f32 %v735, 0.0
      %v938 = vmax.f32 %v740, 0.0
      %v939 = vmax.f32 %v745, 0.0
      %v940 = vmax.f32 %v750, 0.0
      %v941 = vmax.f32 %v755, 0.0
      %v942 = vmax.f32 %v760, 0.0
      %v943 = vmax.f32 %v765, 0.0
      %v944 = vmax.f32 %v770, 0.0
      %v945 = vmax.f32 %v775, 0.0
      %v946 = vmax.f32 %v780, 0.0
      %v947 = vmax.f32 %v785, 0.0
      %v948 = vmax.f32 %v790, 0.0
      %v949 = vmax.f32 %v795, 0.0
      %v950 = vmax.f32 %v800, 0.0
      %v951 = vmax.f32 %v805, 0.0
      %v952 = vmax.f32 %v810, 0.0
      %v953 = vmax.f32 %v815, 0.0
      %v954 = vmax.f32 %v820, 0.0
      %v955 = vmax.f32 %v825, 0.0
      %v956 = vmax.f32 %v830, 0.0
      %v957 = vmax.f32 %v835, 0.0
      %v958 = vmax.f32 %v840, 0.0
      %v959 = vmax.f32 %v845, 0.0
      %v960 = vmax.f32 %v850, 0.0
      %v961 = vmax.f32 %v855, 0.0
      %v962 = vmax.f32 %v860, 0.0
      %v963 = vmax.f32 %v865, 0.0
      %v964 = vmax.f32 %v870, 0.0
      %v965 = vmax.f32 %v875, 0.0
      %v966 = vmax.f32 %v880, 0.0
      %v967 = vmax.f32 %v885, 0.0
      %v968 = vmax.f32 %v890, 0.0
      %v969 = vmax.f32 %v895, 0.0
      %v970 = vmax.f32 %v900, 0.0
      %v971 = vmax.f32 %v905, 0.0
      %vm972 = vcmask 261120
      %973 = vst.msk [vmem:[%s175] sm:$0xff] %vm972, %v908
      %974 = vst.msk [vmem:[%s175 + $0x8] sm:$0xff] %vm972, %v909
      %975 = vst.msk [vmem:[%s175 + $0x10] sm:$0xff] %vm972, %v910
      %976 = vst.msk [vmem:[%s175 + $0x18] sm:$0xff] %vm972, %v911
      %977 = vst.msk [vmem:[%s175 + $0x20] sm:$0xff] %vm972, %v912
      %978 = vst.msk [vmem:[%s175 + $0x28] sm:$0xff] %vm972, %v913
      %979 = vst.msk [vmem:[%s175 + $0x30] sm:$0xff] %vm972, %v914
      %980 = vst.msk [vmem:[%s175 + $0x38] sm:$0xff] %vm972, %v915
      %981 = vst.msk [vmem:[%s175 + $0x40] sm:$0xff] %vm972, %v916
      %982 = vst.msk [vmem:[%s175 + $0x48] sm:$0xff] %vm972, %v917
      %983 = vst.msk [vmem:[%s175 + $0x50] sm:$0xff] %vm972, %v918
      %984 = vst.msk [vmem:[%s175 + $0x58] sm:$0xff] %vm972, %v919
      %985 = vst.msk [vmem:[%s175 + $0x60] sm:$0xff] %vm972, %v920
      %986 = vst.msk [vmem:[%s175 + $0x68] sm:$0xff] %vm972, %v921
      %987 = vst.msk [vmem:[%s175 + $0x70] sm:$0xff] %vm972, %v922
      %988 = vst.msk [vmem:[%s175 + $0x78] sm:$0xff] %vm972, %v923
      %989 = vst.msk [vmem:[%s175 + $0x80] sm:$0xff] %vm972, %v924
      %990 = vst.msk [vmem:[%s175 + $0x88] sm:$0xff] %vm972, %v925
      %991 = vst.msk [vmem:[%s175 + $0x90] sm:$0xff] %vm972, %v926
      %992 = vst.msk [vmem:[%s175 + $0x98] sm:$0xff] %vm972, %v927
      %993 = vst.msk [vmem:[%s175 + $0xa0] sm:$0xff] %vm972, %v928
      %994 = vst.msk [vmem:[%s175 + $0xa8] sm:$0xff] %vm972, %v929
      %995 = vst.msk [vmem:[%s175 + $0xb0] sm:$0xff] %vm972, %v930
      %996 = vst.msk [vmem:[%s175 + $0xb8] sm:$0xff] %vm972, %v931
      %997 = vst.msk [vmem:[%s175 + $0xc0] sm:$0xff] %vm972, %v932
      %998 = vst.msk [vmem:[%s175 + $0xc8] sm:$0xff] %vm972, %v933
      %999 = vst.msk [vmem:[%s175 + $0xd0] sm:$0xff] %vm972, %v934
      %1000 = vst.msk [vmem:[%s175 + $0xd8] sm:$0xff] %vm972, %v935
      %1001 = vst.msk [vmem:[%s175 + $0xe0] sm:$0xff] %vm972, %v936
      %1002 = vst.msk [vmem:[%s175 + $0xe8] sm:$0xff] %vm972, %v937
      %1003 = vst.msk [vmem:[%s175 + $0xf0] sm:$0xff] %vm972, %v938
      %1004 = vst.msk [vmem:[%s175 + $0xf8] sm:$0xff] %vm972, %v939
      %1005 = vst.msk [vmem:[%s175 + $0x100] sm:$0xff] %vm972, %v940
      %1006 = vst.msk [vmem:[%s175 + $0x108] sm:$0xff] %vm972, %v941
      %1007 = vst.msk [vmem:[%s175 + $0x110] sm:$0xff] %vm972, %v942
      %1008 = vst.msk [vmem:[%s175 + $0x118] sm:$0xff] %vm972, %v943
      %1009 = vst.msk [vmem:[%s175 + $0x120] sm:$0xff] %vm972, %v944
      %1010 = vst.msk [vmem:[%s175 + $0x128] sm:$0xff] %vm972, %v945
      %1011 = vst.msk [vmem:[%s175 + $0x130] sm:$0xff] %vm972, %v946
      %1012 = vst.msk [vmem:[%s175 + $0x138] sm:$0xff] %vm972, %v947
      %1013 = vst.msk [vmem:[%s175 + $0x140] sm:$0xff] %vm972, %v948
      %1014 = vst.msk [vmem:[%s175 + $0x148] sm:$0xff] %vm972, %v949
      %1015 = vst.msk [vmem:[%s175 + $0x150] sm:$0xff] %vm972, %v950
      %1016 = vst.msk [vmem:[%s175 + $0x158] sm:$0xff] %vm972, %v951
      %1017 = vst.msk [vmem:[%s175 + $0x160] sm:$0xff] %vm972, %v952
      %1018 = vst.msk [vmem:[%s175 + $0x168] sm:$0xff] %vm972, %v953
      %1019 = vst.msk [vmem:[%s175 + $0x170] sm:$0xff] %vm972, %v954
      %1020 = vst.msk [vmem:[%s175 + $0x178] sm:$0xff] %vm972, %v955
      %1021 = vst.msk [vmem:[%s175 + $0x180] sm:$0xff] %vm972, %v956
      %1022 = vst.msk [vmem:[%s175 + $0x188] sm:$0xff] %vm972, %v957
      %1023 = vst.msk [vmem:[%s175 + $0x190] sm:$0xff] %vm972, %v958
      %1024 = vst.msk [vmem:[%s175 + $0x198] sm:$0xff] %vm972, %v959
      %1025 = vst.msk [vmem:[%s175 + $0x1a0] sm:$0xff] %vm972, %v960
      %1026 = vst.msk [vmem:[%s175 + $0x1a8] sm:$0xff] %vm972, %v961
      %1027 = vst.msk [vmem:[%s175 + $0x1b0] sm:$0xff] %vm972, %v962
      %1028 = vst.msk [vmem:[%s175 + $0x1b8] sm:$0xff] %vm972, %v963
      %1029 = vst.msk [vmem:[%s175 + $0x1c0] sm:$0xff] %vm972, %v964
      %1030 = vst.msk [vmem:[%s175 + $0x1c8] sm:$0xff] %vm972, %v965
      %1031 = vst.msk [vmem:[%s175 + $0x1d0] sm:$0xff] %vm972, %v966
      %1032 = vst.msk [vmem:[%s175 + $0x1d8] sm:$0xff] %vm972, %v967
      %1033 = vst.msk [vmem:[%s175 + $0x1e0] sm:$0xff] %vm972, %v968
      %1034 = vst.msk [vmem:[%s175 + $0x1e8] sm:$0xff] %vm972, %v969
      %1035 = vst.msk [vmem:[%s175 + $0x1f0] sm:$0xff] %vm972, %v970
      %1036 = vst.msk [vmem:[%s175 + $0x1f8] sm:$0xff] %vm972, %v971
      %s1037 = smul.u32 64, %s14
      %p1038 = scmp.lt.s32.totalorder %s1037, 191
      %s1039 = scalar_select %p1038, %s1037, 191
      %s1040 = smul.addr %s1039, 8
      %s1041 = scalar_lea.vmem %s3, %s1040
      // Predicated region
      $region33: #{dram_forward.4} parent=31 // pred_check
        %p1042 = pneg %p100
      $region34: #{dram_forward.4} parent=31 // pred_check_branch
        %1044 = sbr.rel (%p1042) target = $region36
      $region35: #{dram_forward.4} parent=31 // pred_region
        %s1045 = smul.u32 64, %s14
      $region36: #{dram_forward.4} parent=31 // pred_fallthru
        _
    $region32: #{dram_forward.4} parent=5 // pred_fallthru
      _
    %p1046 = scmp.le.s32.totalorder 2, %s9
    // Predicated region
    $region37: #{dram_forward.4} parent=5 // pred_check
      %p1047 = pneg %p1046
    $region38: #{dram_forward.4} parent=5 // pred_check_branch
      %1049 = sbr.rel (%p1047) target = $region40
    $region39: #{dram_forward.4} parent=5 // pred_region
      %s1050 = ssub.s32 %s9, 2
      // Predicated region
      $region41: #{dram_forward.4} parent=39 // pred_check
        %p1051 = pneg %p106
      $region42: #{dram_forward.4} parent=39 // pred_check_branch
        %1053 = sbr.rel (%p1051) target = $region44
      $region43: #{dram_forward.4} parent=39 // pred_region
        %s1054 = smul.u32 64, %s15
        %p1055 = scmp.lt.s32.totalorder %s1054, 191
        %s1056 = scalar_select %p1055, %s1054, 191
        %s1057 = smul.addr %s1056, 8
        %s1058 = scalar_lea.vmem %s3, %s1057
      $region44: #{dram_forward.4} parent=39 // pred_fallthru
        _
    $region40: #{dram_forward.4} parent=5 // pred_fallthru
      _
  $region6: #{dram_forward.4} parent=0 // loop_footer
    %s13 = sadd.s32 1, %s9
  $region7: #{dram_forward.4} parent=0 // loop_footer_branch
    %8 = sbr.rel target = $region3
  $region8: #{dram_forward.4} parent=0 // loop_exit
    _

// kernel: dram_forward.5
$region0: #{dram_forward.5}
  #allocation0 [shape = 'u32[]', space=smem, size = 0x4, offset = 0x4, fixed_abs, tag = 'smem constant byte address 0x4 - core index']
  #allocation1 [shape = 'u32[144,128]{1,0:T(1,128)}', space=vmem, size = 0x12000, scoped, tag = 'internal scratch']
  %s0 = inlined_call_operand.vmem [shape: f32[248,288], index: 0, kind: input, shape index: {}]
  %s1 = inlined_call_operand.vmem [shape: f32[2,248], index: 1, kind: input, shape index: {}]
  %s2 = inlined_call_operand.vmem [shape: f32[2,2], index: 2, kind: input, shape index: {}]
  %s3 = inlined_call_operand.vmem [shape: f32[288,64], index: 3, kind: input, shape index: {}]
  %s4 = inlined_call_operand.vmem [shape: f32[1,64], index: 4, kind: input, shape index: {}]
  %s5 = inlined_call_operand.vmem [shape: f32[64,32], index: 5, kind: input, shape index: {}]
  %s6 = inlined_call_operand.vmem [shape: f32[1,32], index: 6, kind: input, shape index: {}]
  %s7 = inlined_call_operand.vmem [shape: f32[64,13], index: 7, kind: input, shape index: {}]
  %s8 = inlined_call_operand.vmem [shape: f32[1,13], index: 8, kind: input, shape index: {}]
  %s9 = inlined_call_operand.hbm [shape: f32[2,2,32], index: 9, kind: output, shape index: {0}]
  %s10 = inlined_call_operand.hbm [shape: f32[2,2,32], index: 10, kind: output, shape index: {1}]
  %s11 = inlined_call_operand.hbm [shape: f32[2,2], index: 11, kind: output, shape index: {2}]
  %s12 = inlined_call_operand.vmem [shape: f32[2,1], index: 12, kind: output, shape index: {3}]
  %s13 = inlined_call_operand.vmem [shape: f32[2,1], index: 13, kind: output, shape index: {4}]
  %s14 = inlined_call_operand.hbm [shape: f32[2,10], index: 14, kind: output, shape index: {5}]
  %15 = xla_tuple %s9, %s10, %s11, %s12, %s13, %s14
  %s16 = sld [smem:[#allocation0]]
  $region86: #{dram_forward.5} parent=0
    _
  %s18 = ssub.s32 1, %s16
  %s19 = scalar_select 0, %s18, %s16
  $region1: #{dram_forward.5} parent=0
    #allocation2 [shape = 'u8[2048]{0}', space=vmem, size = 0x800, scoped, tag = 'output window, operand 0, single buffered']
    #allocation3 [shape = 's32[1]{0}', space=sflag, size = 0x4, scoped, tag = 'scoped memory for dram_forward.5']
    #allocation4 [shape = 'u8[2048]{0}', space=vmem, size = 0x800, scoped, tag = 'output window, operand 1, single buffered']
    #allocation5 [shape = 's32[1]{0}', space=sflag, size = 0x4, scoped, tag = 'scoped memory for dram_forward.5']
    #allocation6 [shape = 'u8[1024]{0}', space=vmem, size = 0x400, scoped, tag = 'output window, operand 2, single buffered']
    #allocation7 [shape = 'u8[1024]{0}', space=vmem, size = 0x400, scoped, tag = 'output window, operand 5, single buffered']
    #allocation8 [shape = 's32[1]{0}', space=sflag, size = 0x4, scoped, tag = 'scoped memory for dram_forward.5']
    %20 = vsyncpa [#allocation3], 0
    %21 = vsyncpa [#allocation5], 0
    %22 = vsyncpa [#allocation8], 0
    // Predicated region
    $region2: #{dram_forward.5} parent=1 // pred_check
      _
    $region3: #{dram_forward.5} parent=1 // pred_check_branch
      %24 = sbr.rel (0) target = $region5
    $region4: #{dram_forward.5} parent=1 // pred_region
      _
    $region5: #{dram_forward.5} parent=1 // pred_fallthru
      _
    // Predicated region
    $region6: #{dram_forward.5} parent=1 // pred_check
      _
    $region7: #{dram_forward.5} parent=1 // pred_check_branch
      %26 = sbr.rel (0) target = $region9
    $region8: #{dram_forward.5} parent=1 // pred_region
      _
    $region9: #{dram_forward.5} parent=1 // pred_fallthru
      _
    // Predicated region
    $region10: #{dram_forward.5} parent=1 // pred_check
      _
    $region11: #{dram_forward.5} parent=1 // pred_check_branch
      %28 = sbr.rel (0) target = $region13
    $region12: #{dram_forward.5} parent=1 // pred_region
      _
    $region13: #{dram_forward.5} parent=1 // pred_fallthru
      _
    // Predicated region
    $region14: #{dram_forward.5} parent=1 // pred_check
      _
    $region15: #{dram_forward.5} parent=1 // pred_check_branch
      %30 = sbr.rel (0) target = $region17
    $region16: #{dram_forward.5} parent=1 // pred_region
      _
    $region17: #{dram_forward.5} parent=1 // pred_fallthru
      _
    // Predicated region
    $region18: #{dram_forward.5} parent=1 // pred_check
      _
    $region19: #{dram_forward.5} parent=1 // pred_check_branch
      %32 = sbr.rel (0) target = $region21
    $region20: #{dram_forward.5} parent=1 // pred_region
      _
    $region21: #{dram_forward.5} parent=1 // pred_fallthru
      _
    // Predicated region
    $region22: #{dram_forward.5} parent=1 // pred_check
      _
    $region23: #{dram_forward.5} parent=1 // pred_check_branch
      %34 = sbr.rel (0) target = $region25
    $region24: #{dram_forward.5} parent=1 // pred_region
      _
    $region25: #{dram_forward.5} parent=1 // pred_fallthru
      _
    // Predicated region
    $region26: #{dram_forward.5} parent=1 // pred_check
      _
    $region27: #{dram_forward.5} parent=1 // pred_check_branch
      %36 = sbr.rel (0) target = $region29
    $region28: #{dram_forward.5} parent=1 // pred_region
      _
    $region29: #{dram_forward.5} parent=1 // pred_fallthru
      _
    // Predicated region
    $region30: #{dram_forward.5} parent=1 // pred_check
      _
    $region31: #{dram_forward.5} parent=1 // pred_check_branch
      %38 = sbr.rel (0) target = $region33
    $region32: #{dram_forward.5} parent=1 // pred_region
      _
    $region33: #{dram_forward.5} parent=1 // pred_fallthru
      _
    // Predicated region
    $region34: #{dram_forward.5} parent=1 // pred_check
      _
    $region35: #{dram_forward.5} parent=1 // pred_check_branch
      %40 = sbr.rel (0) target = $region37
    $region36: #{dram_forward.5} parent=1 // pred_region
      _
    $region37: #{dram_forward.5} parent=1 // pred_fallthru
      _
    %v41 = vld [vmem:[%s0] sm:$0xff]
    %v42 = vld [vmem:[%s0 + $0x8] sm:$0xff]
    %v43 = vld [vmem:[%s0 + $0x10] sm:$0xff]
    %v44 = vld [vmem:[%s0 + $0x18] sm:$0xff]
    %v45 = vld [vmem:[%s0 + $0x20] sm:$0xff]
    %v46 = vld [vmem:[%s0 + $0x28] sm:$0xff]
    %v47 = vld [vmem:[%s0 + $0x30] sm:$0xff]
    %v48 = vld [vmem:[%s0 + $0x38] sm:$0xff]
    %v49 = vld [vmem:[%s0 + $0x40] sm:$0xff]
    %v50 = vld [vmem:[%s0 + $0x48] sm:$0xff]
    %v51 = vld [vmem:[%s0 + $0x50] sm:$0xff]
    %v52 = vld [vmem:[%s0 + $0x58] sm:$0xff]
    %v53 = vld [vmem:[%s0 + $0x60] sm:$0xff]
    %v54 = vld [vmem:[%s0 + $0x68] sm:$0xff]
    %v55 = vld [vmem:[%s0 + $0x70] sm:$0xff]
    %v56 = vld [vmem:[%s0 + $0x78] sm:$0xff]
    %v57 = vld [vmem:[%s0 + $0x80] sm:$0xff]
    %v58 = vld [vmem:[%s0 + $0x88] sm:$0xff]
    %v59 = vld [vmem:[%s0 + $0x90] sm:$0xff]
    %v60 = vld [vmem:[%s0 + $0x98] sm:$0xff]
    %v61 = vld [vmem:[%s0 + $0xa0] sm:$0xff]
    %v62 = vld [vmem:[%s0 + $0xa8] sm:$0xff]
    %v63 = vld [vmem:[%s0 + $0xb0] sm:$0xff]
    %v64 = vld [vmem:[%s0 + $0xb8] sm:$0xff]
    %v65 = vld [vmem:[%s0 + $0xc0] sm:$0xff]
    %v66 = vld [vmem:[%s0 + $0xc8] sm:$0xff]
    %v67 = vld [vmem:[%s0 + $0xd0] sm:$0xff]
    %v68 = vld [vmem:[%s0 + $0xd8] sm:$0xff]
    %v69 = vld [vmem:[%s0 + $0xe0] sm:$0xff]
    %v70 = vld [vmem:[%s0 + $0xe8] sm:$0xff]
    %v71 = vld [vmem:[%s0 + $0xf0] sm:$0xff]
    %v72 = vld [vmem:[%s0 + $0xf8] sm:$0xff]
    %v73 = vld [vmem:[%s0 + $0x100] sm:$0xff]
    %v74 = vld [vmem:[%s0 + $0x108] sm:$0xff]
    %v75 = vld [vmem:[%s0 + $0x110] sm:$0xff]
    %v76 = vld [vmem:[%s0 + $0x118] sm:$0xff]
    %v77 = vld [vmem:[%s0 + $0x120] sm:$0xff]
    %v78 = vld [vmem:[%s0 + $0x128] sm:$0xff]
    %v79 = vld [vmem:[%s0 + $0x130] sm:$0xff]
    %v80 = vld [vmem:[%s0 + $0x138] sm:$0xff]
    %v81 = vld [vmem:[%s0 + $0x140] sm:$0xff]
    %v82 = vld [vmem:[%s0 + $0x148] sm:$0xff]
    %v83 = vld [vmem:[%s0 + $0x150] sm:$0xff]
    %v84 = vld [vmem:[%s0 + $0x158] sm:$0xff]
    %v85 = vld [vmem:[%s0 + $0x160] sm:$0xff]
    %v86 = vld [vmem:[%s0 + $0x168] sm:$0xff]
    %v87 = vld [vmem:[%s0 + $0x170] sm:$0xff]
    %v88 = vld [vmem:[%s0 + $0x178] sm:$0xff]
    %v89 = vld [vmem:[%s0 + $0x180] sm:$0xff]
    %v90 = vld [vmem:[%s0 + $0x188] sm:$0xff]
    %v91 = vld [vmem:[%s0 + $0x190] sm:$0xff]
    %v92 = vld [vmem:[%s0 + $0x198] sm:$0xff]
    %v93 = vld [vmem:[%s0 + $0x1a0] sm:$0xff]
    %v94 = vld [vmem:[%s0 + $0x1a8] sm:$0xff]
    %v95 = vld [vmem:[%s0 + $0x1b0] sm:$0xff]
    %v96 = vld [vmem:[%s0 + $0x1b8] sm:$0xff]
    %v97 = vld [vmem:[%s0 + $0x1c0] sm:$0xff]
    %v98 = vld [vmem:[%s0 + $0x1c8] sm:$0xff]
    %v99 = vld [vmem:[%s0 + $0x1d0] sm:$0xff]
    %v100 = vld [vmem:[%s0 + $0x1d8] sm:$0xff]
    %v101 = vld [vmem:[%s0 + $0x1e0] sm:$0xff]
    %v102 = vld [vmem:[%s0 + $0x1e8] sm:$0xff]
    %v103 = vld [vmem:[%s0 + $0x1f0] sm:$0xff]
    %v104 = vld [vmem:[%s0 + $0x1f8] sm:$0xff]
    %v105 = vld [vmem:[%s0 + $0x200] sm:$0xff]
    %v106 = vld [vmem:[%s0 + $0x208] sm:$0xff]
    %v107 = vld [vmem:[%s0 + $0x210] sm:$0xff]
    %v108 = vld [vmem:[%s0 + $0x218] sm:$0xff]
    %v109 = vld [vmem:[%s0 + $0x220] sm:$0xff]
    %v110 = vld [vmem:[%s0 + $0x228] sm:$0xff]
    %v111 = vld [vmem:[%s0 + $0x230] sm:$0xff]
    %v112 = vld [vmem:[%s0 + $0x238] sm:$0xff]
    %v113 = vld [vmem:[%s0 + $0x240] sm:$0xff]
    %v114 = vld [vmem:[%s0 + $0x248] sm:$0xff]
    %v115 = vld [vmem:[%s0 + $0x250] sm:$0xff]
    %v116 = vld [vmem:[%s0 + $0x258] sm:$0xff]
    %v117 = vld [vmem:[%s0 + $0x260] sm:$0xff]
    %v118 = vld [vmem:[%s0 + $0x268] sm:$0xff]
    %v119 = vld [vmem:[%s0 + $0x270] sm:$0xff]
    %v120 = vld [vmem:[%s0 + $0x278] sm:$0xff]
    %v121 = vld [vmem:[%s0 + $0x280] sm:$0xff]
    %v122 = vld [vmem:[%s0 + $0x288] sm:$0xff]
    %v123 = vld [vmem:[%s0 + $0x290] sm:$0xff]
    %v124 = vld [vmem:[%s0 + $0x298] sm:$0xff]
    %v125 = vld [vmem:[%s0 + $0x2a0] sm:$0xff]
    %v126 = vld [vmem:[%s0 + $0x2a8] sm:$0xff]
    %v127 = vld [vmem:[%s0 + $0x2b0] sm:$0xff]
    %v128 = vld [vmem:[%s0 + $0x2b8] sm:$0xff]
    %v129 = vld [vmem:[%s0 + $0x2c0] sm:$0xff]
    %v130 = vld [vmem:[%s0 + $0x2c8] sm:$0xff]
    %v131 = vld [vmem:[%s0 + $0x2d0] sm:$0xff]
    %v132 = vld [vmem:[%s0 + $0x2d8] sm:$0xff]
    %v133 = vld [vmem:[%s0 + $0x2e0] sm:$0xff]
    %v134 = vld [vmem:[%s3] sm:$0xff]
    %v135 = vld [vmem:[%s3 + $0x8] sm:$0xff]
    %v136 = vld [vmem:[%s3 + $0x10] sm:$0xff]
    %v137 = vld [vmem:[%s3 + $0x18] sm:$0xff]
    %v138 = vld [vmem:[%s3 + $0x20] sm:$0xff]
    %v139 = vld [vmem:[%s3 + $0x28] sm:$0xff]
    %v140 = vld [vmem:[%s3 + $0x30] sm:$0xff]
    %v141 = vld [vmem:[%s3 + $0x38] sm:$0xff]
    %v142 = vld [vmem:[%s3 + $0x40] sm:$0xff]
    %v143 = vld [vmem:[%s3 + $0x48] sm:$0xff]
    %v144 = vld [vmem:[%s3 + $0x50] sm:$0xff]
    %v145 = vld [vmem:[%s3 + $0x58] sm:$0xff]
    %v146 = vld [vmem:[%s3 + $0x60] sm:$0xff]
    %v147 = vld [vmem:[%s3 + $0x68] sm:$0xff]
    %v148 = vld [vmem:[%s3 + $0x70] sm:$0xff]
    %v149 = vld [vmem:[%s3 + $0x78] sm:$0xff]
    %v150 = vld [vmem:[%s3 + $0x80] sm:$0xff]
    %v151 = vld [vmem:[%s3 + $0x88] sm:$0xff]
    %v152 = vld [vmem:[%s3 + $0x90] sm:$0xff]
    %v153 = vld [vmem:[%s3 + $0x98] sm:$0xff]
    %v154 = vld [vmem:[%s3 + $0xa0] sm:$0xff]
    %v155 = vld [vmem:[%s3 + $0xa8] sm:$0xff]
    %v156 = vld [vmem:[%s3 + $0xb0] sm:$0xff]
    %v157 = vld [vmem:[%s3 + $0xb8] sm:$0xff]
    %v158 = vld [vmem:[%s3 + $0xc0] sm:$0xff]
    %v159 = vld [vmem:[%s3 + $0xc8] sm:$0xff]
    %v160 = vld [vmem:[%s3 + $0xd0] sm:$0xff]
    %v161 = vld [vmem:[%s3 + $0xd8] sm:$0xff]
    %v162 = vld [vmem:[%s3 + $0xe0] sm:$0xff]
    %v163 = vld [vmem:[%s3 + $0xe8] sm:$0xff]
    %v164 = vld [vmem:[%s3 + $0xf0] sm:$0xff]
    %v165 = vld [vmem:[%s3 + $0xf8] sm:$0xff]
    %v166 = vld [vmem:[%s3 + $0x100] sm:$0xff]
    %v167 = vld [vmem:[%s3 + $0x108] sm:$0xff]
    %v168 = vld [vmem:[%s3 + $0x110] sm:$0xff]
    %v169 = vld [vmem:[%s3 + $0x118] sm:$0xff]
    %v170 = vld [vmem:[%s4] sm:$0x1]
    %v172 = vlaneseq
    %v173 = vshrl.u32 %v172, 7
    %v174 = vsub.s32 0, %v173
    %v175 = vrot.slane %v170, %v174
    %vm177 = vcmask 261120
    %v179 = vsel %vm177, %v43, 0
    %v182 = vsel %vm177, %v46, 0
    %v185 = vsel %vm177, %v49, 0
    %v188 = vsel %vm177, %v52, 0
    %v191 = vsel %vm177, %v55, 0
    %v194 = vsel %vm177, %v58, 0
    %v197 = vsel %vm177, %v61, 0
    %v200 = vsel %vm177, %v64, 0
    %v203 = vsel %vm177, %v67, 0
    %v206 = vsel %vm177, %v70, 0
    %v209 = vsel %vm177, %v73, 0
    %v212 = vsel %vm177, %v76, 0
    %v215 = vsel %vm177, %v79, 0
    %v218 = vsel %vm177, %v82, 0
    %v221 = vsel %vm177, %v85, 0
    %v224 = vsel %vm177, %v88, 0
    %v227 = vsel %vm177, %v91, 0
    %v230 = vsel %vm177, %v94, 0
    %v233 = vsel %vm177, %v97, 0
    %v236 = vsel %vm177, %v100, 0
    %v239 = vsel %vm177, %v103, 0
    %v242 = vsel %vm177, %v106, 0
    %v245 = vsel %vm177, %v109, 0
    %v248 = vsel %vm177, %v112, 0
    %v251 = vsel %vm177, %v115, 0
    %v254 = vsel %vm177, %v118, 0
    %v257 = vsel %vm177, %v121, 0
    %v260 = vsel %vm177, %v124, 0
    %v263 = vsel %vm177, %v127, 0
    %v266 = vsel %vm177, %v130, 0
    %v269 = vsel %vm177, %v133, 0
    %271 = vmatprep.subr.mxu0 0.0
    %272 = vmatpush1.msra.mxu0 %v134
    %273 = vmatprep.subr.mxu0 0.0
    %274 = vmatpush1.msra.mxu0 %v135
    %275 = vmatprep.subr.mxu0 0.0
    %276 = vmatpush1.msra.mxu0 %v136
    %277 = vmatprep.subr.mxu0 0.0
    %278 = vmatpush1.msra.mxu0 %v137
    %279 = vmatprep.subr.mxu0 0.0
    %280 = vmatpush1.msra.mxu0 %v138
    %281 = vmatprep.subr.mxu0 0.0
    %282 = vmatpush1.msra.mxu0 %v139
    %283 = vmatprep.subr.mxu0 0.0
    %284 = vmatpush1.msra.mxu0 %v140
    %285 = vmatprep.subr.mxu0 0.0
    %286 = vmatpush1.msra.mxu0 %v141
    %287 = vmatprep.subr.mxu0 0.0
    %288 = vmatpush1.msra.mxu0 %v142
    %289 = vmatprep.subr.mxu0 0.0
    %290 = vmatpush1.msra.mxu0 %v143
    %291 = vmatprep.subr.mxu0 0.0
    %292 = vmatpush1.msra.mxu0 %v144
    %293 = vmatprep.subr.mxu0 0.0
    %294 = vmatpush1.msra.mxu0 %v145
    %295 = vmatprep.subr.mxu0 0.0
    %296 = vmatpush1.msra.mxu0 %v146
    %297 = vmatprep.subr.mxu0 0.0
    %298 = vmatpush1.msra.mxu0 %v147
    %299 = vmatprep.subr.mxu0 0.0
    %300 = vmatpush1.msra.mxu0 %v148
    %301 = vmatprep.subr.mxu0 0.0
    %302 = vmatpush1.msra.mxu0 %v149
    %303 = vmatprep.subr.mxu0 0.0
    %304 = vmatpush1.msra.mxu0 %v150
    %305 = vmatprep.subr.mxu0 0.0
    %306 = vmatpush1.msra.mxu0 %v151
    %307 = vmatprep.subr.mxu0 0.0
    %308 = vmatpush1.msra.mxu0 %v152
    %309 = vmatprep.subr.mxu0 0.0
    %310 = vmatpush1.msra.mxu0 %v153
    %311 = vmatprep.subr.mxu0 0.0
    %312 = vmatpush1.msra.mxu0 %v154
    %313 = vmatprep.subr.mxu0 0.0
    %314 = vmatpush1.msra.mxu0 %v155
    %315 = vmatprep.subr.mxu0 0.0
    %316 = vmatpush1.msra.mxu0 %v156
    %317 = vmatprep.subr.mxu0 0.0
    %318 = vmatpush1.msra.mxu0 %v157
    %319 = vmatprep.subr.mxu0 0.0
    %320 = vmatpush1.msra.mxu0 %v158
    %321 = vmatprep.subr.mxu0 0.0
    %322 = vmatpush1.msra.mxu0 %v159
    %323 = vmatprep.subr.mxu0 0.0
    %324 = vmatpush1.msra.mxu0 %v160
    %325 = vmatprep.subr.mxu0 0.0
    %326 = vmatpush1.msra.mxu0 %v161
    %327 = vmatprep.subr.mxu0 0.0
    %328 = vmatpush1.msra.mxu0 %v162
    %329 = vmatprep.subr.mxu0 0.0
    %330 = vmatpush1.msra.mxu0 %v163
    %331 = vmatprep.subr.mxu0 0.0
    %332 = vmatpush1.msra.mxu0 %v164
    %333 = vmatprep.subr.mxu0 0.0
    %334 = vmatpush1.msra.mxu0 %v165
    %335 = vmatprep.mubr.f32.mxu0 %v42
    %336 = vmatmul.mubr.f32.gmra.mrb[0].mxu0 %v41
    %v337 = vpop.f32.mrb[0].mxu0
    %v338 = vadd.f32 %v175, %v337
    %v339 = vpop.f32.mrb[0].mxu0
    %340 = vmatprep.mubr.f32.mxu0 %v45
    %341 = vmatmul.mubr.f32.gmra.mrb[0].mxu0 %v44
    %v342 = vpop.f32.mrb[0].mxu0
    %v343 = vadd.f32 %v175, %v342
    %v344 = vpop.f32.mrb[0].mxu0
    %345 = vmatprep.mubr.f32.mxu0 %v48
    %346 = vmatmul.mubr.f32.gmra.mrb[0].mxu0 %v47
    %v347 = vpop.f32.mrb[0].mxu0
    %v348 = vadd.f32 %v175, %v347
    %v349 = vpop.f32.mrb[0].mxu0
    %350 = vmatprep.mubr.f32.mxu0 %v51
    %351 = vmatmul.mubr.f32.gmra.mrb[0].mxu0 %v50
    %v352 = vpop.f32.mrb[0].mxu0
    %v353 = vadd.f32 %v175, %v352
    %v354 = vpop.f32.mrb[0].mxu0
    %355 = vmatprep.mubr.f32.mxu0 %v54
    %356 = vmatmul.mubr.f32.gmra.mrb[0].mxu0 %v53
    %v357 = vpop.f32.mrb[0].mxu0
    %v358 = vadd.f32 %v175, %v357
    %v359 = vpop.f32.mrb[0].mxu0
    %360 = vmatprep.mubr.f32.mxu0 %v57
    %361 = vmatmul.mubr.f32.gmra.mrb[0].mxu0 %v56
    %v362 = vpop.f32.mrb[0].mxu0
    %v363 = vadd.f32 %v175, %v362
    %v364 = vpop.f32.mrb[0].mxu0
    %365 = vmatprep.mubr.f32.mxu0 %v60
    %366 = vmatmul.mubr.f32.gmra.mrb[0].mxu0 %v59
    %v367 = vpop.f32.mrb[0].mxu0
    %v368 = vadd.f32 %v175, %v367
    %v369 = vpop.f32.mrb[0].mxu0
    %370 = vmatprep.mubr.f32.mxu0 %v63
    %371 = vmatmul.mubr.f32.gmra.mrb[0].mxu0 %v62
    %v372 = vpop.f32.mrb[0].mxu0
    %v373 = vadd.f32 %v175, %v372
    %v374 = vpop.f32.mrb[0].mxu0
    %375 = vmatprep.mubr.f32.mxu0 %v66
    %376 = vmatmul.mubr.f32.gmra.mrb[0].mxu0 %v65
    %v377 = vpop.f32.mrb[0].mxu0
    %v378 = vadd.f32 %v175, %v377
    %v379 = vpop.f32.mrb[0].mxu0
    %380 = vmatprep.mubr.f32.mxu0 %v69
    %381 = vmatmul.mubr.f32.gmra.mrb[0].mxu0 %v68
    %v382 = vpop.f32.mrb[0].mxu0
    %v383 = vadd.f32 %v175, %v382
    %v384 = vpop.f32.mrb[0].mxu0
    %385 = vmatprep.mubr.f32.mxu0 %v72
    %386 = vmatmul.mubr.f32.gmra.mrb[0].mxu0 %v71
    %v387 = vpop.f32.mrb[0].mxu0
    %v388 = vadd.f32 %v175, %v387
    %v389 = vpop.f32.mrb[0].mxu0
    %390 = vmatprep.mubr.f32.mxu0 %v75
    %391 = vmatmul.mubr.f32.gmra.mrb[0].mxu0 %v74
    %v392 = vpop.f32.mrb[0].mxu0
    %v393 = vadd.f32 %v175, %v392
    %v394 = vpop.f32.mrb[0].mxu0
    %395 = vmatprep.mubr.f32.mxu0 %v78
    %396 = vmatmul.mubr.f32.gmra.mrb[0].mxu0 %v77
    %v397 = vpop.f32.mrb[0].mxu0
    %v398 = vadd.f32 %v175, %v397
    %v399 = vpop.f32.mrb[0].mxu0
    %400 = vmatprep.mubr.f32.mxu0 %v81
    %401 = vmatmul.mubr.f32.gmra.mrb[0].mxu0 %v80
    %v402 = vpop.f32.mrb[0].mxu0
    %v403 = vadd.f32 %v175, %v402
    %v404 = vpop.f32.mrb[0].mxu0
    %405 = vmatprep.mubr.f32.mxu0 %v84
    %406 = vmatmul.mubr.f32.gmra.mrb[0].mxu0 %v83
    %v407 = vpop.f32.mrb[0].mxu0
    %v408 = vadd.f32 %v175, %v407
    %v409 = vpop.f32.mrb[0].mxu0
    %410 = vmatprep.mubr.f32.mxu0 %v87
    %411 = vmatmul.mubr.f32.gmra.mrb[0].mxu0 %v86
    %v412 = vpop.f32.mrb[0].mxu0
    %v413 = vadd.f32 %v175, %v412
    %v414 = vpop.f32.mrb[0].mxu0
    %415 = vmatprep.mubr.f32.mxu0 %v90
    %416 = vmatmul.mubr.f32.gmra.mrb[0].mxu0 %v89
    %v417 = vpop.f32.mrb[0].mxu0
    %v418 = vadd.f32 %v175, %v417
    %v419 = vpop.f32.mrb[0].mxu0
    %420 = vmatprep.mubr.f32.mxu0 %v93
    %421 = vmatmul.mubr.f32.gmra.mrb[0].mxu0 %v92
    %v422 = vpop.f32.mrb[0].mxu0
    %v423 = vadd.f32 %v175, %v422
    %v424 = vpop.f32.mrb[0].mxu0
    %425 = vmatprep.mubr.f32.mxu0 %v96
    %426 = vmatmul.mubr.f32.gmra.mrb[0].mxu0 %v95
    %v427 = vpop.f32.mrb[0].mxu0
    %v428 = vadd.f32 %v175, %v427
    %v429 = vpop.f32.mrb[0].mxu0
    %430 = vmatprep.mubr.f32.mxu0 %v99
    %431 = vmatmul.mubr.f32.gmra.mrb[0].mxu0 %v98
    %v432 = vpop.f32.mrb[0].mxu0
    %v433 = vadd.f32 %v175, %v432
    %v434 = vpop.f32.mrb[0].mxu0
    %435 = vmatprep.mubr.f32.mxu0 %v102
    %436 = vmatmul.mubr.f32.gmra.mrb[0].mxu0 %v101
    %v437 = vpop.f32.mrb[0].mxu0
    %v438 = vadd.f32 %v175, %v437
    %v439 = vpop.f32.mrb[0].mxu0
    %440 = vmatprep.mubr.f32.mxu0 %v105
    %441 = vmatmul.mubr.f32.gmra.mrb[0].mxu0 %v104
    %v442 = vpop.f32.mrb[0].mxu0
    %v443 = vadd.f32 %v175, %v442
    %v444 = vpop.f32.mrb[0].mxu0
    %445 = vmatprep.mubr.f32.mxu0 %v108
    %446 = vmatmul.mubr.f32.gmra.mrb[0].mxu0 %v107
    %v447 = vpop.f32.mrb[0].mxu0
    %v448 = vadd.f32 %v175, %v447
    %v449 = vpop.f32.mrb[0].mxu0
    %450 = vmatprep.mubr.f32.mxu0 %v111
    %451 = vmatmul.mubr.f32.gmra.mrb[0].mxu0 %v110
    %v452 = vpop.f32.mrb[0].mxu0
    %v453 = vadd.f32 %v175, %v452
    %v454 = vpop.f32.mrb[0].mxu0
    %455 = vmatprep.mubr.f32.mxu0 %v114
    %456 = vmatmul.mubr.f32.gmra.mrb[0].mxu0 %v113
    %v457 = vpop.f32.mrb[0].mxu0
    %v458 = vadd.f32 %v175, %v457
    %v459 = vpop.f32.mrb[0].mxu0
    %460 = vmatprep.mubr.f32.mxu0 %v117
    %461 = vmatmul.mubr.f32.gmra.mrb[0].mxu0 %v116
    %v462 = vpop.f32.mrb[0].mxu0
    %v463 = vadd.f32 %v175, %v462
    %v464 = vpop.f32.mrb[0].mxu0
    %465 = vmatprep.mubr.f32.mxu0 %v120
    %466 = vmatmul.mubr.f32.gmra.mrb[0].mxu0 %v119
    %v467 = vpop.f32.mrb[0].mxu0
    %v468 = vadd.f32 %v175, %v467
    %v469 = vpop.f32.mrb[0].mxu0
    %470 = vmatprep.mubr.f32.mxu0 %v123
    %471 = vmatmul.mubr.f32.gmra.mrb[0].mxu0 %v122
    %v472 = vpop.f32.mrb[0].mxu0
    %v473 = vadd.f32 %v175, %v472
    %v474 = vpop.f32.mrb[0].mxu0
    %475 = vmatprep.mubr.f32.mxu0 %v126
    %476 = vmatmul.mubr.f32.gmra.mrb[0].mxu0 %v125
    %v477 = vpop.f32.mrb[0].mxu0
    %v478 = vadd.f32 %v175, %v477
    %v479 = vpop.f32.mrb[0].mxu0
    %480 = vmatprep.mubr.f32.mxu0 %v129
    %481 = vmatmul.mubr.f32.gmra.mrb[0].mxu0 %v128
    %v482 = vpop.f32.mrb[0].mxu0
    %v483 = vadd.f32 %v175, %v482
    %v484 = vpop.f32.mrb[0].mxu0
    %485 = vmatprep.mubr.f32.mxu0 %v132
    %486 = vmatmul.mubr.f32.gmra.mrb[0].mxu0 %v131
    %v487 = vpop.f32.mrb[0].mxu0
    %v488 = vadd.f32 %v175, %v487
    %v489 = vpop.f32.mrb[0].mxu0
    %490 = vdwg.mxu0
    %491 = vmatprep.subr.mxu0 0.0
    %492 = vmatpush1.msra.mxu0 %v166
    %493 = vmatprep.subr.mxu0 0.0
    %494 = vmatpush1.msra.mxu0 %v167
    %495 = vmatprep.subr.mxu0 0.0
    %496 = vmatpush1.msra.mxu0 %v168
    %497 = vmatprep.subr.mxu0 0.0
    %498 = vmatpush1.msra.mxu0 %v169
    %499 = vmatprep.subr.mxu0 0.0
    %500 = vmatpush1.msra.mxu0 0.0
    %501 = vmatprep.subr.mxu0 0.0
    %502 = vmatpush1.msra.mxu0 0.0
    %503 = vmatprep.subr.mxu0 0.0
    %504 = vmatpush1.msra.mxu0 0.0
    %505 = vmatprep.subr.mxu0 0.0
    %506 = vmatpush1.msra.mxu0 0.0
    %507 = vmatprep.subr.mxu0 0.0
    %508 = vmatpush1.msra.mxu0 0.0
    %509 = vmatprep.subr.mxu0 0.0
    %510 = vmatpush1.msra.mxu0 0.0
    %511 = vmatprep.subr.mxu0 0.0
    %512 = vmatpush1.msra.mxu0 0.0
    %513 = vmatprep.subr.mxu0 0.0
    %514 = vmatpush1.msra.mxu0 0.0
    %515 = vmatprep.subr.mxu0 0.0
    %516 = vmatpush1.msra.mxu0 0.0
    %517 = vmatprep.subr.mxu0 0.0
    %518 = vmatpush1.msra.mxu0 0.0
    %519 = vmatprep.subr.mxu0 0.0
    %520 = vmatpush1.msra.mxu0 0.0
    %521 = vmatprep.subr.mxu0 0.0
    %522 = vmatpush1.msra.mxu0 0.0
    %523 = vmatprep.subr.mxu0 0.0
    %524 = vmatpush1.msra.mxu0 0.0
    %525 = vmatprep.subr.mxu0 0.0
    %526 = vmatpush1.msra.mxu0 0.0
    %527 = vmatprep.subr.mxu0 0.0
    %528 = vmatpush1.msra.mxu0 0.0
    %529 = vmatprep.subr.mxu0 0.0
    %530 = vmatpush1.msra.mxu0 0.0
    %531 = vmatprep.subr.mxu0 0.0
    %532 = vmatpush1.msra.mxu0 0.0
    %533 = vmatprep.subr.mxu0 0.0
    %534 = vmatpush1.msra.mxu0 0.0
    %535 = vmatprep.subr.mxu0 0.0
    %536 = vmatpush1.msra.mxu0 0.0
    %537 = vmatprep.subr.mxu0 0.0
    %538 = vmatpush1.msra.mxu0 0.0
    %539 = vmatprep.subr.mxu0 0.0
    %540 = vmatpush1.msra.mxu0 0.0
    %541 = vmatprep.subr.mxu0 0.0
    %542 = vmatpush1.msra.mxu0 0.0
    %543 = vmatprep.subr.mxu0 0.0
    %544 = vmatpush1.msra.mxu0 0.0
    %545 = vmatprep.subr.mxu0 0.0
    %546 = vmatpush1.msra.mxu0 0.0
    %547 = vmatprep.subr.mxu0 0.0
    %548 = vmatpush1.msra.mxu0 0.0
    %549 = vmatprep.subr.mxu0 0.0
    %550 = vmatpush1.msra.mxu0 0.0
    %551 = vmatprep.subr.mxu0 0.0
    %552 = vmatpush1.msra.mxu0 0.0
    %553 = vmatprep.subr.mxu0 0.0
    %554 = vmatpush1.msra.mxu0 0.0
    %555 = vmatprep.mubr.f32.mxu0 0.0
    %556 = vmatmul.mubr.f32.gmra.mrb[0].mxu0 %v179
    %v557 = vpop.f32.mrb[0].mxu0
    %v558 = vadd.f32 %v338, %v557
    %v559 = vpop.f32.mrb[0].mxu0
    %560 = vmatprep.mubr.f32.mxu0 0.0
    %561 = vmatmul.mubr.f32.gmra.mrb[0].mxu0 %v182
    %v562 = vpop.f32.mrb[0].mxu0
    %v563 = vadd.f32 %v343, %v562
    %v564 = vpop.f32.mrb[0].mxu0
    %565 = vmatprep.mubr.f32.mxu0 0.0
    %566 = vmatmul.mubr.f32.gmra.mrb[0].mxu0 %v185
    %v567 = vpop.f32.mrb[0].mxu0
    %v568 = vadd.f32 %v348, %v567
    %v569 = vpop.f32.mrb[0].mxu0
    %570 = vmatprep.mubr.f32.mxu0 0.0
    %571 = vmatmul.mubr.f32.gmra.mrb[0].mxu0 %v188
    %v572 = vpop.f32.mrb[0].mxu0
    %v573 = vadd.f32 %v353, %v572
    %v574 = vpop.f32.mrb[0].mxu0
    %575 = vmatprep.mubr.f32.mxu0 0.0
    %576 = vmatmul.mubr.f32.gmra.mrb[0].mxu0 %v191
    %v577 = vpop.f32.mrb[0].mxu0
    %v578 = vadd.f32 %v358, %v577
    %v579 = vpop.f32.mrb[0].mxu0
    %580 = vmatprep.mubr.f32.mxu0 0.0
    %581 = vmatmul.mubr.f32.gmra.mrb[0].mxu0 %v194
    %v582 = vpop.f32.mrb[0].mxu0
    %v583 = vadd.f32 %v363, %v582
    %v584 = vpop.f32.mrb[0].mxu0
    %585 = vmatprep.mubr.f32.mxu0 0.0
    %586 = vmatmul.mubr.f32.gmra.mrb[0].mxu0 %v197
    %v587 = vpop.f32.mrb[0].mxu0
    %v588 = vadd.f32 %v368, %v587
    %v589 = vpop.f32.mrb[0].mxu0
    %590 = vmatprep.mubr.f32.mxu0 0.0
    %591 = vmatmul.mubr.f32.gmra.mrb[0].mxu0 %v200
    %v592 = vpop.f32.mrb[0].mxu0
    %v593 = vadd.f32 %v373, %v592
    %v594 = vpop.f32.mrb[0].mxu0
    %595 = vmatprep.mubr.f32.mxu0 0.0
    %596 = vmatmul.mubr.f32.gmra.mrb[0].mxu0 %v203
    %v597 = vpop.f32.mrb[0].mxu0
    %v598 = vadd.f32 %v378, %v597
    %v599 = vpop.f32.mrb[0].mxu0
    %600 = vmatprep.mubr.f32.mxu0 0.0
    %601 = vmatmul.mubr.f32.gmra.mrb[0].mxu0 %v206
    %v602 = vpop.f32.mrb[0].mxu0
    %v603 = vadd.f32 %v383, %v602
    %v604 = vpop.f32.mrb[0].mxu0
    %605 = vmatprep.mubr.f32.mxu0 0.0
    %606 = vmatmul.mubr.f32.gmra.mrb[0].mxu0 %v209
    %v607 = vpop.f32.mrb[0].mxu0
    %v608 = vadd.f32 %v388, %v607
    %v609 = vpop.f32.mrb[0].mxu0
    %610 = vmatprep.mubr.f32.mxu0 0.0
    %611 = vmatmul.mubr.f32.gmra.mrb[0].mxu0 %v212
    %v612 = vpop.f32.mrb[0].mxu0
    %v613 = vadd.f32 %v393, %v612
    %v614 = vpop.f32.mrb[0].mxu0
    %615 = vmatprep.mubr.f32.mxu0 0.0
    %616 = vmatmul.mubr.f32.gmra.mrb[0].mxu0 %v215
    %v617 = vpop.f32.mrb[0].mxu0
    %v618 = vadd.f32 %v398, %v617
    %v619 = vpop.f32.mrb[0].mxu0
    %620 = vmatprep.mubr.f32.mxu0 0.0
    %621 = vmatmul.mubr.f32.gmra.mrb[0].mxu0 %v218
    %v622 = vpop.f32.mrb[0].mxu0
    %v623 = vadd.f32 %v403, %v622
    %v624 = vpop.f32.mrb[0].mxu0
    %625 = vmatprep.mubr.f32.mxu0 0.0
    %626 = vmatmul.mubr.f32.gmra.mrb[0].mxu0 %v221
    %v627 = vpop.f32.mrb[0].mxu0
    %v628 = vadd.f32 %v408, %v627
    %v629 = vpop.f32.mrb[0].mxu0
    %630 = vmatprep.mubr.f32.mxu0 0.0
    %631 = vmatmul.mubr.f32.gmra.mrb[0].mxu0 %v224
    %v632 = vpop.f32.mrb[0].mxu0
    %v633 = vadd.f32 %v413, %v632
    %v634 = vpop.f32.mrb[0].mxu0
    %635 = vmatprep.mubr.f32.mxu0 0.0
    %636 = vmatmul.mubr.f32.gmra.mrb[0].mxu0 %v227
    %v637 = vpop.f32.mrb[0].mxu0
    %v638 = vadd.f32 %v418, %v637
    %v639 = vpop.f32.mrb[0].mxu0
    %640 = vmatprep.mubr.f32.mxu0 0.0
    %641 = vmatmul.mubr.f32.gmra.mrb[0].mxu0 %v230
    %v642 = vpop.f32.mrb[0].mxu0
    %v643 = vadd.f32 %v423, %v642
    %v644 = vpop.f32.mrb[0].mxu0
    %645 = vmatprep.mubr.f32.mxu0 0.0
    %646 = vmatmul.mubr.f32.gmra.mrb[0].mxu0 %v233
    %v647 = vpop.f32.mrb[0].mxu0
    %v648 = vadd.f32 %v428, %v647
    %v649 = vpop.f32.mrb[0].mxu0
    %650 = vmatprep.mubr.f32.mxu0 0.0
    %651 = vmatmul.mubr.f32.gmra.mrb[0].mxu0 %v236
    %v652 = vpop.f32.mrb[0].mxu0
    %v653 = vadd.f32 %v433, %v652
    %v654 = vpop.f32.mrb[0].mxu0
    %655 = vmatprep.mubr.f32.mxu0 0.0
    %656 = vmatmul.mubr.f32.gmra.mrb[0].mxu0 %v239
    %v657 = vpop.f32.mrb[0].mxu0
    %v658 = vadd.f32 %v438, %v657
    %v659 = vpop.f32.mrb[0].mxu0
    %660 = vmatprep.mubr.f32.mxu0 0.0
    %661 = vmatmul.mubr.f32.gmra.mrb[0].mxu0 %v242
    %v662 = vpop.f32.mrb[0].mxu0
    %v663 = vadd.f32 %v443, %v662
    %v664 = vpop.f32.mrb[0].mxu0
    %665 = vmatprep.mubr.f32.mxu0 0.0
    %666 = vmatmul.mubr.f32.gmra.mrb[0].mxu0 %v245
    %v667 = vpop.f32.mrb[0].mxu0
    %v668 = vadd.f32 %v448, %v667
    %v669 = vpop.f32.mrb[0].mxu0
    %670 = vmatprep.mubr.f32.mxu0 0.0
    %671 = vmatmul.mubr.f32.gmra.mrb[0].mxu0 %v248
    %v672 = vpop.f32.mrb[0].mxu0
    %v673 = vadd.f32 %v453, %v672
    %v674 = vpop.f32.mrb[0].mxu0
    %675 = vmatprep.mubr.f32.mxu0 0.0
    %676 = vmatmul.mubr.f32.gmra.mrb[0].mxu0 %v251
    %v677 = vpop.f32.mrb[0].mxu0
    %v678 = vadd.f32 %v458, %v677
    %v679 = vpop.f32.mrb[0].mxu0
    %680 = vmatprep.mubr.f32.mxu0 0.0
    %681 = vmatmul.mubr.f32.gmra.mrb[0].mxu0 %v254
    %v682 = vpop.f32.mrb[0].mxu0
    %v683 = vadd.f32 %v463, %v682
    %v684 = vpop.f32.mrb[0].mxu0
    %685 = vmatprep.mubr.f32.mxu0 0.0
    %686 = vmatmul.mubr.f32.gmra.mrb[0].mxu0 %v257
    %v687 = vpop.f32.mrb[0].mxu0
    %v688 = vadd.f32 %v468, %v687
    %v689 = vpop.f32.mrb[0].mxu0
    %690 = vmatprep.mubr.f32.mxu0 0.0
    %691 = vmatmul.mubr.f32.gmra.mrb[0].mxu0 %v260
    %v692 = vpop.f32.mrb[0].mxu0
    %v693 = vadd.f32 %v473, %v692
    %v694 = vpop.f32.mrb[0].mxu0
    %695 = vmatprep.mubr.f32.mxu0 0.0
    %696 = vmatmul.mubr.f32.gmra.mrb[0].mxu0 %v263
    %v697 = vpop.f32.mrb[0].mxu0
    %v698 = vadd.f32 %v478, %v697
    %v699 = vpop.f32.mrb[0].mxu0
    %700 = vmatprep.mubr.f32.mxu0 0.0
    %701 = vmatmul.mubr.f32.gmra.mrb[0].mxu0 %v266
    %v702 = vpop.f32.mrb[0].mxu0
    %v703 = vadd.f32 %v483, %v702
    %v704 = vpop.f32.mrb[0].mxu0
    %705 = vmatprep.mubr.f32.mxu0 0.0
    %706 = vmatmul.mubr.f32.gmra.mrb[0].mxu0 %v269
    %v707 = vpop.f32.mrb[0].mxu0
    %v708 = vadd.f32 %v488, %v707
    %v709 = vpop.f32.mrb[0].mxu0
    %710 = vdwg.mxu0
    %v711 = vmax.f32 %v558, 0.0
    %v712 = vmax.f32 %v563, 0.0
    %v713 = vmax.f32 %v568, 0.0
    %v714 = vmax.f32 %v573, 0.0
    %v715 = vmax.f32 %v578, 0.0
    %v716 = vmax.f32 %v583, 0.0
    %v717 = vmax.f32 %v588, 0.0
    %v718 = vmax.f32 %v593, 0.0
    %v719 = vmax.f32 %v598, 0.0
    %v720 = vmax.f32 %v603, 0.0
    %v721 = vmax.f32 %v608, 0.0
    %v722 = vmax.f32 %v613, 0.0
    %v723 = vmax.f32 %v618, 0.0
    %v724 = vmax.f32 %v623, 0.0
    %v725 = vmax.f32 %v628, 0.0
    %v726 = vmax.f32 %v633, 0.0
    %v727 = vmax.f32 %v638, 0.0
    %v728 = vmax.f32 %v643, 0.0
    %v729 = vmax.f32 %v648, 0.0
    %v730 = vmax.f32 %v653, 0.0
    %v731 = vmax.f32 %v658, 0.0
    %v732 = vmax.f32 %v663, 0.0
    %v733 = vmax.f32 %v668, 0.0
    %v734 = vmax.f32 %v673, 0.0
    %v735 = vmax.f32 %v678, 0.0
    %v736 = vmax.f32 %v683, 0.0
    %v737 = vmax.f32 %v688, 0.0
    %v738 = vmax.f32 %v693, 0.0
    %v739 = vmax.f32 %v698, 0.0
    %v740 = vmax.f32 %v703, 0.0
    %v741 = vmax.f32 %v708, 0.0
    %v742 = vld [vmem:[%s1] sm:$0xf]
    %v745 = vunpack.c.l.s4 1983009808
    %v746 = vunpack.c.0.s8 %v745
    %v747 = vlaneseq
    %v748 = vshrl.u32 %v747, 7
    %v749 = vsub.s32 %v746, %v748
    %v750 = vrot.slane %v742, %v749
    %v751 = vcombine.high %v750, %v750
    %vm753 = vcmask 982016
    %v754 = vsel %vm753, %v751, 0
    %756 = vmatprep.subr.mxu0 0.0
    %757 = vmatpush1.msra.mxu0 %v711
    %758 = vmatprep.subr.mxu0 0.0
    %759 = vmatpush1.msra.mxu0 %v712
    %760 = vmatprep.subr.mxu0 0.0
    %761 = vmatpush1.msra.mxu0 %v713
    %762 = vmatprep.subr.mxu0 0.0
    %763 = vmatpush1.msra.mxu0 %v714
    %764 = vmatprep.subr.mxu0 0.0
    %765 = vmatpush1.msra.mxu0 %v715
    %766 = vmatprep.subr.mxu0 0.0
    %767 = vmatpush1.msra.mxu0 %v716
    %768 = vmatprep.subr.mxu0 0.0
    %769 = vmatpush1.msra.mxu0 %v717
    %770 = vmatprep.subr.mxu0 0.0
    %771 = vmatpush1.msra.mxu0 %v718
    %772 = vmatprep.subr.mxu0 0.0
    %773 = vmatpush1.msra.mxu0 %v719
    %774 = vmatprep.subr.mxu0 0.0
    %775 = vmatpush1.msra.mxu0 %v720
    %776 = vmatprep.subr.mxu0 0.0
    %777 = vmatpush1.msra.mxu0 %v721
    %778 = vmatprep.subr.mxu0 0.0
    %779 = vmatpush1.msra.mxu0 %v722
    %780 = vmatprep.subr.mxu0 0.0
    %781 = vmatpush1.msra.mxu0 %v723
    %782 = vmatprep.subr.mxu0 0.0
    %783 = vmatpush1.msra.mxu0 %v724
    %784 = vmatprep.subr.mxu0 0.0
    %785 = vmatpush1.msra.mxu0 %v725
    %786 = vmatprep.subr.mxu0 0.0
    %787 = vmatpush1.msra.mxu0 %v726
    %788 = vmatprep.subr.mxu0 0.0
    %789 = vmatpush1.msra.mxu0 %v727
    %790 = vmatprep.subr.mxu0 0.0
    %791 = vmatpush1.msra.mxu0 %v728
    %792 = vmatprep.subr.mxu0 0.0
    %793 = vmatpush1.msra.mxu0 %v729
    %794 = vmatprep.subr.mxu0 0.0
    %795 = vmatpush1.msra.mxu0 %v730
    %796 = vmatprep.subr.mxu0 0.0
    %797 = vmatpush1.msra.mxu0 %v731
    %798 = vmatprep.subr.mxu0 0.0
    %799 = vmatpush1.msra.mxu0 %v732
    %800 = vmatprep.subr.mxu0 0.0
    %801 = vmatpush1.msra.mxu0 %v733
    %802 = vmatprep.subr.mxu0 0.0
    %803 = vmatpush1.msra.mxu0 %v734
    %804 = vmatprep.subr.mxu0 0.0
    %805 = vmatpush1.msra.mxu0 %v735
    %806 = vmatprep.subr.mxu0 0.0
    %807 = vmatpush1.msra.mxu0 %v736
    %808 = vmatprep.subr.mxu0 0.0
    %809 = vmatpush1.msra.mxu0 %v737
    %810 = vmatprep.subr.mxu0 0.0
    %811 = vmatpush1.msra.mxu0 %v738
    %812 = vmatprep.subr.mxu0 0.0
    %813 = vmatpush1.msra.mxu0 %v739
    %814 = vmatprep.subr.mxu0 0.0
    %815 = vmatpush1.msra.mxu0 %v740
    %816 = vmatprep.subr.mxu0 0.0
    %817 = vmatpush1.msra.mxu0 %v741
    %818 = vmatprep.subr.mxu0 0.0
    %819 = vmatpush1.msra.mxu0 0.0
    %820 = vmatprep.mubr.f32.mxu0 %v754
    %821 = vmatmul.mubr.f32.gmra.mrb[0].mxu0 %v750
    %v822 = vpop.f32.mrb[0].mxu0
    %v823 = vadd.f32 0.0, %v822
    %v824 = vpop.f32.mrb[0].mxu0
    %825 = vdwg.mxu0
    %v826 = vld [vmem:[%s5] sm:$0xff]
    %v827 = vld [vmem:[%s5 + $0x8] sm:$0xff]
    %v828 = vld [vmem:[%s5 + $0x10] sm:$0xff]
    %v829 = vld [vmem:[%s5 + $0x18] sm:$0xff]
    %v830 = vld [vmem:[%s5 + $0x20] sm:$0xff]
    %v831 = vld [vmem:[%s5 + $0x28] sm:$0xff]
    %v832 = vld [vmem:[%s5 + $0x30] sm:$0xff]
    %v833 = vld [vmem:[%s5 + $0x38] sm:$0xff]
    %v834 = vld [vmem:[%s6] sm:$0x1]
    %v836 = vlaneseq
    %v837 = vshrl.u32 %v836, 7
    %v838 = vsub.s32 0, %v837
    %v839 = vrot.slane %v834, %v838
    %vm841 = vcmask 523264
    %v843 = vsel %vm841, %v823, 0
    %845 = vmatprep.subr.mxu0 0.0
    %846 = vmatpush1.msra.mxu0 %v826
    %847 = vmatprep.subr.mxu0 0.0
    %848 = vmatpush1.msra.mxu0 %v827
    %849 = vmatprep.subr.mxu0 0.0
    %850 = vmatpush1.msra.mxu0 %v828
    %851 = vmatprep.subr.mxu0 0.0
    %852 = vmatpush1.msra.mxu0 %v829
    %853 = vmatprep.subr.mxu0 0.0
    %854 = vmatpush1.msra.mxu0 %v830
    %855 = vmatprep.subr.mxu0 0.0
    %856 = vmatpush1.msra.mxu0 %v831
    %857 = vmatprep.subr.mxu0 0.0
    %858 = vmatpush1.msra.mxu0 %v832
    %859 = vmatprep.subr.mxu0 0.0
    %860 = vmatpush1.msra.mxu0 %v833
    %861 = vmatprep.subr.mxu0 0.0
    %862 = vmatpush1.msra.mxu0 0.0
    %863 = vmatprep.subr.mxu0 0.0
    %864 = vmatpush1.msra.mxu0 0.0
    %865 = vmatprep.subr.mxu0 0.0
    %866 = vmatpush1.msra.mxu0 0.0
    %867 = vmatprep.subr.mxu0 0.0
    %868 = vmatpush1.msra.mxu0 0.0
    %869 = vmatprep.subr.mxu0 0.0
    %870 = vmatpush1.msra.mxu0 0.0
    %871 = vmatprep.subr.mxu0 0.0
    %872 = vmatpush1.msra.mxu0 0.0
    %873 = vmatprep.subr.mxu0 0.0
    %874 = vmatpush1.msra.mxu0 0.0
    %875 = vmatprep.subr.mxu0 0.0
    %876 = vmatpush1.msra.mxu0 0.0
    %877 = vmatprep.subr.mxu0 0.0
    %878 = vmatpush1.msra.mxu0 0.0
    %879 = vmatprep.subr.mxu0 0.0
    %880 = vmatpush1.msra.mxu0 0.0
    %881 = vmatprep.subr.mxu0 0.0
    %882 = vmatpush1.msra.mxu0 0.0
    %883 = vmatprep.subr.mxu0 0.0
    %884 = vmatpush1.msra.mxu0 0.0
    %885 = vmatprep.subr.mxu0 0.0
    %886 = vmatpush1.msra.mxu0 0.0
    %887 = vmatprep.subr.mxu0 0.0
    %888 = vmatpush1.msra.mxu0 0.0
    %889 = vmatprep.subr.mxu0 0.0
    %890 = vmatpush1.msra.mxu0 0.0
    %891 = vmatprep.subr.mxu0 0.0
    %892 = vmatpush1.msra.mxu0 0.0
    %893 = vmatprep.subr.mxu0 0.0
    %894 = vmatpush1.msra.mxu0 0.0
    %895 = vmatprep.subr.mxu0 0.0
    %896 = vmatpush1.msra.mxu0 0.0
    %897 = vmatprep.subr.mxu0 0.0
    %898 = vmatpush1.msra.mxu0 0.0
    %899 = vmatprep.subr.mxu0 0.0
    %900 = vmatpush1.msra.mxu0 0.0
    %901 = vmatprep.subr.mxu0 0.0
    %902 = vmatpush1.msra.mxu0 0.0
    %903 = vmatprep.subr.mxu0 0.0
    %904 = vmatpush1.msra.mxu0 0.0
    %905 = vmatprep.subr.mxu0 0.0
    %906 = vmatpush1.msra.mxu0 0.0
    %907 = vmatprep.subr.mxu0 0.0
    %908 = vmatpush1.msra.mxu0 0.0
    %909 = vmatprep.mubr.f32.mxu0 0.0
    %910 = vmatmul.mubr.f32.gmra.mrb[0].mxu0 %v843
    %v911 = vpop.f32.mrb[0].mxu0
    %v912 = vadd.f32 %v839, %v911
    %v913 = vpop.f32.mrb[0].mxu0
    %914 = vdwg.mxu0
    %vm915 = vcmask 254976
    %916 = vst.msk [vmem:[#allocation2] sm:$0x3] %vm915, 0.0
    %s917 = scalar_lea.vmem [#allocation2], 2
    %918 = vst.msk [vmem:[%s917] sm:$0x3] %vm915, %v912
    %919 = vst.msk [vmem:[#allocation4] sm:$0x3] %vm915, 0.0
    %920 = vst.msk [vmem:[#allocation4 + $0x2] sm:$0x3] %vm915, 0.0
    %v921 = vld [vmem:[%s2] sm:$0x3]
    %v922 = vld [vmem:[%s7] sm:$0xff]
    %v923 = vld [vmem:[%s7 + $0x8] sm:$0xff]
    %v924 = vld [vmem:[%s7 + $0x10] sm:$0xff]
    %v925 = vld [vmem:[%s7 + $0x18] sm:$0xff]
    %v926 = vld [vmem:[%s7 + $0x20] sm:$0xff]
    %v927 = vld [vmem:[%s7 + $0x28] sm:$0xff]
    %v928 = vld [vmem:[%s7 + $0x30] sm:$0xff]
    %v929 = vld [vmem:[%s7 + $0x38] sm:$0xff]
    %v930 = vld [vmem:[%s8] sm:$0x1]
    %932 = vrot.lane.b32.xlu0 %v912, 32
    %v933 = vpop.permute.xlu0 %932
    %v935 = vsel %vm177, 0.0, %v933
    %v937 = vlaneseq
    %v938 = vshrl.u32 %v937, 7
    %v939 = vsub.s32 0, %v938
    %v940 = vrot.slane %v930, %v939
    %v943 = vsel %vm841, %v935, 0
    %945 = vmatprep.subr.mxu0 0.0
    %946 = vmatpush1.msra.mxu0 %v922
    %947 = vmatprep.subr.mxu0 0.0
    %948 = vmatpush1.msra.mxu0 %v923
    %949 = vmatprep.subr.mxu0 0.0
    %950 = vmatpush1.msra.mxu0 %v924
    %951 = vmatprep.subr.mxu0 0.0
    %952 = vmatpush1.msra.mxu0 %v925
    %953 = vmatprep.subr.mxu0 0.0
    %954 = vmatpush1.msra.mxu0 %v926
    %955 = vmatprep.subr.mxu0 0.0
    %956 = vmatpush1.msra.mxu0 %v927
    %957 = vmatprep.subr.mxu0 0.0
    %958 = vmatpush1.msra.mxu0 %v928
    %959 = vmatprep.subr.mxu0 0.0
    %960 = vmatpush1.msra.mxu0 %v929
    %961 = vmatprep.subr.mxu0 0.0
    %962 = vmatpush1.msra.mxu0 0.0
    %963 = vmatprep.subr.mxu0 0.0
    %964 = vmatpush1.msra.mxu0 0.0
    %965 = vmatprep.subr.mxu0 0.0
    %966 = vmatpush1.msra.mxu0 0.0
    %967 = vmatprep.subr.mxu0 0.0
    %968 = vmatpush1.msra.mxu0 0.0
    %969 = vmatprep.subr.mxu0 0.0
    %970 = vmatpush1.msra.mxu0 0.0
    %971 = vmatprep.subr.mxu0 0.0
    %972 = vmatpush1.msra.mxu0 0.0
    %973 = vmatprep.subr.mxu0 0.0
    %974 = vmatpush1.msra.mxu0 0.0
    %975 = vmatprep.subr.mxu0 0.0
    %976 = vmatpush1.msra.mxu0 0.0
    %977 = vmatprep.subr.mxu0 0.0
    %978 = vmatpush1.msra.mxu0 0.0
    %979 = vmatprep.subr.mxu0 0.0
    %980 = vmatpush1.msra.mxu0 0.0
    %981 = vmatprep.subr.mxu0 0.0
    %982 = vmatpush1.msra.mxu0 0.0
    %983 = vmatprep.subr.mxu0 0.0
    %984 = vmatpush1.msra.mxu0 0.0
    %985 = vmatprep.subr.mxu0 0.0
    %986 = vmatpush1.msra.mxu0 0.0
    %987 = vmatprep.subr.mxu0 0.0
    %988 = vmatpush1.msra.mxu0 0.0
    %989 = vmatprep.subr.mxu0 0.0
    %990 = vmatpush1.msra.mxu0 0.0
    %991 = vmatprep.subr.mxu0 0.0
    %992 = vmatpush1.msra.mxu0 0.0
    %993 = vmatprep.subr.mxu0 0.0
    %994 = vmatpush1.msra.mxu0 0.0
    %995 = vmatprep.subr.mxu0 0.0
    %996 = vmatpush1.msra.mxu0 0.0
    %997 = vmatprep.subr.mxu0 0.0
    %998 = vmatpush1.msra.mxu0 0.0
    %999 = vmatprep.subr.mxu0 0.0
    %1000 = vmatpush1.msra.mxu0 0.0
    %1001 = vmatprep.subr.mxu0 0.0
    %1002 = vmatpush1.msra.mxu0 0.0
    %1003 = vmatprep.subr.mxu0 0.0
    %1004 = vmatpush1.msra.mxu0 0.0
    %1005 = vmatprep.subr.mxu0 0.0
    %1006 = vmatpush1.msra.mxu0 0.0
    %1007 = vmatprep.subr.mxu0 0.0
    %1008 = vmatpush1.msra.mxu0 0.0
    %1009 = vmatprep.mubr.f32.mxu0 0.0
    %1010 = vmatmul.mubr.f32.gmra.mrb[0].mxu0 %v943
    %v1011 = vpop.f32.mrb[0].mxu0
    %v1012 = vadd.f32 %v940, %v1011
    %v1013 = vpop.f32.mrb[0].mxu0
    %1014 = vdwg.mxu0
    %v1015 = vtanh.pop %v1012
    %v1016 = vmul.f32 %v921, 0.17
    %v1017 = vadd.f32 %v1015, %v1016
    %v1018 = vsub.f32 %v1017, %v1015
    %v1019 = vmul.f32 %v1018, %v1018
    %v1020 = vsub.f32 0.0, %v1019
    %v1021 = vrcp.pop 0.0578
    %v1022 = vmul.f32 %v1020, %v1021
    %v1023 = vsub.f32 %v1022, -1.7719568
    %v1024 = vsub.f32 %v1023, 0.9189385
    %vm1025 = vcmask 9216
    %v1026 = vsel %vm1025, %v1024, 0.0
    %1027 = vadd.xlane.f32.xlu0 %v1026
    %v1028 = vpop.xlane.xlu0 %1027
    %vm1029 = vcmask 1024
    %1030 = vst.msk [vmem:[%s13] sm:$0x3] %vm1029, %v1028
    %v1031 = vmax.f32 %v1017, -1.0
    %v1032 = vmin.f32 %v1031, 1.0
    %1033 = vst.msk [vmem:[#allocation6] sm:$0x3] %vm1025, %v1032
    %1035 = vrot.lane.b32.xlu0 %v1012, 126
    %v1036 = vpop.permute.xlu0 %1035
    %1038 = vst.msk [vmem:[%s12] sm:$0x3] %vm1029, %v1036
    %vm1039 = vcmask 99352
    %v1040 = vsel %vm1039, %v1012, -inf
    %1041 = vmax.xlane.f32.xlu0 %v1040
    %v1042 = vpop.xlane.xlu0 %1041
    %v1043 = vsub.f32 %v1012, %v1042
    %v1044 = vmul.f32 %v1043, 1.442695
    %v1045 = vpow.pop %v1044
    %1047 = vrot.lane.b32.xlu0 %v1045, 125
    %v1048 = vpop.permute.xlu0 %1047
    %vm1050 = vcmask 74752
    %v1051 = vsel %vm1050, %v1048, 0.0
    %1052 = vadd.xlane.f32.xlu0 %v1051
    %v1053 = vpop.xlane.xlu0 %1052
    %v1054 = vlog2.pop %v1053
    %v1055 = vmul.f32 %v1054, 0.6931472
    %v1056 = vsub.f32 %v1043, %v1055
    %1058 = vrot.lane.b32.xlu0 %v1056, 125
    %v1059 = vpop.permute.xlu0 %1058
    %1061 = vst.msk [vmem:[#allocation7] sm:$0x3] %vm1050, %v1059
    // Predicated region
    $region38: #{dram_forward.5} parent=1 // pred_check
      _
    $region39: #{dram_forward.5} parent=1 // pred_check_branch
      %1063 = sbr.rel (0) target = $region41
    $region40: #{dram_forward.5} parent=1 // pred_region
      %s1065 = ssub.s32 64, 64
      %1066 = vsyncadd [#allocation3], %s1065
      %s1067 = sshll.u32 [#allocation2], 4
      %s1068 = int_to_ptr.vmem [resolvable:$true] %s1067
      %1073 = dma.vmem_to_hbm [thread:$0]  %s1068, 64, %s9, [#allocation3], 32, 32, 2
    $region41: #{dram_forward.5} parent=1 // pred_fallthru
      _
    // Predicated region
    $region42: #{dram_forward.5} parent=1 // pred_check
      _
    $region43: #{dram_forward.5} parent=1 // pred_check_branch
      %1075 = sbr.rel (0) target = $region45
    $region44: #{dram_forward.5} parent=1 // pred_region
      %s1077 = ssub.s32 64, 64
      %1078 = vsyncadd [#allocation5], %s1077
      %s1079 = sshll.u32 [#allocation4], 4
      %s1080 = int_to_ptr.vmem [resolvable:$true] %s1079
      %1085 = dma.vmem_to_hbm [thread:$0]  %s1080, 64, %s10, [#allocation5], 32, 32, 2
    $region45: #{dram_forward.5} parent=1 // pred_fallthru
      _
    // Predicated region
    $region46: #{dram_forward.5} parent=1 // pred_check
      _
    $region47: #{dram_forward.5} parent=1 // pred_check_branch
      %1087 = sbr.rel (0) target = $region49
    $region48: #{dram_forward.5} parent=1 // pred_region
      %s1089 = ssub.s32 32, 32
      %1090 = vsyncadd [#allocation5], %s1089
      %s1092 = sshll.u32 [#allocation6], 4
      %s1093 = int_to_ptr.vmem [resolvable:$true] %s1092
      %1095 = dma.vmem_to_hbm [thread:$0]  %s1093, 32, %s11, [#allocation5]
    $region49: #{dram_forward.5} parent=1 // pred_fallthru
      _
    // Predicated region
    $region50: #{dram_forward.5} parent=1 // pred_check
      _
    $region51: #{dram_forward.5} parent=1 // pred_check_branch
      %1097 = sbr.rel (0) target = $region53
    $region52: #{dram_forward.5} parent=1 // pred_region
      _
    $region53: #{dram_forward.5} parent=1 // pred_fallthru
      _
    // Predicated region
    $region54: #{dram_forward.5} parent=1 // pred_check
      _
    $region55: #{dram_forward.5} parent=1 // pred_check_branch
      %1099 = sbr.rel (0) target = $region57
    $region56: #{dram_forward.5} parent=1 // pred_region
      _
    $region57: #{dram_forward.5} parent=1 // pred_fallthru
      _
    // Predicated region
    $region58: #{dram_forward.5} parent=1 // pred_check
      _
    $region59: #{dram_forward.5} parent=1 // pred_check_branch
      %1101 = sbr.rel (0) target = $region61
    $region60: #{dram_forward.5} parent=1 // pred_region
      %s1103 = ssub.s32 32, 32
      %1104 = vsyncadd [#allocation8], %s1103
      %s1106 = sshll.u32 [#allocation7], 4
      %s1107 = int_to_ptr.vmem [resolvable:$true] %s1106
      %1109 = dma.vmem_to_hbm [thread:$0]  %s1107, 32, %s14, [#allocation8]
    $region61: #{dram_forward.5} parent=1 // pred_fallthru
      _
    // Predicated region
    $region62: #{dram_forward.5} parent=1 // pred_check
      _
    $region63: #{dram_forward.5} parent=1 // pred_check_branch
      %1111 = sbr.rel (0) target = $region65
    $region64: #{dram_forward.5} parent=1 // pred_region
      %1112 = dma.done [#allocation3], 64
    $region65: #{dram_forward.5} parent=1 // pred_fallthru
      _
    // Predicated region
    $region66: #{dram_forward.5} parent=1 // pred_check
      _
    $region67: #{dram_forward.5} parent=1 // pred_check_branch
      %1114 = sbr.rel (0) target = $region69
    $region68: #{dram_forward.5} parent=1 // pred_region
      %1115 = dma.done [#allocation5], 64
    $region69: #{dram_forward.5} parent=1 // pred_fallthru
      _
    // Predicated region
    $region70: #{dram_forward.5} parent=1 // pred_check
      _
    $region71: #{dram_forward.5} parent=1 // pred_check_branch
      %1117 = sbr.rel (0) target = $region73
    $region72: #{dram_forward.5} parent=1 // pred_region
      %1118 = dma.done [#allocation5], 32
    $region73: #{dram_forward.5} parent=1 // pred_fallthru
      _
    // Predicated region
    $region74: #{dram_forward.5} parent=1 // pred_check
      _
    $region75: #{dram_forward.5} parent=1 // pred_check_branch
      %1120 = sbr.rel (0) target = $region77
    $region76: #{dram_forward.5} parent=1 // pred_region
      _
    $region77: #{dram_forward.5} parent=1 // pred_fallthru
      _
    // Predicated region
    $region78: #{dram_forward.5} parent=1 // pred_check
      _
    $region79: #{dram_forward.5} parent=1 // pred_check_branch
      %1122 = sbr.rel (0) target = $region81
    $region80: #{dram_forward.5} parent=1 // pred_region
      _
    $region81: #{dram_forward.5} parent=1 // pred_fallthru
      _
    // Predicated region
    $region82: #{dram_forward.5} parent=1 // pred_check
      _
    $region83: #{dram_forward.5} parent=1 // pred_check_branch
      %1124 = sbr.rel (0) target = $region85
    $region84: #{dram_forward.5} parent=1 // pred_region
      %1125 = dma.done [#allocation8], 32
    $region85: #{dram_forward.5} parent=1 // pred_fallthru
      _
    %1126 = vsyncpa [#allocation3], 1
    %1127 = vsyncpa [#allocation5], 1
    %1128 = vsyncpa [#allocation8], 1

</llo_original>
